<compile_context>
chip_gen: v5e
topology: v5e:2x2
jax: 0.10.0
libtpu: 0.0.40
codegen_flags: <defaults>
</compile_context>

<pallas_src>
import jax
import jax.numpy as jnp
from jax import lax
from jax.experimental import pallas as pl
from jax.experimental.pallas import tpu as pltpu


def _full_spec(shape):
    nd = len(shape)
    return pl.BlockSpec(shape, lambda *_: (0,) * nd)


# -----------------------------------------------------------------------------
# Fused AE kernel: encoder LSTM -> Z (gather@L-1, L2 norm) -> +noise ->
# decoder LSTM -> final FC. Everything stays in VMEM / vregs.
# -----------------------------------------------------------------------------
def _ae_kernel(x_ref, lm1_ref, noise_ref,
               enc_tab_ref, enc_whh0_ref, enc_stack_ref, enc_b_ref,
               dec_tab_ref, dec_wz_ref, dec_whh0_ref, dec_stack_ref, dec_b_ref,
               fc_w_ref, fc_b_ref,
               dec_out_ref, z_ref,
               hall_ref):
    B, S = x_ref.shape
    layers = enc_stack_ref.shape[0]
    H = enc_whh0_ref.shape[0]
    F = fc_w_ref.shape[1]

    x = x_ref[...]                      # [B, S] int32 token ids
    lm1 = lm1_ref[...]                  # [B, 1] int32 (L - 1)
    iota_f = lax.broadcasted_iota(jnp.int32, (B, F), 1)

    def cell(gates, c):
        # PyTorch LSTM gate order: i, f, g, o
        i = jax.nn.sigmoid(gates[:, 0:H])
        f = jax.nn.sigmoid(gates[:, H:2 * H])
        g = jnp.tanh(gates[:, 2 * H:3 * H])
        o = jax.nn.sigmoid(gates[:, 3 * H:4 * H])
        c_new = f * c + i * g
        h_new = o * jnp.tanh(c_new)
        return h_new, c_new

    # ---------------- Encoder ----------------
    hs = [jnp.zeros((B, H), jnp.float32) for _ in range(layers)]
    cs = [jnp.zeros((B, H), jnp.float32) for _ in range(layers)]
    z = jnp.zeros((B, H), jnp.float32)
    for t in range(S):                                         # fully unrolled
        onehot = (x[:, t:t + 1] == iota_f).astype(jnp.float32)      # [B, F]
        # layer 0: embedding folded into enc_tab = emb_enc @ W_ih0^T
        ih0 = jnp.dot(onehot, enc_tab_ref[...], preferred_element_type=jnp.float32)
        gates = (ih0
                 + jnp.dot(hs[0], enc_whh0_ref[...], preferred_element_type=jnp.float32)
                 + enc_b_ref[0:1, :])
        hs[0], cs[0] = cell(gates, cs[0])
        # stacked layers: fused [h_{l-1} | h_l] @ [W_ih^T ; W_hh^T]
        for l in range(1, layers):
            xh = jnp.concatenate([hs[l - 1], hs[l]], axis=1)         # [B, 2H]
            gates = (jnp.dot(xh, enc_stack_ref[l], preferred_element_type=jnp.float32)
                     + enc_b_ref[l:l + 1, :])
            hs[l], cs[l] = cell(gates, cs[l])
        # accumulate Z at the last valid step (t == L-1), no [S,B,H] writeback
        z = jnp.where(lm1 == t, hs[layers - 1], z)

    # F.normalize(Z, p=2, dim=1) and additive noise
    norm = jnp.sqrt(jnp.sum(z * z, axis=1, keepdims=True))
    z_n = z / jnp.maximum(norm, 1e-12)
    z_ref[...] = z_n
    zn = z_n + noise_ref[...]

    # ---------------- Decoder ----------------
    # layer-0 input is [Zn | emb_dec(x_t)]: the Zn part is constant over time,
    # so its gate contribution is computed once.
    zproj = jnp.dot(zn, dec_wz_ref[...], preferred_element_type=jnp.float32)   # [B, 4H]
    hs = [jnp.zeros((B, H), jnp.float32) for _ in range(layers)]
    cs = [jnp.zeros((B, H), jnp.float32) for _ in range(layers)]
    for t in range(S):
        onehot = (x[:, t:t + 1] == iota_f).astype(jnp.float32)
        ih0 = zproj + jnp.dot(onehot, dec_tab_ref[...], preferred_element_type=jnp.float32)
        gates = (ih0
                 + jnp.dot(hs[0], dec_whh0_ref[...], preferred_element_type=jnp.float32)
                 + dec_b_ref[0:1, :])
        hs[0], cs[0] = cell(gates, cs[0])
        for l in range(1, layers):
            xh = jnp.concatenate([hs[l - 1], hs[l]], axis=1)
            gates = (jnp.dot(xh, dec_stack_ref[l], preferred_element_type=jnp.float32)
                     + dec_b_ref[l:l + 1, :])
            hs[l], cs[l] = cell(gates, cs[l])
        hall_ref[t * B:(t + 1) * B, :] = hs[layers - 1]          # static slice store

    # Final FC once over the whole sequence: one MXU call, one contiguous store.
    h_all = hall_ref[...]                                        # [S*B, H]
    dec = jnp.dot(h_all, fc_w_ref[...], preferred_element_type=jnp.float32) + fc_b_ref[...]
    dec_out_ref[...] = dec                                       # [S*B, F]


# -----------------------------------------------------------------------------
# Parameter construction (deterministic, kernel layout).
# PyTorch orthogonal/xavier initializers are replaced by scaled normals
# (init-only difference; the forward math is unchanged).
# -----------------------------------------------------------------------------
def init_ae_params(key, seq_len, fea_num, hidden_dim, layers, scale=0.1):
    F, H = fea_num, hidden_dim
    G = 4 * H
    k_ee, k_ed, k_enc, k_dec, k_fw, k_fb = jax.random.split(key, 6)

    def rand(k, shape):
        return scale * jax.random.normal(k, shape, jnp.float32)

    emb_enc = rand(k_ee, (F, F))
    emb_dec = rand(k_ed, (F, F))

    # Encoder LSTM (input_size = F)
    ek = jax.random.split(k_enc, 4 * layers)
    enc_stack = jnp.zeros((layers, 2 * H, G), jnp.float32)   # slot 0 unused
    enc_b = jnp.zeros((layers, G), jnp.float32)
    enc_tab = None
    enc_whh0 = None
    for l in range(layers):
        k1, k2, k3, k4 = ek[4 * l:4 * l + 4]
        in_l = F if l == 0 else H
        w_ih = rand(k1, (G, in_l))
        w_hh = rand(k2, (G, H))
        enc_b = enc_b.at[l].set(rand(k3, (G,)) + rand(k4, (G,)))
        if l == 0:
            enc_tab = emb_enc @ w_ih.T            # [F, 4H]  (embedding folded)
            enc_whh0 = w_hh.T                     # [H, 4H]
        else:
            enc_stack = enc_stack.at[l, :H, :].set(w_ih.T)
            enc_stack = enc_stack.at[l, H:, :].set(w_hh.T)

    # Decoder LSTM (input_size = H + F, layer-0 input order = [Z | emb])
    dk = jax.random.split(k_dec, 4 * layers)
    dec_stack = jnp.zeros((layers, 2 * H, G), jnp.float32)   # slot 0 unused
    dec_b = jnp.zeros((layers, G), jnp.float32)
    dec_tab = None
    dec_wz = None
    dec_whh0 = None
    for l in range(layers):
        k1, k2, k3, k4 = dk[4 * l:4 * l + 4]
        in_l = (H + F) if l == 0 else H
        w_ih = rand(k1, (G, in_l))
        w_hh = rand(k2, (G, H))
        dec_b = dec_b.at[l].set(rand(k3, (G,)) + rand(k4, (G,)))
        if l == 0:
            wihT = w_ih.T                         # [H+F, 4H]
            dec_wz = wihT[:H, :]                  # [H, 4H]   (Z part)
            dec_tab = emb_dec @ wihT[H:, :]       # [F, 4H]   (embedding folded)
            dec_whh0 = w_hh.T                     # [H, 4H]
        else:
            dec_stack = dec_stack.at[l, :H, :].set(w_ih.T)
            dec_stack = dec_stack.at[l, H:, :].set(w_hh.T)

    return dict(enc_tab=enc_tab, enc_whh0=enc_whh0, enc_stack=enc_stack, enc_b=enc_b,
                dec_tab=dec_tab, dec_wz=dec_wz, dec_whh0=dec_whh0, dec_stack=dec_stack,
                dec_b=dec_b, fc_wT=rand(k_fw, (H, F)), fc_b=rand(k_fb, (1, F)))


# -----------------------------------------------------------------------------
# AE forward: one fused Pallas kernel + trivial output reshape/transpose.
# -----------------------------------------------------------------------------
@jax.jit
def ae_forward(params, X, L, noise):
    B, S = X.shape
    H, F = params["fc_wT"].shape

    x = X.astype(jnp.int32)
    lm1 = (L.astype(jnp.int32) - 1).reshape(B, 1)
    noise = noise.astype(jnp.float32)

    args = (x, lm1, noise,
            params["enc_tab"], params["enc_whh0"], params["enc_stack"], params["enc_b"],
            params["dec_tab"], params["dec_wz"], params["dec_whh0"], params["dec_stack"],
            params["dec_b"], params["fc_wT"], params["fc_b"])

    dec_flat, Z = pl.pallas_call(
        _ae_kernel,
        out_shape=(jax.ShapeDtypeStruct((S * B, F), jnp.float32),
                   jax.ShapeDtypeStruct((B, H), jnp.float32)),
        grid=(1,),
        in_specs=[_full_spec(a.shape) for a in args],
        out_specs=(_full_spec((S * B, F)), _full_spec((B, H))),
        scratch_shapes=[pltpu.VMEM((S * B, H), jnp.float32)],
        compiler_params=pltpu.CompilerParams(dimension_semantics=("arbitrary",)),
    )(*args)

    decoded = dec_flat.reshape(S, B, F).transpose(1, 0, 2)   # [B, S, F] (batch_first)
    return decoded, Z


# -----------------------------------------------------------------------------
# Example run
# -----------------------------------------------------------------------------
if __name__ == "__main__":
    seq_len, fea_num, hidden_dim, layers = 8, 4, 32, 2
    batch = 2

    key = jax.random.PRNGKey(0)
    k_params, k_x, k_l, k_n = jax.random.split(key, 4)

    params = init_ae_params(k_params, seq_len, fea_num, hidden_dim, layers)

    X = jax.random.randint(k_x, (batch, seq_len), 0, fea_num, dtype=jnp.int32)
    L = jax.random.randint(k_l, (batch,), 1, seq_len + 1, dtype=jnp.int32)
    noise = 0.01 * jax.random.normal(k_n, (batch, hidden_dim), jnp.float32)

    decoded, Z = ae_forward(params, X, L, noise)
    jax.block_until_ready((decoded, Z))

    assert decoded.shape == (batch, seq_len, fea_num)
    assert Z.shape == (batch, hidden_dim)
    assert bool(jnp.all(jnp.isfinite(decoded))) and bool(jnp.all(jnp.isfinite(Z)))
    print("KERNEL_OK")
</pallas_src>

<mosaic_0001>
module attributes {stable_mosaic.version = 11 : i64} {
  func.func @_ae_kernel(%arg0: i32, %arg1: memref<2x8xi32, #tpu.memory_space<vmem>>, %arg2: memref<2x1xi32, #tpu.memory_space<vmem>>, %arg3: memref<2x32xf32, #tpu.memory_space<vmem>>, %arg4: memref<4x128xf32, #tpu.memory_space<vmem>>, %arg5: memref<32x128xf32, #tpu.memory_space<vmem>>, %arg6: memref<2x64x128xf32, #tpu.memory_space<vmem>>, %arg7: memref<2x128xf32, #tpu.memory_space<vmem>>, %arg8: memref<4x128xf32, #tpu.memory_space<vmem>>, %arg9: memref<32x128xf32, #tpu.memory_space<vmem>>, %arg10: memref<32x128xf32, #tpu.memory_space<vmem>>, %arg11: memref<2x64x128xf32, #tpu.memory_space<vmem>>, %arg12: memref<2x128xf32, #tpu.memory_space<vmem>>, %arg13: memref<32x4xf32, #tpu.memory_space<vmem>>, %arg14: memref<1x4xf32, #tpu.memory_space<vmem>>, %arg15: memref<16x4xf32, #tpu.memory_space<vmem>>, %arg16: memref<2x32xf32, #tpu.memory_space<vmem>>, %arg17: memref<16x32xf32, #tpu.memory_space<vmem>>) attributes {dimension_semantics = [#tpu.dimension_semantics<arbitrary>], iteration_bounds = array<i64: 1>, scalar_prefetch = 0 : i64, scratch_operands = 1 : i64, tpu.core_type = #tpu.core_type<tc>, window_params = [{pipeline_mode = #tpu.pipeline_mode<synchronous>, transform_indices = @transform_0, window_bounds = array<i64: 2, 8>}, {pipeline_mode = #tpu.pipeline_mode<synchronous>, transform_indices = @transform_1, window_bounds = array<i64: 2, 1>}, {pipeline_mode = #tpu.pipeline_mode<synchronous>, transform_indices = @transform_2, window_bounds = array<i64: 2, 32>}, {pipeline_mode = #tpu.pipeline_mode<synchronous>, transform_indices = @transform_3, window_bounds = array<i64: 4, 128>}, {pipeline_mode = #tpu.pipeline_mode<synchronous>, transform_indices = @transform_4, window_bounds = array<i64: 32, 128>}, {pipeline_mode = #tpu.pipeline_mode<synchronous>, transform_indices = @transform_5, window_bounds = array<i64: 2, 64, 128>}, {pipeline_mode = #tpu.pipeline_mode<synchronous>, transform_indices = @transform_6, window_bounds = array<i64: 2, 128>}, {pipeline_mode = #tpu.pipeline_mode<synchronous>, transform_indices = @transform_7, window_bounds = array<i64: 4, 128>}, {pipeline_mode = #tpu.pipeline_mode<synchronous>, transform_indices = @transform_8, window_bounds = array<i64: 32, 128>}, {pipeline_mode = #tpu.pipeline_mode<synchronous>, transform_indices = @transform_9, window_bounds = array<i64: 32, 128>}, {pipeline_mode = #tpu.pipeline_mode<synchronous>, transform_indices = @transform_10, window_bounds = array<i64: 2, 64, 128>}, {pipeline_mode = #tpu.pipeline_mode<synchronous>, transform_indices = @transform_11, window_bounds = array<i64: 2, 128>}, {pipeline_mode = #tpu.pipeline_mode<synchronous>, transform_indices = @transform_12, window_bounds = array<i64: 32, 4>}, {pipeline_mode = #tpu.pipeline_mode<synchronous>, transform_indices = @transform_13, window_bounds = array<i64: 1, 4>}, {pipeline_mode = #tpu.pipeline_mode<synchronous>, transform_indices = @transform_14, window_bounds = array<i64: 16, 4>}, {pipeline_mode = #tpu.pipeline_mode<synchronous>, transform_indices = @transform_15, window_bounds = array<i64: 2, 32>}]} {
    %c0 = arith.constant 0 : index
    %c0_0 = arith.constant 0 : index
    %0 = vector.load %arg1[%c0, %c0_0] : memref<2x8xi32, #tpu.memory_space<vmem>>, vector<2x8xi32>
    %c0_1 = arith.constant 0 : index
    %c0_2 = arith.constant 0 : index
    %1 = vector.load %arg2[%c0_1, %c0_2] : memref<2x1xi32, #tpu.memory_space<vmem>>, vector<2x1xi32>
    %2 = tpu.iota {dimensions = array<i32: 1>} : vector<2x4xi32>
    %cst = arith.constant 0.000000e+00 : f32
    %3 = vector.broadcast %cst : f32 to vector<2x32xf32>
    %cst_3 = arith.constant 0.000000e+00 : f32
    %4 = vector.broadcast %cst_3 : f32 to vector<2x32xf32>
    %cst_4 = arith.constant 0.000000e+00 : f32
    %5 = vector.broadcast %cst_4 : f32 to vector<2x32xf32>
    %cst_5 = arith.constant 0.000000e+00 : f32
    %6 = vector.broadcast %cst_5 : f32 to vector<2x32xf32>
    %cst_6 = arith.constant 0.000000e+00 : f32
    %7 = vector.broadcast %cst_6 : f32 to vector<2x32xf32>
    %8 = vector.extract_strided_slice %0 {offsets = [0, 0], sizes = [2, 1], strides = [1, 1]} : vector<2x8xi32> to vector<2x1xi32>
    %9 = vector.broadcast %8 : vector<2x1xi32> to vector<2x4xi32>
    %10 = arith.cmpi eq, %9, %2 : vector<2x4xi32>
    %11 = arith.extui %10 : vector<2x4xi1> to vector<2x4xi32>
    %12 = arith.sitofp %11 : vector<2x4xi32> to vector<2x4xf32>
    %c0_7 = arith.constant 0 : index
    %c0_8 = arith.constant 0 : index
    %13 = vector.load %arg4[%c0_7, %c0_8] : memref<4x128xf32, #tpu.memory_space<vmem>>, vector<4x128xf32>
    %cst_9 = arith.constant dense<0.000000e+00> : vector<2x128xf32>
    %14 = tpu.matmul %12, %13, %cst_9 {dimension_numbers = #tpu.dot_dimension_numbers<[1], [0], [0], [1], [0, 0, 1, 1], [], []>} : vector<2x4xf32>, vector<4x128xf32>, vector<2x128xf32> -> vector<2x128xf32>
    %c0_10 = arith.constant 0 : index
    %c0_11 = arith.constant 0 : index
    %15 = vector.load %arg5[%c0_10, %c0_11] : memref<32x128xf32, #tpu.memory_space<vmem>>, vector<32x128xf32>
    %cst_12 = arith.constant dense<0.000000e+00> : vector<2x128xf32>
    %16 = tpu.matmul %3, %15, %cst_12 {dimension_numbers = #tpu.dot_dimension_numbers<[1], [0], [0], [1], [0, 0, 1, 1], [], []>} : vector<2x32xf32>, vector<32x128xf32>, vector<2x128xf32> -> vector<2x128xf32>
    %17 = arith.addf %14, %16 : vector<2x128xf32>
    %c0_13 = arith.constant 0 : index
    %c0_14 = arith.constant 0 : index
    %18 = vector.load %arg7[%c0_13, %c0_14] : memref<2x128xf32, #tpu.memory_space<vmem>>, vector<1x128xf32>
    %19 = vector.broadcast %18 : vector<1x128xf32> to vector<2x128xf32>
    %20 = arith.addf %17, %19 : vector<2x128xf32>
    %21 = vector.extract_strided_slice %20 {offsets = [0, 0], sizes = [2, 32], strides = [1, 1]} : vector<2x128xf32> to vector<2x32xf32>
    %22 = arith.negf %21 : vector<2x32xf32>
    %23 = math.exp %22 : vector<2x32xf32>
    %cst_15 = arith.constant 1.000000e+00 : f32
    %24 = vector.broadcast %cst_15 : f32 to vector<2x32xf32>
    %25 = arith.addf %24, %23 : vector<2x32xf32>
    %26 = arith.divf %24, %25 : vector<2x32xf32>
    %27 = vector.extract_strided_slice %20 {offsets = [0, 32], sizes = [2, 32], strides = [1, 1]} : vector<2x128xf32> to vector<2x32xf32>
    %28 = arith.negf %27 : vector<2x32xf32>
    %29 = math.exp %28 : vector<2x32xf32>
    %cst_16 = arith.constant 1.000000e+00 : f32
    %30 = vector.broadcast %cst_16 : f32 to vector<2x32xf32>
    %31 = arith.addf %30, %29 : vector<2x32xf32>
    %32 = arith.divf %30, %31 : vector<2x32xf32>
    %33 = vector.extract_strided_slice %20 {offsets = [0, 64], sizes = [2, 32], strides = [1, 1]} : vector<2x128xf32> to vector<2x32xf32>
    %34 = math.tanh %33 : vector<2x32xf32>
    %35 = vector.extract_strided_slice %20 {offsets = [0, 96], sizes = [2, 32], strides = [1, 1]} : vector<2x128xf32> to vector<2x32xf32>
    %36 = arith.negf %35 : vector<2x32xf32>
    %37 = math.exp %36 : vector<2x32xf32>
    %cst_17 = arith.constant 1.000000e+00 : f32
    %38 = vector.broadcast %cst_17 : f32 to vector<2x32xf32>
    %39 = arith.addf %38, %37 : vector<2x32xf32>
    %40 = arith.divf %38, %39 : vector<2x32xf32>
    %41 = arith.mulf %32, %5 : vector<2x32xf32>
    %42 = arith.mulf %26, %34 : vector<2x32xf32>
    %43 = arith.addf %41, %42 : vector<2x32xf32>
    %44 = math.tanh %43 : vector<2x32xf32>
    %45 = arith.mulf %40, %44 : vector<2x32xf32>
    %46 = tpu.concatenate %45, %4 in 1 : vector<2x32xf32>, vector<2x32xf32> -> vector<2x64xf32>
    %c1 = arith.constant 1 : index
    %c0_18 = arith.constant 0 : index
    %c0_19 = arith.constant 0 : index
    %47 = vector.load %arg6[%c1, %c0_18, %c0_19] : memref<2x64x128xf32, #tpu.memory_space<vmem>>, vector<1x64x128xf32>
    %48 = vector.shape_cast %47 : vector<1x64x128xf32> to vector<64x128xf32>
    %cst_20 = arith.constant dense<0.000000e+00> : vector<2x128xf32>
    %49 = tpu.matmul %46, %48, %cst_20 {dimension_numbers = #tpu.dot_dimension_numbers<[1], [0], [0], [1], [0, 0, 1, 1], [], []>} : vector<2x64xf32>, vector<64x128xf32>, vector<2x128xf32> -> vector<2x128xf32>
    %c1_21 = arith.constant 1 : index
    %c0_22 = arith.constant 0 : index
    %50 = vector.load %arg7[%c1_21, %c0_22] : memref<2x128xf32, #tpu.memory_space<vmem>>, vector<1x128xf32>
    %51 = vector.broadcast %50 : vector<1x128xf32> to vector<2x128xf32>
    %52 = arith.addf %49, %51 : vector<2x128xf32>
    %53 = vector.extract_strided_slice %52 {offsets = [0, 0], sizes = [2, 32], strides = [1, 1]} : vector<2x128xf32> to vector<2x32xf32>
    %54 = arith.negf %53 : vector<2x32xf32>
    %55 = math.exp %54 : vector<2x32xf32>
    %cst_23 = arith.constant 1.000000e+00 : f32
    %56 = vector.broadcast %cst_23 : f32 to vector<2x32xf32>
    %57 = arith.addf %56, %55 : vector<2x32xf32>
    %58 = arith.divf %56, %57 : vector<2x32xf32>
    %59 = vector.extract_strided_slice %52 {offsets = [0, 32], sizes = [2, 32], strides = [1, 1]} : vector<2x128xf32> to vector<2x32xf32>
    %60 = arith.negf %59 : vector<2x32xf32>
    %61 = math.exp %60 : vector<2x32xf32>
    %cst_24 = arith.constant 1.000000e+00 : f32
    %62 = vector.broadcast %cst_24 : f32 to vector<2x32xf32>
    %63 = arith.addf %62, %61 : vector<2x32xf32>
    %64 = arith.divf %62, %63 : vector<2x32xf32>
    %65 = vector.extract_strided_slice %52 {offsets = [0, 64], sizes = [2, 32], strides = [1, 1]} : vector<2x128xf32> to vector<2x32xf32>
    %66 = math.tanh %65 : vector<2x32xf32>
    %67 = vector.extract_strided_slice %52 {offsets = [0, 96], sizes = [2, 32], strides = [1, 1]} : vector<2x128xf32> to vector<2x32xf32>
    %68 = arith.negf %67 : vector<2x32xf32>
    %69 = math.exp %68 : vector<2x32xf32>
    %cst_25 = arith.constant 1.000000e+00 : f32
    %70 = vector.broadcast %cst_25 : f32 to vector<2x32xf32>
    %71 = arith.addf %70, %69 : vector<2x32xf32>
    %72 = arith.divf %70, %71 : vector<2x32xf32>
    %73 = arith.mulf %64, %6 : vector<2x32xf32>
    %74 = arith.mulf %58, %66 : vector<2x32xf32>
    %75 = arith.addf %73, %74 : vector<2x32xf32>
    %76 = math.tanh %75 : vector<2x32xf32>
    %77 = arith.mulf %72, %76 : vector<2x32xf32>
    %c0_i32 = arith.constant 0 : i32
    %78 = vector.broadcast %c0_i32 : i32 to vector<2x1xi32>
    %79 = arith.cmpi eq, %1, %78 : vector<2x1xi32>
    %80 = vector.shape_cast %79 : vector<2x1xi1> to vector<2x1xi1>
    %81 = vector.broadcast %80 : vector<2x1xi1> to vector<2x32xi1>
    %82 = arith.select %81, %77, %7 : vector<2x32xi1>, vector<2x32xf32>
    %83 = vector.extract_strided_slice %0 {offsets = [0, 1], sizes = [2, 1], strides = [1, 1]} : vector<2x8xi32> to vector<2x1xi32>
    %84 = vector.broadcast %83 : vector<2x1xi32> to vector<2x4xi32>
    %85 = arith.cmpi eq, %84, %2 : vector<2x4xi32>
    %86 = arith.extui %85 : vector<2x4xi1> to vector<2x4xi32>
    %87 = arith.sitofp %86 : vector<2x4xi32> to vector<2x4xf32>
    %c0_26 = arith.constant 0 : index
    %c0_27 = arith.constant 0 : index
    %88 = vector.load %arg4[%c0_26, %c0_27] : memref<4x128xf32, #tpu.memory_space<vmem>>, vector<4x128xf32>
    %cst_28 = arith.constant dense<0.000000e+00> : vector<2x128xf32>
    %89 = tpu.matmul %87, %88, %cst_28 {dimension_numbers = #tpu.dot_dimension_numbers<[1], [0], [0], [1], [0, 0, 1, 1], [], []>} : vector<2x4xf32>, vector<4x128xf32>, vector<2x128xf32> -> vector<2x128xf32>
    %c0_29 = arith.constant 0 : index
    %c0_30 = arith.constant 0 : index
    %90 = vector.load %arg5[%c0_29, %c0_30] : memref<32x128xf32, #tpu.memory_space<vmem>>, vector<32x128xf32>
    %cst_31 = arith.constant dense<0.000000e+00> : vector<2x128xf32>
    %91 = tpu.matmul %45, %90, %cst_31 {dimension_numbers = #tpu.dot_dimension_numbers<[1], [0], [0], [1], [0, 0, 1, 1], [], []>} : vector<2x32xf32>, vector<32x128xf32>, vector<2x128xf32> -> vector<2x128xf32>
    %92 = arith.addf %89, %91 : vector<2x128xf32>
    %c0_32 = arith.constant 0 : index
    %c0_33 = arith.constant 0 : index
    %93 = vector.load %arg7[%c0_32, %c0_33] : memref<2x128xf32, #tpu.memory_space<vmem>>, vector<1x128xf32>
    %94 = vector.broadcast %93 : vector<1x128xf32> to vector<2x128xf32>
    %95 = arith.addf %92, %94 : vector<2x128xf32>
    %96 = vector.extract_strided_slice %95 {offsets = [0, 0], sizes = [2, 32], strides = [1, 1]} : vector<2x128xf32> to vector<2x32xf32>
    %97 = arith.negf %96 : vector<2x32xf32>
    %98 = math.exp %97 : vector<2x32xf32>
    %cst_34 = arith.constant 1.000000e+00 : f32
    %99 = vector.broadcast %cst_34 : f32 to vector<2x32xf32>
    %100 = arith.addf %99, %98 : vector<2x32xf32>
    %101 = arith.divf %99, %100 : vector<2x32xf32>
    %102 = vector.extract_strided_slice %95 {offsets = [0, 32], sizes = [2, 32], strides = [1, 1]} : vector<2x128xf32> to vector<2x32xf32>
    %103 = arith.negf %102 : vector<2x32xf32>
    %104 = math.exp %103 : vector<2x32xf32>
    %cst_35 = arith.constant 1.000000e+00 : f32
    %105 = vector.broadcast %cst_35 : f32 to vector<2x32xf32>
    %106 = arith.addf %105, %104 : vector<2x32xf32>
    %107 = arith.divf %105, %106 : vector<2x32xf32>
    %108 = vector.extract_strided_slice %95 {offsets = [0, 64], sizes = [2, 32], strides = [1, 1]} : vector<2x128xf32> to vector<2x32xf32>
    %109 = math.tanh %108 : vector<2x32xf32>
    %110 = vector.extract_strided_slice %95 {offsets = [0, 96], sizes = [2, 32], strides = [1, 1]} : vector<2x128xf32> to vector<2x32xf32>
    %111 = arith.negf %110 : vector<2x32xf32>
    %112 = math.exp %111 : vector<2x32xf32>
    %cst_36 = arith.constant 1.000000e+00 : f32
    %113 = vector.broadcast %cst_36 : f32 to vector<2x32xf32>
    %114 = arith.addf %113, %112 : vector<2x32xf32>
    %115 = arith.divf %113, %114 : vector<2x32xf32>
    %116 = arith.mulf %107, %43 : vector<2x32xf32>
    %117 = arith.mulf %101, %109 : vector<2x32xf32>
    %118 = arith.addf %116, %117 : vector<2x32xf32>
    %119 = math.tanh %118 : vector<2x32xf32>
    %120 = arith.mulf %115, %119 : vector<2x32xf32>
    %121 = tpu.concatenate %120, %77 in 1 : vector<2x32xf32>, vector<2x32xf32> -> vector<2x64xf32>
    %c1_37 = arith.constant 1 : index
    %c0_38 = arith.constant 0 : index
    %c0_39 = arith.constant 0 : index
    %122 = vector.load %arg6[%c1_37, %c0_38, %c0_39] : memref<2x64x128xf32, #tpu.memory_space<vmem>>, vector<1x64x128xf32>
    %123 = vector.shape_cast %122 : vector<1x64x128xf32> to vector<64x128xf32>
    %cst_40 = arith.constant dense<0.000000e+00> : vector<2x128xf32>
    %124 = tpu.matmul %121, %123, %cst_40 {dimension_numbers = #tpu.dot_dimension_numbers<[1], [0], [0], [1], [0, 0, 1, 1], [], []>} : vector<2x64xf32>, vector<64x128xf32>, vector<2x128xf32> -> vector<2x128xf32>
    %c1_41 = arith.constant 1 : index
    %c0_42 = arith.constant 0 : index
    %125 = vector.load %arg7[%c1_41, %c0_42] : memref<2x128xf32, #tpu.memory_space<vmem>>, vector<1x128xf32>
    %126 = vector.broadcast %125 : vector<1x128xf32> to vector<2x128xf32>
    %127 = arith.addf %124, %126 : vector<2x128xf32>
    %128 = vector.extract_strided_slice %127 {offsets = [0, 0], sizes = [2, 32], strides = [1, 1]} : vector<2x128xf32> to vector<2x32xf32>
    %129 = arith.negf %128 : vector<2x32xf32>
    %130 = math.exp %129 : vector<2x32xf32>
    %cst_43 = arith.constant 1.000000e+00 : f32
    %131 = vector.broadcast %cst_43 : f32 to vector<2x32xf32>
    %132 = arith.addf %131, %130 : vector<2x32xf32>
    %133 = arith.divf %131, %132 : vector<2x32xf32>
    %134 = vector.extract_strided_slice %127 {offsets = [0, 32], sizes = [2, 32], strides = [1, 1]} : vector<2x128xf32> to vector<2x32xf32>
    %135 = arith.negf %134 : vector<2x32xf32>
    %136 = math.exp %135 : vector<2x32xf32>
    %cst_44 = arith.constant 1.000000e+00 : f32
    %137 = vector.broadcast %cst_44 : f32 to vector<2x32xf32>
    %138 = arith.addf %137, %136 : vector<2x32xf32>
    %139 = arith.divf %137, %138 : vector<2x32xf32>
    %140 = vector.extract_strided_slice %127 {offsets = [0, 64], sizes = [2, 32], strides = [1, 1]} : vector<2x128xf32> to vector<2x32xf32>
    %141 = math.tanh %140 : vector<2x32xf32>
    %142 = vector.extract_strided_slice %127 {offsets = [0, 96], sizes = [2, 32], strides = [1, 1]} : vector<2x128xf32> to vector<2x32xf32>
    %143 = arith.negf %142 : vector<2x32xf32>
    %144 = math.exp %143 : vector<2x32xf32>
    %cst_45 = arith.constant 1.000000e+00 : f32
    %145 = vector.broadcast %cst_45 : f32 to vector<2x32xf32>
    %146 = arith.addf %145, %144 : vector<2x32xf32>
    %147 = arith.divf %145, %146 : vector<2x32xf32>
    %148 = arith.mulf %139, %75 : vector<2x32xf32>
    %149 = arith.mulf %133, %141 : vector<2x32xf32>
    %150 = arith.addf %148, %149 : vector<2x32xf32>
    %151 = math.tanh %150 : vector<2x32xf32>
    %152 = arith.mulf %147, %151 : vector<2x32xf32>
    %c1_i32 = arith.constant 1 : i32
    %153 = vector.broadcast %c1_i32 : i32 to vector<2x1xi32>
    %154 = arith.cmpi eq, %1, %153 : vector<2x1xi32>
    %155 = vector.shape_cast %154 : vector<2x1xi1> to vector<2x1xi1>
    %156 = vector.broadcast %155 : vector<2x1xi1> to vector<2x32xi1>
    %157 = arith.select %156, %152, %82 : vector<2x32xi1>, vector<2x32xf32>
    %158 = vector.extract_strided_slice %0 {offsets = [0, 2], sizes = [2, 1], strides = [1, 1]} : vector<2x8xi32> to vector<2x1xi32>
    %159 = vector.broadcast %158 : vector<2x1xi32> to vector<2x4xi32>
    %160 = arith.cmpi eq, %159, %2 : vector<2x4xi32>
    %161 = arith.extui %160 : vector<2x4xi1> to vector<2x4xi32>
    %162 = arith.sitofp %161 : vector<2x4xi32> to vector<2x4xf32>
    %c0_46 = arith.constant 0 : index
    %c0_47 = arith.constant 0 : index
    %163 = vector.load %arg4[%c0_46, %c0_47] : memref<4x128xf32, #tpu.memory_space<vmem>>, vector<4x128xf32>
    %cst_48 = arith.constant dense<0.000000e+00> : vector<2x128xf32>
    %164 = tpu.matmul %162, %163, %cst_48 {dimension_numbers = #tpu.dot_dimension_numbers<[1], [0], [0], [1], [0, 0, 1, 1], [], []>} : vector<2x4xf32>, vector<4x128xf32>, vector<2x128xf32> -> vector<2x128xf32>
    %c0_49 = arith.constant 0 : index
    %c0_50 = arith.constant 0 : index
    %165 = vector.load %arg5[%c0_49, %c0_50] : memref<32x128xf32, #tpu.memory_space<vmem>>, vector<32x128xf32>
    %cst_51 = arith.constant dense<0.000000e+00> : vector<2x128xf32>
    %166 = tpu.matmul %120, %165, %cst_51 {dimension_numbers = #tpu.dot_dimension_numbers<[1], [0], [0], [1], [0, 0, 1, 1], [], []>} : vector<2x32xf32>, vector<32x128xf32>, vector<2x128xf32> -> vector<2x128xf32>
    %167 = arith.addf %164, %166 : vector<2x128xf32>
    %c0_52 = arith.constant 0 : index
    %c0_53 = arith.constant 0 : index
    %168 = vector.load %arg7[%c0_52, %c0_53] : memref<2x128xf32, #tpu.memory_space<vmem>>, vector<1x128xf32>
    %169 = vector.broadcast %168 : vector<1x128xf32> to vector<2x128xf32>
    %170 = arith.addf %167, %169 : vector<2x128xf32>
    %171 = vector.extract_strided_slice %170 {offsets = [0, 0], sizes = [2, 32], strides = [1, 1]} : vector<2x128xf32> to vector<2x32xf32>
    %172 = arith.negf %171 : vector<2x32xf32>
    %173 = math.exp %172 : vector<2x32xf32>
    %cst_54 = arith.constant 1.000000e+00 : f32
    %174 = vector.broadcast %cst_54 : f32 to vector<2x32xf32>
    %175 = arith.addf %174, %173 : vector<2x32xf32>
    %176 = arith.divf %174, %175 : vector<2x32xf32>
    %177 = vector.extract_strided_slice %170 {offsets = [0, 32], sizes = [2, 32], strides = [1, 1]} : vector<2x128xf32> to vector<2x32xf32>
    %178 = arith.negf %177 : vector<2x32xf32>
    %179 = math.exp %178 : vector<2x32xf32>
    %cst_55 = arith.constant 1.000000e+00 : f32
    %180 = vector.broadcast %cst_55 : f32 to vector<2x32xf32>
    %181 = arith.addf %180, %179 : vector<2x32xf32>
    %182 = arith.divf %180, %181 : vector<2x32xf32>
    %183 = vector.extract_strided_slice %170 {offsets = [0, 64], sizes = [2, 32], strides = [1, 1]} : vector<2x128xf32> to vector<2x32xf32>
    %184 = math.tanh %183 : vector<2x32xf32>
    %185 = vector.extract_strided_slice %170 {offsets = [0, 96], sizes = [2, 32], strides = [1, 1]} : vector<2x128xf32> to vector<2x32xf32>
    %186 = arith.negf %185 : vector<2x32xf32>
    %187 = math.exp %186 : vector<2x32xf32>
    %cst_56 = arith.constant 1.000000e+00 : f32
    %188 = vector.broadcast %cst_56 : f32 to vector<2x32xf32>
    %189 = arith.addf %188, %187 : vector<2x32xf32>
    %190 = arith.divf %188, %189 : vector<2x32xf32>
    %191 = arith.mulf %182, %118 : vector<2x32xf32>
    %192 = arith.mulf %176, %184 : vector<2x32xf32>
    %193 = arith.addf %191, %192 : vector<2x32xf32>
    %194 = math.tanh %193 : vector<2x32xf32>
    %195 = arith.mulf %190, %194 : vector<2x32xf32>
    %196 = tpu.concatenate %195, %152 in 1 : vector<2x32xf32>, vector<2x32xf32> -> vector<2x64xf32>
    %c1_57 = arith.constant 1 : index
    %c0_58 = arith.constant 0 : index
    %c0_59 = arith.constant 0 : index
    %197 = vector.load %arg6[%c1_57, %c0_58, %c0_59] : memref<2x64x128xf32, #tpu.memory_space<vmem>>, vector<1x64x128xf32>
    %198 = vector.shape_cast %197 : vector<1x64x128xf32> to vector<64x128xf32>
    %cst_60 = arith.constant dense<0.000000e+00> : vector<2x128xf32>
    %199 = tpu.matmul %196, %198, %cst_60 {dimension_numbers = #tpu.dot_dimension_numbers<[1], [0], [0], [1], [0, 0, 1, 1], [], []>} : vector<2x64xf32>, vector<64x128xf32>, vector<2x128xf32> -> vector<2x128xf32>
    %c1_61 = arith.constant 1 : index
    %c0_62 = arith.constant 0 : index
    %200 = vector.load %arg7[%c1_61, %c0_62] : memref<2x128xf32, #tpu.memory_space<vmem>>, vector<1x128xf32>
    %201 = vector.broadcast %200 : vector<1x128xf32> to vector<2x128xf32>
    %202 = arith.addf %199, %201 : vector<2x128xf32>
    %203 = vector.extract_strided_slice %202 {offsets = [0, 0], sizes = [2, 32], strides = [1, 1]} : vector<2x128xf32> to vector<2x32xf32>
    %204 = arith.negf %203 : vector<2x32xf32>
    %205 = math.exp %204 : vector<2x32xf32>
    %cst_63 = arith.constant 1.000000e+00 : f32
    %206 = vector.broadcast %cst_63 : f32 to vector<2x32xf32>
    %207 = arith.addf %206, %205 : vector<2x32xf32>
    %208 = arith.divf %206, %207 : vector<2x32xf32>
    %209 = vector.extract_strided_slice %202 {offsets = [0, 32], sizes = [2, 32], strides = [1, 1]} : vector<2x128xf32> to vector<2x32xf32>
    %210 = arith.negf %209 : vector<2x32xf32>
    %211 = math.exp %210 : vector<2x32xf32>
    %cst_64 = arith.constant 1.000000e+00 : f32
    %212 = vector.broadcast %cst_64 : f32 to vector<2x32xf32>
    %213 = arith.addf %212, %211 : vector<2x32xf32>
    %214 = arith.divf %212, %213 : vector<2x32xf32>
    %215 = vector.extract_strided_slice %202 {offsets = [0, 64], sizes = [2, 32], strides = [1, 1]} : vector<2x128xf32> to vector<2x32xf32>
    %216 = math.tanh %215 : vector<2x32xf32>
    %217 = vector.extract_strided_slice %202 {offsets = [0, 96], sizes = [2, 32], strides = [1, 1]} : vector<2x128xf32> to vector<2x32xf32>
    %218 = arith.negf %217 : vector<2x32xf32>
    %219 = math.exp %218 : vector<2x32xf32>
    %cst_65 = arith.constant 1.000000e+00 : f32
    %220 = vector.broadcast %cst_65 : f32 to vector<2x32xf32>
    %221 = arith.addf %220, %219 : vector<2x32xf32>
    %222 = arith.divf %220, %221 : vector<2x32xf32>
    %223 = arith.mulf %214, %150 : vector<2x32xf32>
    %224 = arith.mulf %208, %216 : vector<2x32xf32>
    %225 = arith.addf %223, %224 : vector<2x32xf32>
    %226 = math.tanh %225 : vector<2x32xf32>
    %227 = arith.mulf %222, %226 : vector<2x32xf32>
    %c2_i32 = arith.constant 2 : i32
    %228 = vector.broadcast %c2_i32 : i32 to vector<2x1xi32>
    %229 = arith.cmpi eq, %1, %228 : vector<2x1xi32>
    %230 = vector.shape_cast %229 : vector<2x1xi1> to vector<2x1xi1>
    %231 = vector.broadcast %230 : vector<2x1xi1> to vector<2x32xi1>
    %232 = arith.select %231, %227, %157 : vector<2x32xi1>, vector<2x32xf32>
    %233 = vector.extract_strided_slice %0 {offsets = [0, 3], sizes = [2, 1], strides = [1, 1]} : vector<2x8xi32> to vector<2x1xi32>
    %234 = vector.broadcast %233 : vector<2x1xi32> to vector<2x4xi32>
    %235 = arith.cmpi eq, %234, %2 : vector<2x4xi32>
    %236 = arith.extui %235 : vector<2x4xi1> to vector<2x4xi32>
    %237 = arith.sitofp %236 : vector<2x4xi32> to vector<2x4xf32>
    %c0_66 = arith.constant 0 : index
    %c0_67 = arith.constant 0 : index
    %238 = vector.load %arg4[%c0_66, %c0_67] : memref<4x128xf32, #tpu.memory_space<vmem>>, vector<4x128xf32>
    %cst_68 = arith.constant dense<0.000000e+00> : vector<2x128xf32>
    %239 = tpu.matmul %237, %238, %cst_68 {dimension_numbers = #tpu.dot_dimension_numbers<[1], [0], [0], [1], [0, 0, 1, 1], [], []>} : vector<2x4xf32>, vector<4x128xf32>, vector<2x128xf32> -> vector<2x128xf32>
    %c0_69 = arith.constant 0 : index
    %c0_70 = arith.constant 0 : index
    %240 = vector.load %arg5[%c0_69, %c0_70] : memref<32x128xf32, #tpu.memory_space<vmem>>, vector<32x128xf32>
    %cst_71 = arith.constant dense<0.000000e+00> : vector<2x128xf32>
    %241 = tpu.matmul %195, %240, %cst_71 {dimension_numbers = #tpu.dot_dimension_numbers<[1], [0], [0], [1], [0, 0, 1, 1], [], []>} : vector<2x32xf32>, vector<32x128xf32>, vector<2x128xf32> -> vector<2x128xf32>
    %242 = arith.addf %239, %241 : vector<2x128xf32>
    %c0_72 = arith.constant 0 : index
    %c0_73 = arith.constant 0 : index
    %243 = vector.load %arg7[%c0_72, %c0_73] : memref<2x128xf32, #tpu.memory_space<vmem>>, vector<1x128xf32>
    %244 = vector.broadcast %243 : vector<1x128xf32> to vector<2x128xf32>
    %245 = arith.addf %242, %244 : vector<2x128xf32>
    %246 = vector.extract_strided_slice %245 {offsets = [0, 0], sizes = [2, 32], strides = [1, 1]} : vector<2x128xf32> to vector<2x32xf32>
    %247 = arith.negf %246 : vector<2x32xf32>
    %248 = math.exp %247 : vector<2x32xf32>
    %cst_74 = arith.constant 1.000000e+00 : f32
    %249 = vector.broadcast %cst_74 : f32 to vector<2x32xf32>
    %250 = arith.addf %249, %248 : vector<2x32xf32>
    %251 = arith.divf %249, %250 : vector<2x32xf32>
    %252 = vector.extract_strided_slice %245 {offsets = [0, 32], sizes = [2, 32], strides = [1, 1]} : vector<2x128xf32> to vector<2x32xf32>
    %253 = arith.negf %252 : vector<2x32xf32>
    %254 = math.exp %253 : vector<2x32xf32>
    %cst_75 = arith.constant 1.000000e+00 : f32
    %255 = vector.broadcast %cst_75 : f32 to vector<2x32xf32>
    %256 = arith.addf %255, %254 : vector<2x32xf32>
    %257 = arith.divf %255, %256 : vector<2x32xf32>
    %258 = vector.extract_strided_slice %245 {offsets = [0, 64], sizes = [2, 32], strides = [1, 1]} : vector<2x128xf32> to vector<2x32xf32>
    %259 = math.tanh %258 : vector<2x32xf32>
    %260 = vector.extract_strided_slice %245 {offsets = [0, 96], sizes = [2, 32], strides = [1, 1]} : vector<2x128xf32> to vector<2x32xf32>
    %261 = arith.negf %260 : vector<2x32xf32>
    %262 = math.exp %261 : vector<2x32xf32>
    %cst_76 = arith.constant 1.000000e+00 : f32
    %263 = vector.broadcast %cst_76 : f32 to vector<2x32xf32>
    %264 = arith.addf %263, %262 : vector<2x32xf32>
    %265 = arith.divf %263, %264 : vector<2x32xf32>
    %266 = arith.mulf %257, %193 : vector<2x32xf32>
    %267 = arith.mulf %251, %259 : vector<2x32xf32>
    %268 = arith.addf %266, %267 : vector<2x32xf32>
    %269 = math.tanh %268 : vector<2x32xf32>
    %270 = arith.mulf %265, %269 : vector<2x32xf32>
    %271 = tpu.concatenate %270, %227 in 1 : vector<2x32xf32>, vector<2x32xf32> -> vector<2x64xf32>
    %c1_77 = arith.constant 1 : index
    %c0_78 = arith.constant 0 : index
    %c0_79 = arith.constant 0 : index
    %272 = vector.load %arg6[%c1_77, %c0_78, %c0_79] : memref<2x64x128xf32, #tpu.memory_space<vmem>>, vector<1x64x128xf32>
    %273 = vector.shape_cast %272 : vector<1x64x128xf32> to vector<64x128xf32>
    %cst_80 = arith.constant dense<0.000000e+00> : vector<2x128xf32>
    %274 = tpu.matmul %271, %273, %cst_80 {dimension_numbers = #tpu.dot_dimension_numbers<[1], [0], [0], [1], [0, 0, 1, 1], [], []>} : vector<2x64xf32>, vector<64x128xf32>, vector<2x128xf32> -> vector<2x128xf32>
    %c1_81 = arith.constant 1 : index
    %c0_82 = arith.constant 0 : index
    %275 = vector.load %arg7[%c1_81, %c0_82] : memref<2x128xf32, #tpu.memory_space<vmem>>, vector<1x128xf32>
    %276 = vector.broadcast %275 : vector<1x128xf32> to vector<2x128xf32>
    %277 = arith.addf %274, %276 : vector<2x128xf32>
    %278 = vector.extract_strided_slice %277 {offsets = [0, 0], sizes = [2, 32], strides = [1, 1]} : vector<2x128xf32> to vector<2x32xf32>
    %279 = arith.negf %278 : vector<2x32xf32>
    %280 = math.exp %279 : vector<2x32xf32>
    %cst_83 = arith.constant 1.000000e+00 : f32
    %281 = vector.broadcast %cst_83 : f32 to vector<2x32xf32>
    %282 = arith.addf %281, %280 : vector<2x32xf32>
    %283 = arith.divf %281, %282 : vector<2x32xf32>
    %284 = vector.extract_strided_slice %277 {offsets = [0, 32], sizes = [2, 32], strides = [1, 1]} : vector<2x128xf32> to vector<2x32xf32>
    %285 = arith.negf %284 : vector<2x32xf32>
    %286 = math.exp %285 : vector<2x32xf32>
    %cst_84 = arith.constant 1.000000e+00 : f32
    %287 = vector.broadcast %cst_84 : f32 to vector<2x32xf32>
    %288 = arith.addf %287, %286 : vector<2x32xf32>
    %289 = arith.divf %287, %288 : vector<2x32xf32>
    %290 = vector.extract_strided_slice %277 {offsets = [0, 64], sizes = [2, 32], strides = [1, 1]} : vector<2x128xf32> to vector<2x32xf32>
    %291 = math.tanh %290 : vector<2x32xf32>
    %292 = vector.extract_strided_slice %277 {offsets = [0, 96], sizes = [2, 32], strides = [1, 1]} : vector<2x128xf32> to vector<2x32xf32>
    %293 = arith.negf %292 : vector<2x32xf32>
    %294 = math.exp %293 : vector<2x32xf32>
    %cst_85 = arith.constant 1.000000e+00 : f32
    %295 = vector.broadcast %cst_85 : f32 to vector<2x32xf32>
    %296 = arith.addf %295, %294 : vector<2x32xf32>
    %297 = arith.divf %295, %296 : vector<2x32xf32>
    %298 = arith.mulf %289, %225 : vector<2x32xf32>
    %299 = arith.mulf %283, %291 : vector<2x32xf32>
    %300 = arith.addf %298, %299 : vector<2x32xf32>
    %301 = math.tanh %300 : vector<2x32xf32>
    %302 = arith.mulf %297, %301 : vector<2x32xf32>
    %c3_i32 = arith.constant 3 : i32
    %303 = vector.broadcast %c3_i32 : i32 to vector<2x1xi32>
    %304 = arith.cmpi eq, %1, %303 : vector<2x1xi32>
    %305 = vector.shape_cast %304 : vector<2x1xi1> to vector<2x1xi1>
    %306 = vector.broadcast %305 : vector<2x1xi1> to vector<2x32xi1>
    %307 = arith.select %306, %302, %232 : vector<2x32xi1>, vector<2x32xf32>
    %308 = vector.extract_strided_slice %0 {offsets = [0, 4], sizes = [2, 1], strides = [1, 1]} : vector<2x8xi32> to vector<2x1xi32>
    %309 = vector.broadcast %308 : vector<2x1xi32> to vector<2x4xi32>
    %310 = arith.cmpi eq, %309, %2 : vector<2x4xi32>
    %311 = arith.extui %310 : vector<2x4xi1> to vector<2x4xi32>
    %312 = arith.sitofp %311 : vector<2x4xi32> to vector<2x4xf32>
    %c0_86 = arith.constant 0 : index
    %c0_87 = arith.constant 0 : index
    %313 = vector.load %arg4[%c0_86, %c0_87] : memref<4x128xf32, #tpu.memory_space<vmem>>, vector<4x128xf32>
    %cst_88 = arith.constant dense<0.000000e+00> : vector<2x128xf32>
    %314 = tpu.matmul %312, %313, %cst_88 {dimension_numbers = #tpu.dot_dimension_numbers<[1], [0], [0], [1], [0, 0, 1, 1], [], []>} : vector<2x4xf32>, vector<4x128xf32>, vector<2x128xf32> -> vector<2x128xf32>
    %c0_89 = arith.constant 0 : index
    %c0_90 = arith.constant 0 : index
    %315 = vector.load %arg5[%c0_89, %c0_90] : memref<32x128xf32, #tpu.memory_space<vmem>>, vector<32x128xf32>
    %cst_91 = arith.constant dense<0.000000e+00> : vector<2x128xf32>
    %316 = tpu.matmul %270, %315, %cst_91 {dimension_numbers = #tpu.dot_dimension_numbers<[1], [0], [0], [1], [0, 0, 1, 1], [], []>} : vector<2x32xf32>, vector<32x128xf32>, vector<2x128xf32> -> vector<2x128xf32>
    %317 = arith.addf %314, %316 : vector<2x128xf32>
    %c0_92 = arith.constant 0 : index
    %c0_93 = arith.constant 0 : index
    %318 = vector.load %arg7[%c0_92, %c0_93] : memref<2x128xf32, #tpu.memory_space<vmem>>, vector<1x128xf32>
    %319 = vector.broadcast %318 : vector<1x128xf32> to vector<2x128xf32>
    %320 = arith.addf %317, %319 : vector<2x128xf32>
    %321 = vector.extract_strided_slice %320 {offsets = [0, 0], sizes = [2, 32], strides = [1, 1]} : vector<2x128xf32> to vector<2x32xf32>
    %322 = arith.negf %321 : vector<2x32xf32>
    %323 = math.exp %322 : vector<2x32xf32>
    %cst_94 = arith.constant 1.000000e+00 : f32
    %324 = vector.broadcast %cst_94 : f32 to vector<2x32xf32>
    %325 = arith.addf %324, %323 : vector<2x32xf32>
    %326 = arith.divf %324, %325 : vector<2x32xf32>
    %327 = vector.extract_strided_slice %320 {offsets = [0, 32], sizes = [2, 32], strides = [1, 1]} : vector<2x128xf32> to vector<2x32xf32>
    %328 = arith.negf %327 : vector<2x32xf32>
    %329 = math.exp %328 : vector<2x32xf32>
    %cst_95 = arith.constant 1.000000e+00 : f32
    %330 = vector.broadcast %cst_95 : f32 to vector<2x32xf32>
    %331 = arith.addf %330, %329 : vector<2x32xf32>
    %332 = arith.divf %330, %331 : vector<2x32xf32>
    %333 = vector.extract_strided_slice %320 {offsets = [0, 64], sizes = [2, 32], strides = [1, 1]} : vector<2x128xf32> to vector<2x32xf32>
    %334 = math.tanh %333 : vector<2x32xf32>
    %335 = vector.extract_strided_slice %320 {offsets = [0, 96], sizes = [2, 32], strides = [1, 1]} : vector<2x128xf32> to vector<2x32xf32>
    %336 = arith.negf %335 : vector<2x32xf32>
    %337 = math.exp %336 : vector<2x32xf32>
    %cst_96 = arith.constant 1.000000e+00 : f32
    %338 = vector.broadcast %cst_96 : f32 to vector<2x32xf32>
    %339 = arith.addf %338, %337 : vector<2x32xf32>
    %340 = arith.divf %338, %339 : vector<2x32xf32>
    %341 = arith.mulf %332, %268 : vector<2x32xf32>
    %342 = arith.mulf %326, %334 : vector<2x32xf32>
    %343 = arith.addf %341, %342 : vector<2x32xf32>
    %344 = math.tanh %343 : vector<2x32xf32>
    %345 = arith.mulf %340, %344 : vector<2x32xf32>
    %346 = tpu.concatenate %345, %302 in 1 : vector<2x32xf32>, vector<2x32xf32> -> vector<2x64xf32>
    %c1_97 = arith.constant 1 : index
    %c0_98 = arith.constant 0 : index
    %c0_99 = arith.constant 0 : index
    %347 = vector.load %arg6[%c1_97, %c0_98, %c0_99] : memref<2x64x128xf32, #tpu.memory_space<vmem>>, vector<1x64x128xf32>
    %348 = vector.shape_cast %347 : vector<1x64x128xf32> to vector<64x128xf32>
    %cst_100 = arith.constant dense<0.000000e+00> : vector<2x128xf32>
    %349 = tpu.matmul %346, %348, %cst_100 {dimension_numbers = #tpu.dot_dimension_numbers<[1], [0], [0], [1], [0, 0, 1, 1], [], []>} : vector<2x64xf32>, vector<64x128xf32>, vector<2x128xf32> -> vector<2x128xf32>
    %c1_101 = arith.constant 1 : index
    %c0_102 = arith.constant 0 : index
    %350 = vector.load %arg7[%c1_101, %c0_102] : memref<2x128xf32, #tpu.memory_space<vmem>>, vector<1x128xf32>
    %351 = vector.broadcast %350 : vector<1x128xf32> to vector<2x128xf32>
    %352 = arith.addf %349, %351 : vector<2x128xf32>
    %353 = vector.extract_strided_slice %352 {offsets = [0, 0], sizes = [2, 32], strides = [1, 1]} : vector<2x128xf32> to vector<2x32xf32>
    %354 = arith.negf %353 : vector<2x32xf32>
    %355 = math.exp %354 : vector<2x32xf32>
    %cst_103 = arith.constant 1.000000e+00 : f32
    %356 = vector.broadcast %cst_103 : f32 to vector<2x32xf32>
    %357 = arith.addf %356, %355 : vector<2x32xf32>
    %358 = arith.divf %356, %357 : vector<2x32xf32>
    %359 = vector.extract_strided_slice %352 {offsets = [0, 32], sizes = [2, 32], strides = [1, 1]} : vector<2x128xf32> to vector<2x32xf32>
    %360 = arith.negf %359 : vector<2x32xf32>
    %361 = math.exp %360 : vector<2x32xf32>
    %cst_104 = arith.constant 1.000000e+00 : f32
    %362 = vector.broadcast %cst_104 : f32 to vector<2x32xf32>
    %363 = arith.addf %362, %361 : vector<2x32xf32>
    %364 = arith.divf %362, %363 : vector<2x32xf32>
    %365 = vector.extract_strided_slice %352 {offsets = [0, 64], sizes = [2, 32], strides = [1, 1]} : vector<2x128xf32> to vector<2x32xf32>
    %366 = math.tanh %365 : vector<2x32xf32>
    %367 = vector.extract_strided_slice %352 {offsets = [0, 96], sizes = [2, 32], strides = [1, 1]} : vector<2x128xf32> to vector<2x32xf32>
    %368 = arith.negf %367 : vector<2x32xf32>
    %369 = math.exp %368 : vector<2x32xf32>
    %cst_105 = arith.constant 1.000000e+00 : f32
    %370 = vector.broadcast %cst_105 : f32 to vector<2x32xf32>
    %371 = arith.addf %370, %369 : vector<2x32xf32>
    %372 = arith.divf %370, %371 : vector<2x32xf32>
    %373 = arith.mulf %364, %300 : vector<2x32xf32>
    %374 = arith.mulf %358, %366 : vector<2x32xf32>
    %375 = arith.addf %373, %374 : vector<2x32xf32>
    %376 = math.tanh %375 : vector<2x32xf32>
    %377 = arith.mulf %372, %376 : vector<2x32xf32>
    %c4_i32 = arith.constant 4 : i32
    %378 = vector.broadcast %c4_i32 : i32 to vector<2x1xi32>
    %379 = arith.cmpi eq, %1, %378 : vector<2x1xi32>
    %380 = vector.shape_cast %379 : vector<2x1xi1> to vector<2x1xi1>
    %381 = vector.broadcast %380 : vector<2x1xi1> to vector<2x32xi1>
    %382 = arith.select %381, %377, %307 : vector<2x32xi1>, vector<2x32xf32>
    %383 = vector.extract_strided_slice %0 {offsets = [0, 5], sizes = [2, 1], strides = [1, 1]} : vector<2x8xi32> to vector<2x1xi32>
    %384 = vector.broadcast %383 : vector<2x1xi32> to vector<2x4xi32>
    %385 = arith.cmpi eq, %384, %2 : vector<2x4xi32>
    %386 = arith.extui %385 : vector<2x4xi1> to vector<2x4xi32>
    %387 = arith.sitofp %386 : vector<2x4xi32> to vector<2x4xf32>
    %c0_106 = arith.constant 0 : index
    %c0_107 = arith.constant 0 : index
    %388 = vector.load %arg4[%c0_106, %c0_107] : memref<4x128xf32, #tpu.memory_space<vmem>>, vector<4x128xf32>
    %cst_108 = arith.constant dense<0.000000e+00> : vector<2x128xf32>
    %389 = tpu.matmul %387, %388, %cst_108 {dimension_numbers = #tpu.dot_dimension_numbers<[1], [0], [0], [1], [0, 0, 1, 1], [], []>} : vector<2x4xf32>, vector<4x128xf32>, vector<2x128xf32> -> vector<2x128xf32>
    %c0_109 = arith.constant 0 : index
    %c0_110 = arith.constant 0 : index
    %390 = vector.load %arg5[%c0_109, %c0_110] : memref<32x128xf32, #tpu.memory_space<vmem>>, vector<32x128xf32>
    %cst_111 = arith.constant dense<0.000000e+00> : vector<2x128xf32>
    %391 = tpu.matmul %345, %390, %cst_111 {dimension_numbers = #tpu.dot_dimension_numbers<[1], [0], [0], [1], [0, 0, 1, 1], [], []>} : vector<2x32xf32>, vector<32x128xf32>, vector<2x128xf32> -> vector<2x128xf32>
    %392 = arith.addf %389, %391 : vector<2x128xf32>
    %c0_112 = arith.constant 0 : index
    %c0_113 = arith.constant 0 : index
    %393 = vector.load %arg7[%c0_112, %c0_113] : memref<2x128xf32, #tpu.memory_space<vmem>>, vector<1x128xf32>
    %394 = vector.broadcast %393 : vector<1x128xf32> to vector<2x128xf32>
    %395 = arith.addf %392, %394 : vector<2x128xf32>
    %396 = vector.extract_strided_slice %395 {offsets = [0, 0], sizes = [2, 32], strides = [1, 1]} : vector<2x128xf32> to vector<2x32xf32>
    %397 = arith.negf %396 : vector<2x32xf32>
    %398 = math.exp %397 : vector<2x32xf32>
    %cst_114 = arith.constant 1.000000e+00 : f32
    %399 = vector.broadcast %cst_114 : f32 to vector<2x32xf32>
    %400 = arith.addf %399, %398 : vector<2x32xf32>
    %401 = arith.divf %399, %400 : vector<2x32xf32>
    %402 = vector.extract_strided_slice %395 {offsets = [0, 32], sizes = [2, 32], strides = [1, 1]} : vector<2x128xf32> to vector<2x32xf32>
    %403 = arith.negf %402 : vector<2x32xf32>
    %404 = math.exp %403 : vector<2x32xf32>
    %cst_115 = arith.constant 1.000000e+00 : f32
    %405 = vector.broadcast %cst_115 : f32 to vector<2x32xf32>
    %406 = arith.addf %405, %404 : vector<2x32xf32>
    %407 = arith.divf %405, %406 : vector<2x32xf32>
    %408 = vector.extract_strided_slice %395 {offsets = [0, 64], sizes = [2, 32], strides = [1, 1]} : vector<2x128xf32> to vector<2x32xf32>
    %409 = math.tanh %408 : vector<2x32xf32>
    %410 = vector.extract_strided_slice %395 {offsets = [0, 96], sizes = [2, 32], strides = [1, 1]} : vector<2x128xf32> to vector<2x32xf32>
    %411 = arith.negf %410 : vector<2x32xf32>
    %412 = math.exp %411 : vector<2x32xf32>
    %cst_116 = arith.constant 1.000000e+00 : f32
    %413 = vector.broadcast %cst_116 : f32 to vector<2x32xf32>
    %414 = arith.addf %413, %412 : vector<2x32xf32>
    %415 = arith.divf %413, %414 : vector<2x32xf32>
    %416 = arith.mulf %407, %343 : vector<2x32xf32>
    %417 = arith.mulf %401, %409 : vector<2x32xf32>
    %418 = arith.addf %416, %417 : vector<2x32xf32>
    %419 = math.tanh %418 : vector<2x32xf32>
    %420 = arith.mulf %415, %419 : vector<2x32xf32>
    %421 = tpu.concatenate %420, %377 in 1 : vector<2x32xf32>, vector<2x32xf32> -> vector<2x64xf32>
    %c1_117 = arith.constant 1 : index
    %c0_118 = arith.constant 0 : index
    %c0_119 = arith.constant 0 : index
    %422 = vector.load %arg6[%c1_117, %c0_118, %c0_119] : memref<2x64x128xf32, #tpu.memory_space<vmem>>, vector<1x64x128xf32>
    %423 = vector.shape_cast %422 : vector<1x64x128xf32> to vector<64x128xf32>
    %cst_120 = arith.constant dense<0.000000e+00> : vector<2x128xf32>
    %424 = tpu.matmul %421, %423, %cst_120 {dimension_numbers = #tpu.dot_dimension_numbers<[1], [0], [0], [1], [0, 0, 1, 1], [], []>} : vector<2x64xf32>, vector<64x128xf32>, vector<2x128xf32> -> vector<2x128xf32>
    %c1_121 = arith.constant 1 : index
    %c0_122 = arith.constant 0 : index
    %425 = vector.load %arg7[%c1_121, %c0_122] : memref<2x128xf32, #tpu.memory_space<vmem>>, vector<1x128xf32>
    %426 = vector.broadcast %425 : vector<1x128xf32> to vector<2x128xf32>
    %427 = arith.addf %424, %426 : vector<2x128xf32>
    %428 = vector.extract_strided_slice %427 {offsets = [0, 0], sizes = [2, 32], strides = [1, 1]} : vector<2x128xf32> to vector<2x32xf32>
    %429 = arith.negf %428 : vector<2x32xf32>
    %430 = math.exp %429 : vector<2x32xf32>
    %cst_123 = arith.constant 1.000000e+00 : f32
    %431 = vector.broadcast %cst_123 : f32 to vector<2x32xf32>
    %432 = arith.addf %431, %430 : vector<2x32xf32>
    %433 = arith.divf %431, %432 : vector<2x32xf32>
    %434 = vector.extract_strided_slice %427 {offsets = [0, 32], sizes = [2, 32], strides = [1, 1]} : vector<2x128xf32> to vector<2x32xf32>
    %435 = arith.negf %434 : vector<2x32xf32>
    %436 = math.exp %435 : vector<2x32xf32>
    %cst_124 = arith.constant 1.000000e+00 : f32
    %437 = vector.broadcast %cst_124 : f32 to vector<2x32xf32>
    %438 = arith.addf %437, %436 : vector<2x32xf32>
    %439 = arith.divf %437, %438 : vector<2x32xf32>
    %440 = vector.extract_strided_slice %427 {offsets = [0, 64], sizes = [2, 32], strides = [1, 1]} : vector<2x128xf32> to vector<2x32xf32>
    %441 = math.tanh %440 : vector<2x32xf32>
    %442 = vector.extract_strided_slice %427 {offsets = [0, 96], sizes = [2, 32], strides = [1, 1]} : vector<2x128xf32> to vector<2x32xf32>
    %443 = arith.negf %442 : vector<2x32xf32>
    %444 = math.exp %443 : vector<2x32xf32>
    %cst_125 = arith.constant 1.000000e+00 : f32
    %445 = vector.broadcast %cst_125 : f32 to vector<2x32xf32>
    %446 = arith.addf %445, %444 : vector<2x32xf32>
    %447 = arith.divf %445, %446 : vector<2x32xf32>
    %448 = arith.mulf %439, %375 : vector<2x32xf32>
    %449 = arith.mulf %433, %441 : vector<2x32xf32>
    %450 = arith.addf %448, %449 : vector<2x32xf32>
    %451 = math.tanh %450 : vector<2x32xf32>
    %452 = arith.mulf %447, %451 : vector<2x32xf32>
    %c5_i32 = arith.constant 5 : i32
    %453 = vector.broadcast %c5_i32 : i32 to vector<2x1xi32>
    %454 = arith.cmpi eq, %1, %453 : vector<2x1xi32>
    %455 = vector.shape_cast %454 : vector<2x1xi1> to vector<2x1xi1>
    %456 = vector.broadcast %455 : vector<2x1xi1> to vector<2x32xi1>
    %457 = arith.select %456, %452, %382 : vector<2x32xi1>, vector<2x32xf32>
    %458 = vector.extract_strided_slice %0 {offsets = [0, 6], sizes = [2, 1], strides = [1, 1]} : vector<2x8xi32> to vector<2x1xi32>
    %459 = vector.broadcast %458 : vector<2x1xi32> to vector<2x4xi32>
    %460 = arith.cmpi eq, %459, %2 : vector<2x4xi32>
    %461 = arith.extui %460 : vector<2x4xi1> to vector<2x4xi32>
    %462 = arith.sitofp %461 : vector<2x4xi32> to vector<2x4xf32>
    %c0_126 = arith.constant 0 : index
    %c0_127 = arith.constant 0 : index
    %463 = vector.load %arg4[%c0_126, %c0_127] : memref<4x128xf32, #tpu.memory_space<vmem>>, vector<4x128xf32>
    %cst_128 = arith.constant dense<0.000000e+00> : vector<2x128xf32>
    %464 = tpu.matmul %462, %463, %cst_128 {dimension_numbers = #tpu.dot_dimension_numbers<[1], [0], [0], [1], [0, 0, 1, 1], [], []>} : vector<2x4xf32>, vector<4x128xf32>, vector<2x128xf32> -> vector<2x128xf32>
    %c0_129 = arith.constant 0 : index
    %c0_130 = arith.constant 0 : index
    %465 = vector.load %arg5[%c0_129, %c0_130] : memref<32x128xf32, #tpu.memory_space<vmem>>, vector<32x128xf32>
    %cst_131 = arith.constant dense<0.000000e+00> : vector<2x128xf32>
    %466 = tpu.matmul %420, %465, %cst_131 {dimension_numbers = #tpu.dot_dimension_numbers<[1], [0], [0], [1], [0, 0, 1, 1], [], []>} : vector<2x32xf32>, vector<32x128xf32>, vector<2x128xf32> -> vector<2x128xf32>
    %467 = arith.addf %464, %466 : vector<2x128xf32>
    %c0_132 = arith.constant 0 : index
    %c0_133 = arith.constant 0 : index
    %468 = vector.load %arg7[%c0_132, %c0_133] : memref<2x128xf32, #tpu.memory_space<vmem>>, vector<1x128xf32>
    %469 = vector.broadcast %468 : vector<1x128xf32> to vector<2x128xf32>
    %470 = arith.addf %467, %469 : vector<2x128xf32>
    %471 = vector.extract_strided_slice %470 {offsets = [0, 0], sizes = [2, 32], strides = [1, 1]} : vector<2x128xf32> to vector<2x32xf32>
    %472 = arith.negf %471 : vector<2x32xf32>
    %473 = math.exp %472 : vector<2x32xf32>
    %cst_134 = arith.constant 1.000000e+00 : f32
    %474 = vector.broadcast %cst_134 : f32 to vector<2x32xf32>
    %475 = arith.addf %474, %473 : vector<2x32xf32>
    %476 = arith.divf %474, %475 : vector<2x32xf32>
    %477 = vector.extract_strided_slice %470 {offsets = [0, 32], sizes = [2, 32], strides = [1, 1]} : vector<2x128xf32> to vector<2x32xf32>
    %478 = arith.negf %477 : vector<2x32xf32>
    %479 = math.exp %478 : vector<2x32xf32>
    %cst_135 = arith.constant 1.000000e+00 : f32
    %480 = vector.broadcast %cst_135 : f32 to vector<2x32xf32>
    %481 = arith.addf %480, %479 : vector<2x32xf32>
    %482 = arith.divf %480, %481 : vector<2x32xf32>
    %483 = vector.extract_strided_slice %470 {offsets = [0, 64], sizes = [2, 32], strides = [1, 1]} : vector<2x128xf32> to vector<2x32xf32>
    %484 = math.tanh %483 : vector<2x32xf32>
    %485 = vector.extract_strided_slice %470 {offsets = [0, 96], sizes = [2, 32], strides = [1, 1]} : vector<2x128xf32> to vector<2x32xf32>
    %486 = arith.negf %485 : vector<2x32xf32>
    %487 = math.exp %486 : vector<2x32xf32>
    %cst_136 = arith.constant 1.000000e+00 : f32
    %488 = vector.broadcast %cst_136 : f32 to vector<2x32xf32>
    %489 = arith.addf %488, %487 : vector<2x32xf32>
    %490 = arith.divf %488, %489 : vector<2x32xf32>
    %491 = arith.mulf %482, %418 : vector<2x32xf32>
    %492 = arith.mulf %476, %484 : vector<2x32xf32>
    %493 = arith.addf %491, %492 : vector<2x32xf32>
    %494 = math.tanh %493 : vector<2x32xf32>
    %495 = arith.mulf %490, %494 : vector<2x32xf32>
    %496 = tpu.concatenate %495, %452 in 1 : vector<2x32xf32>, vector<2x32xf32> -> vector<2x64xf32>
    %c1_137 = arith.constant 1 : index
    %c0_138 = arith.constant 0 : index
    %c0_139 = arith.constant 0 : index
    %497 = vector.load %arg6[%c1_137, %c0_138, %c0_139] : memref<2x64x128xf32, #tpu.memory_space<vmem>>, vector<1x64x128xf32>
    %498 = vector.shape_cast %497 : vector<1x64x128xf32> to vector<64x128xf32>
    %cst_140 = arith.constant dense<0.000000e+00> : vector<2x128xf32>
    %499 = tpu.matmul %496, %498, %cst_140 {dimension_numbers = #tpu.dot_dimension_numbers<[1], [0], [0], [1], [0, 0, 1, 1], [], []>} : vector<2x64xf32>, vector<64x128xf32>, vector<2x128xf32> -> vector<2x128xf32>
    %c1_141 = arith.constant 1 : index
    %c0_142 = arith.constant 0 : index
    %500 = vector.load %arg7[%c1_141, %c0_142] : memref<2x128xf32, #tpu.memory_space<vmem>>, vector<1x128xf32>
    %501 = vector.broadcast %500 : vector<1x128xf32> to vector<2x128xf32>
    %502 = arith.addf %499, %501 : vector<2x128xf32>
    %503 = vector.extract_strided_slice %502 {offsets = [0, 0], sizes = [2, 32], strides = [1, 1]} : vector<2x128xf32> to vector<2x32xf32>
    %504 = arith.negf %503 : vector<2x32xf32>
    %505 = math.exp %504 : vector<2x32xf32>
    %cst_143 = arith.constant 1.000000e+00 : f32
    %506 = vector.broadcast %cst_143 : f32 to vector<2x32xf32>
    %507 = arith.addf %506, %505 : vector<2x32xf32>
    %508 = arith.divf %506, %507 : vector<2x32xf32>
    %509 = vector.extract_strided_slice %502 {offsets = [0, 32], sizes = [2, 32], strides = [1, 1]} : vector<2x128xf32> to vector<2x32xf32>
    %510 = arith.negf %509 : vector<2x32xf32>
    %511 = math.exp %510 : vector<2x32xf32>
    %cst_144 = arith.constant 1.000000e+00 : f32
    %512 = vector.broadcast %cst_144 : f32 to vector<2x32xf32>
    %513 = arith.addf %512, %511 : vector<2x32xf32>
    %514 = arith.divf %512, %513 : vector<2x32xf32>
    %515 = vector.extract_strided_slice %502 {offsets = [0, 64], sizes = [2, 32], strides = [1, 1]} : vector<2x128xf32> to vector<2x32xf32>
    %516 = math.tanh %515 : vector<2x32xf32>
    %517 = vector.extract_strided_slice %502 {offsets = [0, 96], sizes = [2, 32], strides = [1, 1]} : vector<2x128xf32> to vector<2x32xf32>
    %518 = arith.negf %517 : vector<2x32xf32>
    %519 = math.exp %518 : vector<2x32xf32>
    %cst_145 = arith.constant 1.000000e+00 : f32
    %520 = vector.broadcast %cst_145 : f32 to vector<2x32xf32>
    %521 = arith.addf %520, %519 : vector<2x32xf32>
    %522 = arith.divf %520, %521 : vector<2x32xf32>
    %523 = arith.mulf %514, %450 : vector<2x32xf32>
    %524 = arith.mulf %508, %516 : vector<2x32xf32>
    %525 = arith.addf %523, %524 : vector<2x32xf32>
    %526 = math.tanh %525 : vector<2x32xf32>
    %527 = arith.mulf %522, %526 : vector<2x32xf32>
    %c6_i32 = arith.constant 6 : i32
    %528 = vector.broadcast %c6_i32 : i32 to vector<2x1xi32>
    %529 = arith.cmpi eq, %1, %528 : vector<2x1xi32>
    %530 = vector.shape_cast %529 : vector<2x1xi1> to vector<2x1xi1>
    %531 = vector.broadcast %530 : vector<2x1xi1> to vector<2x32xi1>
    %532 = arith.select %531, %527, %457 : vector<2x32xi1>, vector<2x32xf32>
    %533 = vector.extract_strided_slice %0 {offsets = [0, 7], sizes = [2, 1], strides = [1, 1]} : vector<2x8xi32> to vector<2x1xi32>
    %534 = vector.broadcast %533 : vector<2x1xi32> to vector<2x4xi32>
    %535 = arith.cmpi eq, %534, %2 : vector<2x4xi32>
    %536 = arith.extui %535 : vector<2x4xi1> to vector<2x4xi32>
    %537 = arith.sitofp %536 : vector<2x4xi32> to vector<2x4xf32>
    %c0_146 = arith.constant 0 : index
    %c0_147 = arith.constant 0 : index
    %538 = vector.load %arg4[%c0_146, %c0_147] : memref<4x128xf32, #tpu.memory_space<vmem>>, vector<4x128xf32>
    %cst_148 = arith.constant dense<0.000000e+00> : vector<2x128xf32>
    %539 = tpu.matmul %537, %538, %cst_148 {dimension_numbers = #tpu.dot_dimension_numbers<[1], [0], [0], [1], [0, 0, 1, 1], [], []>} : vector<2x4xf32>, vector<4x128xf32>, vector<2x128xf32> -> vector<2x128xf32>
    %c0_149 = arith.constant 0 : index
    %c0_150 = arith.constant 0 : index
    %540 = vector.load %arg5[%c0_149, %c0_150] : memref<32x128xf32, #tpu.memory_space<vmem>>, vector<32x128xf32>
    %cst_151 = arith.constant dense<0.000000e+00> : vector<2x128xf32>
    %541 = tpu.matmul %495, %540, %cst_151 {dimension_numbers = #tpu.dot_dimension_numbers<[1], [0], [0], [1], [0, 0, 1, 1], [], []>} : vector<2x32xf32>, vector<32x128xf32>, vector<2x128xf32> -> vector<2x128xf32>
    %542 = arith.addf %539, %541 : vector<2x128xf32>
    %c0_152 = arith.constant 0 : index
    %c0_153 = arith.constant 0 : index
    %543 = vector.load %arg7[%c0_152, %c0_153] : memref<2x128xf32, #tpu.memory_space<vmem>>, vector<1x128xf32>
    %544 = vector.broadcast %543 : vector<1x128xf32> to vector<2x128xf32>
    %545 = arith.addf %542, %544 : vector<2x128xf32>
    %546 = vector.extract_strided_slice %545 {offsets = [0, 0], sizes = [2, 32], strides = [1, 1]} : vector<2x128xf32> to vector<2x32xf32>
    %547 = arith.negf %546 : vector<2x32xf32>
    %548 = math.exp %547 : vector<2x32xf32>
    %cst_154 = arith.constant 1.000000e+00 : f32
    %549 = vector.broadcast %cst_154 : f32 to vector<2x32xf32>
    %550 = arith.addf %549, %548 : vector<2x32xf32>
    %551 = arith.divf %549, %550 : vector<2x32xf32>
    %552 = vector.extract_strided_slice %545 {offsets = [0, 32], sizes = [2, 32], strides = [1, 1]} : vector<2x128xf32> to vector<2x32xf32>
    %553 = arith.negf %552 : vector<2x32xf32>
    %554 = math.exp %553 : vector<2x32xf32>
    %cst_155 = arith.constant 1.000000e+00 : f32
    %555 = vector.broadcast %cst_155 : f32 to vector<2x32xf32>
    %556 = arith.addf %555, %554 : vector<2x32xf32>
    %557 = arith.divf %555, %556 : vector<2x32xf32>
    %558 = vector.extract_strided_slice %545 {offsets = [0, 64], sizes = [2, 32], strides = [1, 1]} : vector<2x128xf32> to vector<2x32xf32>
    %559 = math.tanh %558 : vector<2x32xf32>
    %560 = vector.extract_strided_slice %545 {offsets = [0, 96], sizes = [2, 32], strides = [1, 1]} : vector<2x128xf32> to vector<2x32xf32>
    %561 = arith.negf %560 : vector<2x32xf32>
    %562 = math.exp %561 : vector<2x32xf32>
    %cst_156 = arith.constant 1.000000e+00 : f32
    %563 = vector.broadcast %cst_156 : f32 to vector<2x32xf32>
    %564 = arith.addf %563, %562 : vector<2x32xf32>
    %565 = arith.divf %563, %564 : vector<2x32xf32>
    %566 = arith.mulf %557, %493 : vector<2x32xf32>
    %567 = arith.mulf %551, %559 : vector<2x32xf32>
    %568 = arith.addf %566, %567 : vector<2x32xf32>
    %569 = math.tanh %568 : vector<2x32xf32>
    %570 = arith.mulf %565, %569 : vector<2x32xf32>
    %571 = tpu.concatenate %570, %527 in 1 : vector<2x32xf32>, vector<2x32xf32> -> vector<2x64xf32>
    %c1_157 = arith.constant 1 : index
    %c0_158 = arith.constant 0 : index
    %c0_159 = arith.constant 0 : index
    %572 = vector.load %arg6[%c1_157, %c0_158, %c0_159] : memref<2x64x128xf32, #tpu.memory_space<vmem>>, vector<1x64x128xf32>
    %573 = vector.shape_cast %572 : vector<1x64x128xf32> to vector<64x128xf32>
    %cst_160 = arith.constant dense<0.000000e+00> : vector<2x128xf32>
    %574 = tpu.matmul %571, %573, %cst_160 {dimension_numbers = #tpu.dot_dimension_numbers<[1], [0], [0], [1], [0, 0, 1, 1], [], []>} : vector<2x64xf32>, vector<64x128xf32>, vector<2x128xf32> -> vector<2x128xf32>
    %c1_161 = arith.constant 1 : index
    %c0_162 = arith.constant 0 : index
    %575 = vector.load %arg7[%c1_161, %c0_162] : memref<2x128xf32, #tpu.memory_space<vmem>>, vector<1x128xf32>
    %576 = vector.broadcast %575 : vector<1x128xf32> to vector<2x128xf32>
    %577 = arith.addf %574, %576 : vector<2x128xf32>
    %578 = vector.extract_strided_slice %577 {offsets = [0, 0], sizes = [2, 32], strides = [1, 1]} : vector<2x128xf32> to vector<2x32xf32>
    %579 = arith.negf %578 : vector<2x32xf32>
    %580 = math.exp %579 : vector<2x32xf32>
    %cst_163 = arith.constant 1.000000e+00 : f32
    %581 = vector.broadcast %cst_163 : f32 to vector<2x32xf32>
    %582 = arith.addf %581, %580 : vector<2x32xf32>
    %583 = arith.divf %581, %582 : vector<2x32xf32>
    %584 = vector.extract_strided_slice %577 {offsets = [0, 32], sizes = [2, 32], strides = [1, 1]} : vector<2x128xf32> to vector<2x32xf32>
    %585 = arith.negf %584 : vector<2x32xf32>
    %586 = math.exp %585 : vector<2x32xf32>
    %cst_164 = arith.constant 1.000000e+00 : f32
    %587 = vector.broadcast %cst_164 : f32 to vector<2x32xf32>
    %588 = arith.addf %587, %586 : vector<2x32xf32>
    %589 = arith.divf %587, %588 : vector<2x32xf32>
    %590 = vector.extract_strided_slice %577 {offsets = [0, 64], sizes = [2, 32], strides = [1, 1]} : vector<2x128xf32> to vector<2x32xf32>
    %591 = math.tanh %590 : vector<2x32xf32>
    %592 = vector.extract_strided_slice %577 {offsets = [0, 96], sizes = [2, 32], strides = [1, 1]} : vector<2x128xf32> to vector<2x32xf32>
    %593 = arith.negf %592 : vector<2x32xf32>
    %594 = math.exp %593 : vector<2x32xf32>
    %cst_165 = arith.constant 1.000000e+00 : f32
    %595 = vector.broadcast %cst_165 : f32 to vector<2x32xf32>
    %596 = arith.addf %595, %594 : vector<2x32xf32>
    %597 = arith.divf %595, %596 : vector<2x32xf32>
    %598 = arith.mulf %589, %525 : vector<2x32xf32>
    %599 = arith.mulf %583, %591 : vector<2x32xf32>
    %600 = arith.addf %598, %599 : vector<2x32xf32>
    %601 = math.tanh %600 : vector<2x32xf32>
    %602 = arith.mulf %597, %601 : vector<2x32xf32>
    %c7_i32 = arith.constant 7 : i32
    %603 = vector.broadcast %c7_i32 : i32 to vector<2x1xi32>
    %604 = arith.cmpi eq, %1, %603 : vector<2x1xi32>
    %605 = vector.shape_cast %604 : vector<2x1xi1> to vector<2x1xi1>
    %606 = vector.broadcast %605 : vector<2x1xi1> to vector<2x32xi1>
    %607 = arith.select %606, %602, %532 : vector<2x32xi1>, vector<2x32xf32>
    %608 = arith.mulf %607, %607 : vector<2x32xf32>
    %cst_166 = arith.constant dense<0.000000e+00> : vector<2xf32>
    %609 = vector.multi_reduction <add>, %608, %cst_166 [1] : vector<2x32xf32> to vector<2xf32>
    %610 = vector.shape_cast %609 : vector<2xf32> to vector<2x1xf32>
    %611 = math.sqrt %610 : vector<2x1xf32>
    %cst_167 = arith.constant 9.99999996E-13 : f32
    %612 = vector.broadcast %cst_167 : f32 to vector<2x1xf32>
    %613 = arith.maximumf %611, %612 : vector<2x1xf32>
    %614 = vector.broadcast %613 : vector<2x1xf32> to vector<2x32xf32>
    %615 = arith.divf %607, %614 : vector<2x32xf32>
    %c0_168 = arith.constant 0 : index
    %c0_169 = arith.constant 0 : index
    %616 = vector.load %arg16[%c0_168, %c0_169] : memref<2x32xf32, #tpu.memory_space<vmem>>, vector<2x32xf32>
    tpu.vector_store %arg16[%c0_168, %c0_169], %615 {strides = array<i32>} : memref<2x32xf32, #tpu.memory_space<vmem>>, vector<2x32xf32>,
    %c0_170 = arith.constant 0 : index
    %c0_171 = arith.constant 0 : index
    %617 = vector.load %arg3[%c0_170, %c0_171] : memref<2x32xf32, #tpu.memory_space<vmem>>, vector<2x32xf32>
    %618 = arith.addf %615, %617 : vector<2x32xf32>
    %c0_172 = arith.constant 0 : index
    %c0_173 = arith.constant 0 : index
    %619 = vector.load %arg9[%c0_172, %c0_173] : memref<32x128xf32, #tpu.memory_space<vmem>>, vector<32x128xf32>
    %cst_174 = arith.constant dense<0.000000e+00> : vector<2x128xf32>
    %620 = tpu.matmul %618, %619, %cst_174 {dimension_numbers = #tpu.dot_dimension_numbers<[1], [0], [0], [1], [0, 0, 1, 1], [], []>} : vector<2x32xf32>, vector<32x128xf32>, vector<2x128xf32> -> vector<2x128xf32>
    %cst_175 = arith.constant 0.000000e+00 : f32
    %621 = vector.broadcast %cst_175 : f32 to vector<2x32xf32>
    %cst_176 = arith.constant 0.000000e+00 : f32
    %622 = vector.broadcast %cst_176 : f32 to vector<2x32xf32>
    %cst_177 = arith.constant 0.000000e+00 : f32
    %623 = vector.broadcast %cst_177 : f32 to vector<2x32xf32>
    %cst_178 = arith.constant 0.000000e+00 : f32
    %624 = vector.broadcast %cst_178 : f32 to vector<2x32xf32>
    %625 = vector.extract_strided_slice %0 {offsets = [0, 0], sizes = [2, 1], strides = [1, 1]} : vector<2x8xi32> to vector<2x1xi32>
    %626 = vector.broadcast %625 : vector<2x1xi32> to vector<2x4xi32>
    %627 = arith.cmpi eq, %626, %2 : vector<2x4xi32>
    %628 = arith.extui %627 : vector<2x4xi1> to vector<2x4xi32>
    %629 = arith.sitofp %628 : vector<2x4xi32> to vector<2x4xf32>
    %c0_179 = arith.constant 0 : index
    %c0_180 = arith.constant 0 : index
    %630 = vector.load %arg8[%c0_179, %c0_180] : memref<4x128xf32, #tpu.memory_space<vmem>>, vector<4x128xf32>
    %cst_181 = arith.constant dense<0.000000e+00> : vector<2x128xf32>
    %631 = tpu.matmul %629, %630, %cst_181 {dimension_numbers = #tpu.dot_dimension_numbers<[1], [0], [0], [1], [0, 0, 1, 1], [], []>} : vector<2x4xf32>, vector<4x128xf32>, vector<2x128xf32> -> vector<2x128xf32>
    %632 = arith.addf %620, %631 : vector<2x128xf32>
    %c0_182 = arith.constant 0 : index
    %c0_183 = arith.constant 0 : index
    %633 = vector.load %arg10[%c0_182, %c0_183] : memref<32x128xf32, #tpu.memory_space<vmem>>, vector<32x128xf32>
    %cst_184 = arith.constant dense<0.000000e+00> : vector<2x128xf32>
    %634 = tpu.matmul %621, %633, %cst_184 {dimension_numbers = #tpu.dot_dimension_numbers<[1], [0], [0], [1], [0, 0, 1, 1], [], []>} : vector<2x32xf32>, vector<32x128xf32>, vector<2x128xf32> -> vector<2x128xf32>
    %635 = arith.addf %632, %634 : vector<2x128xf32>
    %c0_185 = arith.constant 0 : index
    %c0_186 = arith.constant 0 : index
    %636 = vector.load %arg12[%c0_185, %c0_186] : memref<2x128xf32, #tpu.memory_space<vmem>>, vector<1x128xf32>
    %637 = vector.broadcast %636 : vector<1x128xf32> to vector<2x128xf32>
    %638 = arith.addf %635, %637 : vector<2x128xf32>
    %639 = vector.extract_strided_slice %638 {offsets = [0, 0], sizes = [2, 32], strides = [1, 1]} : vector<2x128xf32> to vector<2x32xf32>
    %640 = arith.negf %639 : vector<2x32xf32>
    %641 = math.exp %640 : vector<2x32xf32>
    %cst_187 = arith.constant 1.000000e+00 : f32
    %642 = vector.broadcast %cst_187 : f32 to vector<2x32xf32>
    %643 = arith.addf %642, %641 : vector<2x32xf32>
    %644 = arith.divf %642, %643 : vector<2x32xf32>
    %645 = vector.extract_strided_slice %638 {offsets = [0, 32], sizes = [2, 32], strides = [1, 1]} : vector<2x128xf32> to vector<2x32xf32>
    %646 = arith.negf %645 : vector<2x32xf32>
    %647 = math.exp %646 : vector<2x32xf32>
    %cst_188 = arith.constant 1.000000e+00 : f32
    %648 = vector.broadcast %cst_188 : f32 to vector<2x32xf32>
    %649 = arith.addf %648, %647 : vector<2x32xf32>
    %650 = arith.divf %648, %649 : vector<2x32xf32>
    %651 = vector.extract_strided_slice %638 {offsets = [0, 64], sizes = [2, 32], strides = [1, 1]} : vector<2x128xf32> to vector<2x32xf32>
    %652 = math.tanh %651 : vector<2x32xf32>
    %653 = vector.extract_strided_slice %638 {offsets = [0, 96], sizes = [2, 32], strides = [1, 1]} : vector<2x128xf32> to vector<2x32xf32>
    %654 = arith.negf %653 : vector<2x32xf32>
    %655 = math.exp %654 : vector<2x32xf32>
    %cst_189 = arith.constant 1.000000e+00 : f32
    %656 = vector.broadcast %cst_189 : f32 to vector<2x32xf32>
    %657 = arith.addf %656, %655 : vector<2x32xf32>
    %658 = arith.divf %656, %657 : vector<2x32xf32>
    %659 = arith.mulf %650, %623 : vector<2x32xf32>
    %660 = arith.mulf %644, %652 : vector<2x32xf32>
    %661 = arith.addf %659, %660 : vector<2x32xf32>
    %662 = math.tanh %661 : vector<2x32xf32>
    %663 = arith.mulf %658, %662 : vector<2x32xf32>
    %664 = tpu.concatenate %663, %622 in 1 : vector<2x32xf32>, vector<2x32xf32> -> vector<2x64xf32>
    %c1_190 = arith.constant 1 : index
    %c0_191 = arith.constant 0 : index
    %c0_192 = arith.constant 0 : index
    %665 = vector.load %arg11[%c1_190, %c0_191, %c0_192] : memref<2x64x128xf32, #tpu.memory_space<vmem>>, vector<1x64x128xf32>
    %666 = vector.shape_cast %665 : vector<1x64x128xf32> to vector<64x128xf32>
    %cst_193 = arith.constant dense<0.000000e+00> : vector<2x128xf32>
    %667 = tpu.matmul %664, %666, %cst_193 {dimension_numbers = #tpu.dot_dimension_numbers<[1], [0], [0], [1], [0, 0, 1, 1], [], []>} : vector<2x64xf32>, vector<64x128xf32>, vector<2x128xf32> -> vector<2x128xf32>
    %c1_194 = arith.constant 1 : index
    %c0_195 = arith.constant 0 : index
    %668 = vector.load %arg12[%c1_194, %c0_195] : memref<2x128xf32, #tpu.memory_space<vmem>>, vector<1x128xf32>
    %669 = vector.broadcast %668 : vector<1x128xf32> to vector<2x128xf32>
    %670 = arith.addf %667, %669 : vector<2x128xf32>
    %671 = vector.extract_strided_slice %670 {offsets = [0, 0], sizes = [2, 32], strides = [1, 1]} : vector<2x128xf32> to vector<2x32xf32>
    %672 = arith.negf %671 : vector<2x32xf32>
    %673 = math.exp %672 : vector<2x32xf32>
    %cst_196 = arith.constant 1.000000e+00 : f32
    %674 = vector.broadcast %cst_196 : f32 to vector<2x32xf32>
    %675 = arith.addf %674, %673 : vector<2x32xf32>
    %676 = arith.divf %674, %675 : vector<2x32xf32>
    %677 = vector.extract_strided_slice %670 {offsets = [0, 32], sizes = [2, 32], strides = [1, 1]} : vector<2x128xf32> to vector<2x32xf32>
    %678 = arith.negf %677 : vector<2x32xf32>
    %679 = math.exp %678 : vector<2x32xf32>
    %cst_197 = arith.constant 1.000000e+00 : f32
    %680 = vector.broadcast %cst_197 : f32 to vector<2x32xf32>
    %681 = arith.addf %680, %679 : vector<2x32xf32>
    %682 = arith.divf %680, %681 : vector<2x32xf32>
    %683 = vector.extract_strided_slice %670 {offsets = [0, 64], sizes = [2, 32], strides = [1, 1]} : vector<2x128xf32> to vector<2x32xf32>
    %684 = math.tanh %683 : vector<2x32xf32>
    %685 = vector.extract_strided_slice %670 {offsets = [0, 96], sizes = [2, 32], strides = [1, 1]} : vector<2x128xf32> to vector<2x32xf32>
    %686 = arith.negf %685 : vector<2x32xf32>
    %687 = math.exp %686 : vector<2x32xf32>
    %cst_198 = arith.constant 1.000000e+00 : f32
    %688 = vector.broadcast %cst_198 : f32 to vector<2x32xf32>
    %689 = arith.addf %688, %687 : vector<2x32xf32>
    %690 = arith.divf %688, %689 : vector<2x32xf32>
    %691 = arith.mulf %682, %624 : vector<2x32xf32>
    %692 = arith.mulf %676, %684 : vector<2x32xf32>
    %693 = arith.addf %691, %692 : vector<2x32xf32>
    %694 = math.tanh %693 : vector<2x32xf32>
    %695 = arith.mulf %690, %694 : vector<2x32xf32>
    %c0_199 = arith.constant 0 : index
    %c0_200 = arith.constant 0 : index
    %696 = vector.load %arg17[%c0_199, %c0_200] : memref<16x32xf32, #tpu.memory_space<vmem>>, vector<2x32xf32>
    tpu.vector_store %arg17[%c0_199, %c0_200], %695 {strides = array<i32>} : memref<16x32xf32, #tpu.memory_space<vmem>>, vector<2x32xf32>,
    %697 = vector.extract_strided_slice %0 {offsets = [0, 1], sizes = [2, 1], strides = [1, 1]} : vector<2x8xi32> to vector<2x1xi32>
    %698 = vector.broadcast %697 : vector<2x1xi32> to vector<2x4xi32>
    %699 = arith.cmpi eq, %698, %2 : vector<2x4xi32>
    %700 = arith.extui %699 : vector<2x4xi1> to vector<2x4xi32>
    %701 = arith.sitofp %700 : vector<2x4xi32> to vector<2x4xf32>
    %c0_201 = arith.constant 0 : index
    %c0_202 = arith.constant 0 : index
    %702 = vector.load %arg8[%c0_201, %c0_202] : memref<4x128xf32, #tpu.memory_space<vmem>>, vector<4x128xf32>
    %cst_203 = arith.constant dense<0.000000e+00> : vector<2x128xf32>
    %703 = tpu.matmul %701, %702, %cst_203 {dimension_numbers = #tpu.dot_dimension_numbers<[1], [0], [0], [1], [0, 0, 1, 1], [], []>} : vector<2x4xf32>, vector<4x128xf32>, vector<2x128xf32> -> vector<2x128xf32>
    %704 = arith.addf %620, %703 : vector<2x128xf32>
    %c0_204 = arith.constant 0 : index
    %c0_205 = arith.constant 0 : index
    %705 = vector.load %arg10[%c0_204, %c0_205] : memref<32x128xf32, #tpu.memory_space<vmem>>, vector<32x128xf32>
    %cst_206 = arith.constant dense<0.000000e+00> : vector<2x128xf32>
    %706 = tpu.matmul %663, %705, %cst_206 {dimension_numbers = #tpu.dot_dimension_numbers<[1], [0], [0], [1], [0, 0, 1, 1], [], []>} : vector<2x32xf32>, vector<32x128xf32>, vector<2x128xf32> -> vector<2x128xf32>
    %707 = arith.addf %704, %706 : vector<2x128xf32>
    %c0_207 = arith.constant 0 : index
    %c0_208 = arith.constant 0 : index
    %708 = vector.load %arg12[%c0_207, %c0_208] : memref<2x128xf32, #tpu.memory_space<vmem>>, vector<1x128xf32>
    %709 = vector.broadcast %708 : vector<1x128xf32> to vector<2x128xf32>
    %710 = arith.addf %707, %709 : vector<2x128xf32>
    %711 = vector.extract_strided_slice %710 {offsets = [0, 0], sizes = [2, 32], strides = [1, 1]} : vector<2x128xf32> to vector<2x32xf32>
    %712 = arith.negf %711 : vector<2x32xf32>
    %713 = math.exp %712 : vector<2x32xf32>
    %cst_209 = arith.constant 1.000000e+00 : f32
    %714 = vector.broadcast %cst_209 : f32 to vector<2x32xf32>
    %715 = arith.addf %714, %713 : vector<2x32xf32>
    %716 = arith.divf %714, %715 : vector<2x32xf32>
    %717 = vector.extract_strided_slice %710 {offsets = [0, 32], sizes = [2, 32], strides = [1, 1]} : vector<2x128xf32> to vector<2x32xf32>
    %718 = arith.negf %717 : vector<2x32xf32>
    %719 = math.exp %718 : vector<2x32xf32>
    %cst_210 = arith.constant 1.000000e+00 : f32
    %720 = vector.broadcast %cst_210 : f32 to vector<2x32xf32>
    %721 = arith.addf %720, %719 : vector<2x32xf32>
    %722 = arith.divf %720, %721 : vector<2x32xf32>
    %723 = vector.extract_strided_slice %710 {offsets = [0, 64], sizes = [2, 32], strides = [1, 1]} : vector<2x128xf32> to vector<2x32xf32>
    %724 = math.tanh %723 : vector<2x32xf32>
    %725 = vector.extract_strided_slice %710 {offsets = [0, 96], sizes = [2, 32], strides = [1, 1]} : vector<2x128xf32> to vector<2x32xf32>
    %726 = arith.negf %725 : vector<2x32xf32>
    %727 = math.exp %726 : vector<2x32xf32>
    %cst_211 = arith.constant 1.000000e+00 : f32
    %728 = vector.broadcast %cst_211 : f32 to vector<2x32xf32>
    %729 = arith.addf %728, %727 : vector<2x32xf32>
    %730 = arith.divf %728, %729 : vector<2x32xf32>
    %731 = arith.mulf %722, %661 : vector<2x32xf32>
    %732 = arith.mulf %716, %724 : vector<2x32xf32>
    %733 = arith.addf %731, %732 : vector<2x32xf32>
    %734 = math.tanh %733 : vector<2x32xf32>
    %735 = arith.mulf %730, %734 : vector<2x32xf32>
    %736 = tpu.concatenate %735, %695 in 1 : vector<2x32xf32>, vector<2x32xf32> -> vector<2x64xf32>
    %c1_212 = arith.constant 1 : index
    %c0_213 = arith.constant 0 : index
    %c0_214 = arith.constant 0 : index
    %737 = vector.load %arg11[%c1_212, %c0_213, %c0_214] : memref<2x64x128xf32, #tpu.memory_space<vmem>>, vector<1x64x128xf32>
    %738 = vector.shape_cast %737 : vector<1x64x128xf32> to vector<64x128xf32>
    %cst_215 = arith.constant dense<0.000000e+00> : vector<2x128xf32>
    %739 = tpu.matmul %736, %738, %cst_215 {dimension_numbers = #tpu.dot_dimension_numbers<[1], [0], [0], [1], [0, 0, 1, 1], [], []>} : vector<2x64xf32>, vector<64x128xf32>, vector<2x128xf32> -> vector<2x128xf32>
    %c1_216 = arith.constant 1 : index
    %c0_217 = arith.constant 0 : index
    %740 = vector.load %arg12[%c1_216, %c0_217] : memref<2x128xf32, #tpu.memory_space<vmem>>, vector<1x128xf32>
    %741 = vector.broadcast %740 : vector<1x128xf32> to vector<2x128xf32>
    %742 = arith.addf %739, %741 : vector<2x128xf32>
    %743 = vector.extract_strided_slice %742 {offsets = [0, 0], sizes = [2, 32], strides = [1, 1]} : vector<2x128xf32> to vector<2x32xf32>
    %744 = arith.negf %743 : vector<2x32xf32>
    %745 = math.exp %744 : vector<2x32xf32>
    %cst_218 = arith.constant 1.000000e+00 : f32
    %746 = vector.broadcast %cst_218 : f32 to vector<2x32xf32>
    %747 = arith.addf %746, %745 : vector<2x32xf32>
    %748 = arith.divf %746, %747 : vector<2x32xf32>
    %749 = vector.extract_strided_slice %742 {offsets = [0, 32], sizes = [2, 32], strides = [1, 1]} : vector<2x128xf32> to vector<2x32xf32>
    %750 = arith.negf %749 : vector<2x32xf32>
    %751 = math.exp %750 : vector<2x32xf32>
    %cst_219 = arith.constant 1.000000e+00 : f32
    %752 = vector.broadcast %cst_219 : f32 to vector<2x32xf32>
    %753 = arith.addf %752, %751 : vector<2x32xf32>
    %754 = arith.divf %752, %753 : vector<2x32xf32>
    %755 = vector.extract_strided_slice %742 {offsets = [0, 64], sizes = [2, 32], strides = [1, 1]} : vector<2x128xf32> to vector<2x32xf32>
    %756 = math.tanh %755 : vector<2x32xf32>
    %757 = vector.extract_strided_slice %742 {offsets = [0, 96], sizes = [2, 32], strides = [1, 1]} : vector<2x128xf32> to vector<2x32xf32>
    %758 = arith.negf %757 : vector<2x32xf32>
    %759 = math.exp %758 : vector<2x32xf32>
    %cst_220 = arith.constant 1.000000e+00 : f32
    %760 = vector.broadcast %cst_220 : f32 to vector<2x32xf32>
    %761 = arith.addf %760, %759 : vector<2x32xf32>
    %762 = arith.divf %760, %761 : vector<2x32xf32>
    %763 = arith.mulf %754, %693 : vector<2x32xf32>
    %764 = arith.mulf %748, %756 : vector<2x32xf32>
    %765 = arith.addf %763, %764 : vector<2x32xf32>
    %766 = math.tanh %765 : vector<2x32xf32>
    %767 = arith.mulf %762, %766 : vector<2x32xf32>
    %c2 = arith.constant 2 : index
    %c0_221 = arith.constant 0 : index
    %768 = vector.load %arg17[%c2, %c0_221] : memref<16x32xf32, #tpu.memory_space<vmem>>, vector<2x32xf32>
    tpu.vector_store %arg17[%c2, %c0_221], %767 {strides = array<i32>} : memref<16x32xf32, #tpu.memory_space<vmem>>, vector<2x32xf32>,
    %769 = vector.extract_strided_slice %0 {offsets = [0, 2], sizes = [2, 1], strides = [1, 1]} : vector<2x8xi32> to vector<2x1xi32>
    %770 = vector.broadcast %769 : vector<2x1xi32> to vector<2x4xi32>
    %771 = arith.cmpi eq, %770, %2 : vector<2x4xi32>
    %772 = arith.extui %771 : vector<2x4xi1> to vector<2x4xi32>
    %773 = arith.sitofp %772 : vector<2x4xi32> to vector<2x4xf32>
    %c0_222 = arith.constant 0 : index
    %c0_223 = arith.constant 0 : index
    %774 = vector.load %arg8[%c0_222, %c0_223] : memref<4x128xf32, #tpu.memory_space<vmem>>, vector<4x128xf32>
    %cst_224 = arith.constant dense<0.000000e+00> : vector<2x128xf32>
    %775 = tpu.matmul %773, %774, %cst_224 {dimension_numbers = #tpu.dot_dimension_numbers<[1], [0], [0], [1], [0, 0, 1, 1], [], []>} : vector<2x4xf32>, vector<4x128xf32>, vector<2x128xf32> -> vector<2x128xf32>
    %776 = arith.addf %620, %775 : vector<2x128xf32>
    %c0_225 = arith.constant 0 : index
    %c0_226 = arith.constant 0 : index
    %777 = vector.load %arg10[%c0_225, %c0_226] : memref<32x128xf32, #tpu.memory_space<vmem>>, vector<32x128xf32>
    %cst_227 = arith.constant dense<0.000000e+00> : vector<2x128xf32>
    %778 = tpu.matmul %735, %777, %cst_227 {dimension_numbers = #tpu.dot_dimension_numbers<[1], [0], [0], [1], [0, 0, 1, 1], [], []>} : vector<2x32xf32>, vector<32x128xf32>, vector<2x128xf32> -> vector<2x128xf32>
    %779 = arith.addf %776, %778 : vector<2x128xf32>
    %c0_228 = arith.constant 0 : index
    %c0_229 = arith.constant 0 : index
    %780 = vector.load %arg12[%c0_228, %c0_229] : memref<2x128xf32, #tpu.memory_space<vmem>>, vector<1x128xf32>
    %781 = vector.broadcast %780 : vector<1x128xf32> to vector<2x128xf32>
    %782 = arith.addf %779, %781 : vector<2x128xf32>
    %783 = vector.extract_strided_slice %782 {offsets = [0, 0], sizes = [2, 32], strides = [1, 1]} : vector<2x128xf32> to vector<2x32xf32>
    %784 = arith.negf %783 : vector<2x32xf32>
    %785 = math.exp %784 : vector<2x32xf32>
    %cst_230 = arith.constant 1.000000e+00 : f32
    %786 = vector.broadcast %cst_230 : f32 to vector<2x32xf32>
    %787 = arith.addf %786, %785 : vector<2x32xf32>
    %788 = arith.divf %786, %787 : vector<2x32xf32>
    %789 = vector.extract_strided_slice %782 {offsets = [0, 32], sizes = [2, 32], strides = [1, 1]} : vector<2x128xf32> to vector<2x32xf32>
    %790 = arith.negf %789 : vector<2x32xf32>
    %791 = math.exp %790 : vector<2x32xf32>
    %cst_231 = arith.constant 1.000000e+00 : f32
    %792 = vector.broadcast %cst_231 : f32 to vector<2x32xf32>
    %793 = arith.addf %792, %791 : vector<2x32xf32>
    %794 = arith.divf %792, %793 : vector<2x32xf32>
    %795 = vector.extract_strided_slice %782 {offsets = [0, 64], sizes = [2, 32], strides = [1, 1]} : vector<2x128xf32> to vector<2x32xf32>
    %796 = math.tanh %795 : vector<2x32xf32>
    %797 = vector.extract_strided_slice %782 {offsets = [0, 96], sizes = [2, 32], strides = [1, 1]} : vector<2x128xf32> to vector<2x32xf32>
    %798 = arith.negf %797 : vector<2x32xf32>
    %799 = math.exp %798 : vector<2x32xf32>
    %cst_232 = arith.constant 1.000000e+00 : f32
    %800 = vector.broadcast %cst_232 : f32 to vector<2x32xf32>
    %801 = arith.addf %800, %799 : vector<2x32xf32>
    %802 = arith.divf %800, %801 : vector<2x32xf32>
    %803 = arith.mulf %794, %733 : vector<2x32xf32>
    %804 = arith.mulf %788, %796 : vector<2x32xf32>
    %805 = arith.addf %803, %804 : vector<2x32xf32>
    %806 = math.tanh %805 : vector<2x32xf32>
    %807 = arith.mulf %802, %806 : vector<2x32xf32>
    %808 = tpu.concatenate %807, %767 in 1 : vector<2x32xf32>, vector<2x32xf32> -> vector<2x64xf32>
    %c1_233 = arith.constant 1 : index
    %c0_234 = arith.constant 0 : index
    %c0_235 = arith.constant 0 : index
    %809 = vector.load %arg11[%c1_233, %c0_234, %c0_235] : memref<2x64x128xf32, #tpu.memory_space<vmem>>, vector<1x64x128xf32>
    %810 = vector.shape_cast %809 : vector<1x64x128xf32> to vector<64x128xf32>
    %cst_236 = arith.constant dense<0.000000e+00> : vector<2x128xf32>
    %811 = tpu.matmul %808, %810, %cst_236 {dimension_numbers = #tpu.dot_dimension_numbers<[1], [0], [0], [1], [0, 0, 1, 1], [], []>} : vector<2x64xf32>, vector<64x128xf32>, vector<2x128xf32> -> vector<2x128xf32>
    %c1_237 = arith.constant 1 : index
    %c0_238 = arith.constant 0 : index
    %812 = vector.load %arg12[%c1_237, %c0_238] : memref<2x128xf32, #tpu.memory_space<vmem>>, vector<1x128xf32>
    %813 = vector.broadcast %812 : vector<1x128xf32> to vector<2x128xf32>
    %814 = arith.addf %811, %813 : vector<2x128xf32>
    %815 = vector.extract_strided_slice %814 {offsets = [0, 0], sizes = [2, 32], strides = [1, 1]} : vector<2x128xf32> to vector<2x32xf32>
    %816 = arith.negf %815 : vector<2x32xf32>
    %817 = math.exp %816 : vector<2x32xf32>
    %cst_239 = arith.constant 1.000000e+00 : f32
    %818 = vector.broadcast %cst_239 : f32 to vector<2x32xf32>
    %819 = arith.addf %818, %817 : vector<2x32xf32>
    %820 = arith.divf %818, %819 : vector<2x32xf32>
    %821 = vector.extract_strided_slice %814 {offsets = [0, 32], sizes = [2, 32], strides = [1, 1]} : vector<2x128xf32> to vector<2x32xf32>
    %822 = arith.negf %821 : vector<2x32xf32>
    %823 = math.exp %822 : vector<2x32xf32>
    %cst_240 = arith.constant 1.000000e+00 : f32
    %824 = vector.broadcast %cst_240 : f32 to vector<2x32xf32>
    %825 = arith.addf %824, %823 : vector<2x32xf32>
    %826 = arith.divf %824, %825 : vector<2x32xf32>
    %827 = vector.extract_strided_slice %814 {offsets = [0, 64], sizes = [2, 32], strides = [1, 1]} : vector<2x128xf32> to vector<2x32xf32>
    %828 = math.tanh %827 : vector<2x32xf32>
    %829 = vector.extract_strided_slice %814 {offsets = [0, 96], sizes = [2, 32], strides = [1, 1]} : vector<2x128xf32> to vector<2x32xf32>
    %830 = arith.negf %829 : vector<2x32xf32>
    %831 = math.exp %830 : vector<2x32xf32>
    %cst_241 = arith.constant 1.000000e+00 : f32
    %832 = vector.broadcast %cst_241 : f32 to vector<2x32xf32>
    %833 = arith.addf %832, %831 : vector<2x32xf32>
    %834 = arith.divf %832, %833 : vector<2x32xf32>
    %835 = arith.mulf %826, %765 : vector<2x32xf32>
    %836 = arith.mulf %820, %828 : vector<2x32xf32>
    %837 = arith.addf %835, %836 : vector<2x32xf32>
    %838 = math.tanh %837 : vector<2x32xf32>
    %839 = arith.mulf %834, %838 : vector<2x32xf32>
    %c4 = arith.constant 4 : index
    %c0_242 = arith.constant 0 : index
    %840 = vector.load %arg17[%c4, %c0_242] : memref<16x32xf32, #tpu.memory_space<vmem>>, vector<2x32xf32>
    tpu.vector_store %arg17[%c4, %c0_242], %839 {strides = array<i32>} : memref<16x32xf32, #tpu.memory_space<vmem>>, vector<2x32xf32>,
    %841 = vector.extract_strided_slice %0 {offsets = [0, 3], sizes = [2, 1], strides = [1, 1]} : vector<2x8xi32> to vector<2x1xi32>
    %842 = vector.broadcast %841 : vector<2x1xi32> to vector<2x4xi32>
    %843 = arith.cmpi eq, %842, %2 : vector<2x4xi32>
    %844 = arith.extui %843 : vector<2x4xi1> to vector<2x4xi32>
    %845 = arith.sitofp %844 : vector<2x4xi32> to vector<2x4xf32>
    %c0_243 = arith.constant 0 : index
    %c0_244 = arith.constant 0 : index
    %846 = vector.load %arg8[%c0_243, %c0_244] : memref<4x128xf32, #tpu.memory_space<vmem>>, vector<4x128xf32>
    %cst_245 = arith.constant dense<0.000000e+00> : vector<2x128xf32>
    %847 = tpu.matmul %845, %846, %cst_245 {dimension_numbers = #tpu.dot_dimension_numbers<[1], [0], [0], [1], [0, 0, 1, 1], [], []>} : vector<2x4xf32>, vector<4x128xf32>, vector<2x128xf32> -> vector<2x128xf32>
    %848 = arith.addf %620, %847 : vector<2x128xf32>
    %c0_246 = arith.constant 0 : index
    %c0_247 = arith.constant 0 : index
    %849 = vector.load %arg10[%c0_246, %c0_247] : memref<32x128xf32, #tpu.memory_space<vmem>>, vector<32x128xf32>
    %cst_248 = arith.constant dense<0.000000e+00> : vector<2x128xf32>
    %850 = tpu.matmul %807, %849, %cst_248 {dimension_numbers = #tpu.dot_dimension_numbers<[1], [0], [0], [1], [0, 0, 1, 1], [], []>} : vector<2x32xf32>, vector<32x128xf32>, vector<2x128xf32> -> vector<2x128xf32>
    %851 = arith.addf %848, %850 : vector<2x128xf32>
    %c0_249 = arith.constant 0 : index
    %c0_250 = arith.constant 0 : index
    %852 = vector.load %arg12[%c0_249, %c0_250] : memref<2x128xf32, #tpu.memory_space<vmem>>, vector<1x128xf32>
    %853 = vector.broadcast %852 : vector<1x128xf32> to vector<2x128xf32>
    %854 = arith.addf %851, %853 : vector<2x128xf32>
    %855 = vector.extract_strided_slice %854 {offsets = [0, 0], sizes = [2, 32], strides = [1, 1]} : vector<2x128xf32> to vector<2x32xf32>
    %856 = arith.negf %855 : vector<2x32xf32>
    %857 = math.exp %856 : vector<2x32xf32>
    %cst_251 = arith.constant 1.000000e+00 : f32
    %858 = vector.broadcast %cst_251 : f32 to vector<2x32xf32>
    %859 = arith.addf %858, %857 : vector<2x32xf32>
    %860 = arith.divf %858, %859 : vector<2x32xf32>
    %861 = vector.extract_strided_slice %854 {offsets = [0, 32], sizes = [2, 32], strides = [1, 1]} : vector<2x128xf32> to vector<2x32xf32>
    %862 = arith.negf %861 : vector<2x32xf32>
    %863 = math.exp %862 : vector<2x32xf32>
    %cst_252 = arith.constant 1.000000e+00 : f32
    %864 = vector.broadcast %cst_252 : f32 to vector<2x32xf32>
    %865 = arith.addf %864, %863 : vector<2x32xf32>
    %866 = arith.divf %864, %865 : vector<2x32xf32>
    %867 = vector.extract_strided_slice %854 {offsets = [0, 64], sizes = [2, 32], strides = [1, 1]} : vector<2x128xf32> to vector<2x32xf32>
    %868 = math.tanh %867 : vector<2x32xf32>
    %869 = vector.extract_strided_slice %854 {offsets = [0, 96], sizes = [2, 32], strides = [1, 1]} : vector<2x128xf32> to vector<2x32xf32>
    %870 = arith.negf %869 : vector<2x32xf32>
    %871 = math.exp %870 : vector<2x32xf32>
    %cst_253 = arith.constant 1.000000e+00 : f32
    %872 = vector.broadcast %cst_253 : f32 to vector<2x32xf32>
    %873 = arith.addf %872, %871 : vector<2x32xf32>
    %874 = arith.divf %872, %873 : vector<2x32xf32>
    %875 = arith.mulf %866, %805 : vector<2x32xf32>
    %876 = arith.mulf %860, %868 : vector<2x32xf32>
    %877 = arith.addf %875, %876 : vector<2x32xf32>
    %878 = math.tanh %877 : vector<2x32xf32>
    %879 = arith.mulf %874, %878 : vector<2x32xf32>
    %880 = tpu.concatenate %879, %839 in 1 : vector<2x32xf32>, vector<2x32xf32> -> vector<2x64xf32>
    %c1_254 = arith.constant 1 : index
    %c0_255 = arith.constant 0 : index
    %c0_256 = arith.constant 0 : index
    %881 = vector.load %arg11[%c1_254, %c0_255, %c0_256] : memref<2x64x128xf32, #tpu.memory_space<vmem>>, vector<1x64x128xf32>
    %882 = vector.shape_cast %881 : vector<1x64x128xf32> to vector<64x128xf32>
    %cst_257 = arith.constant dense<0.000000e+00> : vector<2x128xf32>
    %883 = tpu.matmul %880, %882, %cst_257 {dimension_numbers = #tpu.dot_dimension_numbers<[1], [0], [0], [1], [0, 0, 1, 1], [], []>} : vector<2x64xf32>, vector<64x128xf32>, vector<2x128xf32> -> vector<2x128xf32>
    %c1_258 = arith.constant 1 : index
    %c0_259 = arith.constant 0 : index
    %884 = vector.load %arg12[%c1_258, %c0_259] : memref<2x128xf32, #tpu.memory_space<vmem>>, vector<1x128xf32>
    %885 = vector.broadcast %884 : vector<1x128xf32> to vector<2x128xf32>
    %886 = arith.addf %883, %885 : vector<2x128xf32>
    %887 = vector.extract_strided_slice %886 {offsets = [0, 0], sizes = [2, 32], strides = [1, 1]} : vector<2x128xf32> to vector<2x32xf32>
    %888 = arith.negf %887 : vector<2x32xf32>
    %889 = math.exp %888 : vector<2x32xf32>
    %cst_260 = arith.constant 1.000000e+00 : f32
    %890 = vector.broadcast %cst_260 : f32 to vector<2x32xf32>
    %891 = arith.addf %890, %889 : vector<2x32xf32>
    %892 = arith.divf %890, %891 : vector<2x32xf32>
    %893 = vector.extract_strided_slice %886 {offsets = [0, 32], sizes = [2, 32], strides = [1, 1]} : vector<2x128xf32> to vector<2x32xf32>
    %894 = arith.negf %893 : vector<2x32xf32>
    %895 = math.exp %894 : vector<2x32xf32>
    %cst_261 = arith.constant 1.000000e+00 : f32
    %896 = vector.broadcast %cst_261 : f32 to vector<2x32xf32>
    %897 = arith.addf %896, %895 : vector<2x32xf32>
    %898 = arith.divf %896, %897 : vector<2x32xf32>
    %899 = vector.extract_strided_slice %886 {offsets = [0, 64], sizes = [2, 32], strides = [1, 1]} : vector<2x128xf32> to vector<2x32xf32>
    %900 = math.tanh %899 : vector<2x32xf32>
    %901 = vector.extract_strided_slice %886 {offsets = [0, 96], sizes = [2, 32], strides = [1, 1]} : vector<2x128xf32> to vector<2x32xf32>
    %902 = arith.negf %901 : vector<2x32xf32>
    %903 = math.exp %902 : vector<2x32xf32>
    %cst_262 = arith.constant 1.000000e+00 : f32
    %904 = vector.broadcast %cst_262 : f32 to vector<2x32xf32>
    %905 = arith.addf %904, %903 : vector<2x32xf32>
    %906 = arith.divf %904, %905 : vector<2x32xf32>
    %907 = arith.mulf %898, %837 : vector<2x32xf32>
    %908 = arith.mulf %892, %900 : vector<2x32xf32>
    %909 = arith.addf %907, %908 : vector<2x32xf32>
    %910 = math.tanh %909 : vector<2x32xf32>
    %911 = arith.mulf %906, %910 : vector<2x32xf32>
    %c6 = arith.constant 6 : index
    %c0_263 = arith.constant 0 : index
    %912 = vector.load %arg17[%c6, %c0_263] : memref<16x32xf32, #tpu.memory_space<vmem>>, vector<2x32xf32>
    tpu.vector_store %arg17[%c6, %c0_263], %911 {strides = array<i32>} : memref<16x32xf32, #tpu.memory_space<vmem>>, vector<2x32xf32>,
    %913 = vector.extract_strided_slice %0 {offsets = [0, 4], sizes = [2, 1], strides = [1, 1]} : vector<2x8xi32> to vector<2x1xi32>
    %914 = vector.broadcast %913 : vector<2x1xi32> to vector<2x4xi32>
    %915 = arith.cmpi eq, %914, %2 : vector<2x4xi32>
    %916 = arith.extui %915 : vector<2x4xi1> to vector<2x4xi32>
    %917 = arith.sitofp %916 : vector<2x4xi32> to vector<2x4xf32>
    %c0_264 = arith.constant 0 : index
    %c0_265 = arith.constant 0 : index
    %918 = vector.load %arg8[%c0_264, %c0_265] : memref<4x128xf32, #tpu.memory_space<vmem>>, vector<4x128xf32>
    %cst_266 = arith.constant dense<0.000000e+00> : vector<2x128xf32>
    %919 = tpu.matmul %917, %918, %cst_266 {dimension_numbers = #tpu.dot_dimension_numbers<[1], [0], [0], [1], [0, 0, 1, 1], [], []>} : vector<2x4xf32>, vector<4x128xf32>, vector<2x128xf32> -> vector<2x128xf32>
    %920 = arith.addf %620, %919 : vector<2x128xf32>
    %c0_267 = arith.constant 0 : index
    %c0_268 = arith.constant 0 : index
    %921 = vector.load %arg10[%c0_267, %c0_268] : memref<32x128xf32, #tpu.memory_space<vmem>>, vector<32x128xf32>
    %cst_269 = arith.constant dense<0.000000e+00> : vector<2x128xf32>
    %922 = tpu.matmul %879, %921, %cst_269 {dimension_numbers = #tpu.dot_dimension_numbers<[1], [0], [0], [1], [0, 0, 1, 1], [], []>} : vector<2x32xf32>, vector<32x128xf32>, vector<2x128xf32> -> vector<2x128xf32>
    %923 = arith.addf %920, %922 : vector<2x128xf32>
    %c0_270 = arith.constant 0 : index
    %c0_271 = arith.constant 0 : index
    %924 = vector.load %arg12[%c0_270, %c0_271] : memref<2x128xf32, #tpu.memory_space<vmem>>, vector<1x128xf32>
    %925 = vector.broadcast %924 : vector<1x128xf32> to vector<2x128xf32>
    %926 = arith.addf %923, %925 : vector<2x128xf32>
    %927 = vector.extract_strided_slice %926 {offsets = [0, 0], sizes = [2, 32], strides = [1, 1]} : vector<2x128xf32> to vector<2x32xf32>
    %928 = arith.negf %927 : vector<2x32xf32>
    %929 = math.exp %928 : vector<2x32xf32>
    %cst_272 = arith.constant 1.000000e+00 : f32
    %930 = vector.broadcast %cst_272 : f32 to vector<2x32xf32>
    %931 = arith.addf %930, %929 : vector<2x32xf32>
    %932 = arith.divf %930, %931 : vector<2x32xf32>
    %933 = vector.extract_strided_slice %926 {offsets = [0, 32], sizes = [2, 32], strides = [1, 1]} : vector<2x128xf32> to vector<2x32xf32>
    %934 = arith.negf %933 : vector<2x32xf32>
    %935 = math.exp %934 : vector<2x32xf32>
    %cst_273 = arith.constant 1.000000e+00 : f32
    %936 = vector.broadcast %cst_273 : f32 to vector<2x32xf32>
    %937 = arith.addf %936, %935 : vector<2x32xf32>
    %938 = arith.divf %936, %937 : vector<2x32xf32>
    %939 = vector.extract_strided_slice %926 {offsets = [0, 64], sizes = [2, 32], strides = [1, 1]} : vector<2x128xf32> to vector<2x32xf32>
    %940 = math.tanh %939 : vector<2x32xf32>
    %941 = vector.extract_strided_slice %926 {offsets = [0, 96], sizes = [2, 32], strides = [1, 1]} : vector<2x128xf32> to vector<2x32xf32>
    %942 = arith.negf %941 : vector<2x32xf32>
    %943 = math.exp %942 : vector<2x32xf32>
    %cst_274 = arith.constant 1.000000e+00 : f32
    %944 = vector.broadcast %cst_274 : f32 to vector<2x32xf32>
    %945 = arith.addf %944, %943 : vector<2x32xf32>
    %946 = arith.divf %944, %945 : vector<2x32xf32>
    %947 = arith.mulf %938, %877 : vector<2x32xf32>
    %948 = arith.mulf %932, %940 : vector<2x32xf32>
    %949 = arith.addf %947, %948 : vector<2x32xf32>
    %950 = math.tanh %949 : vector<2x32xf32>
    %951 = arith.mulf %946, %950 : vector<2x32xf32>
    %952 = tpu.concatenate %951, %911 in 1 : vector<2x32xf32>, vector<2x32xf32> -> vector<2x64xf32>
    %c1_275 = arith.constant 1 : index
    %c0_276 = arith.constant 0 : index
    %c0_277 = arith.constant 0 : index
    %953 = vector.load %arg11[%c1_275, %c0_276, %c0_277] : memref<2x64x128xf32, #tpu.memory_space<vmem>>, vector<1x64x128xf32>
    %954 = vector.shape_cast %953 : vector<1x64x128xf32> to vector<64x128xf32>
    %cst_278 = arith.constant dense<0.000000e+00> : vector<2x128xf32>
    %955 = tpu.matmul %952, %954, %cst_278 {dimension_numbers = #tpu.dot_dimension_numbers<[1], [0], [0], [1], [0, 0, 1, 1], [], []>} : vector<2x64xf32>, vector<64x128xf32>, vector<2x128xf32> -> vector<2x128xf32>
    %c1_279 = arith.constant 1 : index
    %c0_280 = arith.constant 0 : index
    %956 = vector.load %arg12[%c1_279, %c0_280] : memref<2x128xf32, #tpu.memory_space<vmem>>, vector<1x128xf32>
    %957 = vector.broadcast %956 : vector<1x128xf32> to vector<2x128xf32>
    %958 = arith.addf %955, %957 : vector<2x128xf32>
    %959 = vector.extract_strided_slice %958 {offsets = [0, 0], sizes = [2, 32], strides = [1, 1]} : vector<2x128xf32> to vector<2x32xf32>
    %960 = arith.negf %959 : vector<2x32xf32>
    %961 = math.exp %960 : vector<2x32xf32>
    %cst_281 = arith.constant 1.000000e+00 : f32
    %962 = vector.broadcast %cst_281 : f32 to vector<2x32xf32>
    %963 = arith.addf %962, %961 : vector<2x32xf32>
    %964 = arith.divf %962, %963 : vector<2x32xf32>
    %965 = vector.extract_strided_slice %958 {offsets = [0, 32], sizes = [2, 32], strides = [1, 1]} : vector<2x128xf32> to vector<2x32xf32>
    %966 = arith.negf %965 : vector<2x32xf32>
    %967 = math.exp %966 : vector<2x32xf32>
    %cst_282 = arith.constant 1.000000e+00 : f32
    %968 = vector.broadcast %cst_282 : f32 to vector<2x32xf32>
    %969 = arith.addf %968, %967 : vector<2x32xf32>
    %970 = arith.divf %968, %969 : vector<2x32xf32>
    %971 = vector.extract_strided_slice %958 {offsets = [0, 64], sizes = [2, 32], strides = [1, 1]} : vector<2x128xf32> to vector<2x32xf32>
    %972 = math.tanh %971 : vector<2x32xf32>
    %973 = vector.extract_strided_slice %958 {offsets = [0, 96], sizes = [2, 32], strides = [1, 1]} : vector<2x128xf32> to vector<2x32xf32>
    %974 = arith.negf %973 : vector<2x32xf32>
    %975 = math.exp %974 : vector<2x32xf32>
    %cst_283 = arith.constant 1.000000e+00 : f32
    %976 = vector.broadcast %cst_283 : f32 to vector<2x32xf32>
    %977 = arith.addf %976, %975 : vector<2x32xf32>
    %978 = arith.divf %976, %977 : vector<2x32xf32>
    %979 = arith.mulf %970, %909 : vector<2x32xf32>
    %980 = arith.mulf %964, %972 : vector<2x32xf32>
    %981 = arith.addf %979, %980 : vector<2x32xf32>
    %982 = math.tanh %981 : vector<2x32xf32>
    %983 = arith.mulf %978, %982 : vector<2x32xf32>
    %c8 = arith.constant 8 : index
    %c0_284 = arith.constant 0 : index
    %984 = vector.load %arg17[%c8, %c0_284] : memref<16x32xf32, #tpu.memory_space<vmem>>, vector<2x32xf32>
    tpu.vector_store %arg17[%c8, %c0_284], %983 {strides = array<i32>} : memref<16x32xf32, #tpu.memory_space<vmem>>, vector<2x32xf32>,
    %985 = vector.extract_strided_slice %0 {offsets = [0, 5], sizes = [2, 1], strides = [1, 1]} : vector<2x8xi32> to vector<2x1xi32>
    %986 = vector.broadcast %985 : vector<2x1xi32> to vector<2x4xi32>
    %987 = arith.cmpi eq, %986, %2 : vector<2x4xi32>
    %988 = arith.extui %987 : vector<2x4xi1> to vector<2x4xi32>
    %989 = arith.sitofp %988 : vector<2x4xi32> to vector<2x4xf32>
    %c0_285 = arith.constant 0 : index
    %c0_286 = arith.constant 0 : index
    %990 = vector.load %arg8[%c0_285, %c0_286] : memref<4x128xf32, #tpu.memory_space<vmem>>, vector<4x128xf32>
    %cst_287 = arith.constant dense<0.000000e+00> : vector<2x128xf32>
    %991 = tpu.matmul %989, %990, %cst_287 {dimension_numbers = #tpu.dot_dimension_numbers<[1], [0], [0], [1], [0, 0, 1, 1], [], []>} : vector<2x4xf32>, vector<4x128xf32>, vector<2x128xf32> -> vector<2x128xf32>
    %992 = arith.addf %620, %991 : vector<2x128xf32>
    %c0_288 = arith.constant 0 : index
    %c0_289 = arith.constant 0 : index
    %993 = vector.load %arg10[%c0_288, %c0_289] : memref<32x128xf32, #tpu.memory_space<vmem>>, vector<32x128xf32>
    %cst_290 = arith.constant dense<0.000000e+00> : vector<2x128xf32>
    %994 = tpu.matmul %951, %993, %cst_290 {dimension_numbers = #tpu.dot_dimension_numbers<[1], [0], [0], [1], [0, 0, 1, 1], [], []>} : vector<2x32xf32>, vector<32x128xf32>, vector<2x128xf32> -> vector<2x128xf32>
    %995 = arith.addf %992, %994 : vector<2x128xf32>
    %c0_291 = arith.constant 0 : index
    %c0_292 = arith.constant 0 : index
    %996 = vector.load %arg12[%c0_291, %c0_292] : memref<2x128xf32, #tpu.memory_space<vmem>>, vector<1x128xf32>
    %997 = vector.broadcast %996 : vector<1x128xf32> to vector<2x128xf32>
    %998 = arith.addf %995, %997 : vector<2x128xf32>
    %999 = vector.extract_strided_slice %998 {offsets = [0, 0], sizes = [2, 32], strides = [1, 1]} : vector<2x128xf32> to vector<2x32xf32>
    %1000 = arith.negf %999 : vector<2x32xf32>
    %1001 = math.exp %1000 : vector<2x32xf32>
    %cst_293 = arith.constant 1.000000e+00 : f32
    %1002 = vector.broadcast %cst_293 : f32 to vector<2x32xf32>
    %1003 = arith.addf %1002, %1001 : vector<2x32xf32>
    %1004 = arith.divf %1002, %1003 : vector<2x32xf32>
    %1005 = vector.extract_strided_slice %998 {offsets = [0, 32], sizes = [2, 32], strides = [1, 1]} : vector<2x128xf32> to vector<2x32xf32>
    %1006 = arith.negf %1005 : vector<2x32xf32>
    %1007 = math.exp %1006 : vector<2x32xf32>
    %cst_294 = arith.constant 1.000000e+00 : f32
    %1008 = vector.broadcast %cst_294 : f32 to vector<2x32xf32>
    %1009 = arith.addf %1008, %1007 : vector<2x32xf32>
    %1010 = arith.divf %1008, %1009 : vector<2x32xf32>
    %1011 = vector.extract_strided_slice %998 {offsets = [0, 64], sizes = [2, 32], strides = [1, 1]} : vector<2x128xf32> to vector<2x32xf32>
    %1012 = math.tanh %1011 : vector<2x32xf32>
    %1013 = vector.extract_strided_slice %998 {offsets = [0, 96], sizes = [2, 32], strides = [1, 1]} : vector<2x128xf32> to vector<2x32xf32>
    %1014 = arith.negf %1013 : vector<2x32xf32>
    %1015 = math.exp %1014 : vector<2x32xf32>
    %cst_295 = arith.constant 1.000000e+00 : f32
    %1016 = vector.broadcast %cst_295 : f32 to vector<2x32xf32>
    %1017 = arith.addf %1016, %1015 : vector<2x32xf32>
    %1018 = arith.divf %1016, %1017 : vector<2x32xf32>
    %1019 = arith.mulf %1010, %949 : vector<2x32xf32>
    %1020 = arith.mulf %1004, %1012 : vector<2x32xf32>
    %1021 = arith.addf %1019, %1020 : vector<2x32xf32>
    %1022 = math.tanh %1021 : vector<2x32xf32>
    %1023 = arith.mulf %1018, %1022 : vector<2x32xf32>
    %1024 = tpu.concatenate %1023, %983 in 1 : vector<2x32xf32>, vector<2x32xf32> -> vector<2x64xf32>
    %c1_296 = arith.constant 1 : index
    %c0_297 = arith.constant 0 : index
    %c0_298 = arith.constant 0 : index
    %1025 = vector.load %arg11[%c1_296, %c0_297, %c0_298] : memref<2x64x128xf32, #tpu.memory_space<vmem>>, vector<1x64x128xf32>
    %1026 = vector.shape_cast %1025 : vector<1x64x128xf32> to vector<64x128xf32>
    %cst_299 = arith.constant dense<0.000000e+00> : vector<2x128xf32>
    %1027 = tpu.matmul %1024, %1026, %cst_299 {dimension_numbers = #tpu.dot_dimension_numbers<[1], [0], [0], [1], [0, 0, 1, 1], [], []>} : vector<2x64xf32>, vector<64x128xf32>, vector<2x128xf32> -> vector<2x128xf32>
    %c1_300 = arith.constant 1 : index
    %c0_301 = arith.constant 0 : index
    %1028 = vector.load %arg12[%c1_300, %c0_301] : memref<2x128xf32, #tpu.memory_space<vmem>>, vector<1x128xf32>
    %1029 = vector.broadcast %1028 : vector<1x128xf32> to vector<2x128xf32>
    %1030 = arith.addf %1027, %1029 : vector<2x128xf32>
    %1031 = vector.extract_strided_slice %1030 {offsets = [0, 0], sizes = [2, 32], strides = [1, 1]} : vector<2x128xf32> to vector<2x32xf32>
    %1032 = arith.negf %1031 : vector<2x32xf32>
    %1033 = math.exp %1032 : vector<2x32xf32>
    %cst_302 = arith.constant 1.000000e+00 : f32
    %1034 = vector.broadcast %cst_302 : f32 to vector<2x32xf32>
    %1035 = arith.addf %1034, %1033 : vector<2x32xf32>
    %1036 = arith.divf %1034, %1035 : vector<2x32xf32>
    %1037 = vector.extract_strided_slice %1030 {offsets = [0, 32], sizes = [2, 32], strides = [1, 1]} : vector<2x128xf32> to vector<2x32xf32>
    %1038 = arith.negf %1037 : vector<2x32xf32>
    %1039 = math.exp %1038 : vector<2x32xf32>
    %cst_303 = arith.constant 1.000000e+00 : f32
    %1040 = vector.broadcast %cst_303 : f32 to vector<2x32xf32>
    %1041 = arith.addf %1040, %1039 : vector<2x32xf32>
    %1042 = arith.divf %1040, %1041 : vector<2x32xf32>
    %1043 = vector.extract_strided_slice %1030 {offsets = [0, 64], sizes = [2, 32], strides = [1, 1]} : vector<2x128xf32> to vector<2x32xf32>
    %1044 = math.tanh %1043 : vector<2x32xf32>
    %1045 = vector.extract_strided_slice %1030 {offsets = [0, 96], sizes = [2, 32], strides = [1, 1]} : vector<2x128xf32> to vector<2x32xf32>
    %1046 = arith.negf %1045 : vector<2x32xf32>
    %1047 = math.exp %1046 : vector<2x32xf32>
    %cst_304 = arith.constant 1.000000e+00 : f32
    %1048 = vector.broadcast %cst_304 : f32 to vector<2x32xf32>
    %1049 = arith.addf %1048, %1047 : vector<2x32xf32>
    %1050 = arith.divf %1048, %1049 : vector<2x32xf32>
    %1051 = arith.mulf %1042, %981 : vector<2x32xf32>
    %1052 = arith.mulf %1036, %1044 : vector<2x32xf32>
    %1053 = arith.addf %1051, %1052 : vector<2x32xf32>
    %1054 = math.tanh %1053 : vector<2x32xf32>
    %1055 = arith.mulf %1050, %1054 : vector<2x32xf32>
    %c10 = arith.constant 10 : index
    %c0_305 = arith.constant 0 : index
    %1056 = vector.load %arg17[%c10, %c0_305] : memref<16x32xf32, #tpu.memory_space<vmem>>, vector<2x32xf32>
    tpu.vector_store %arg17[%c10, %c0_305], %1055 {strides = array<i32>} : memref<16x32xf32, #tpu.memory_space<vmem>>, vector<2x32xf32>,
    %1057 = vector.extract_strided_slice %0 {offsets = [0, 6], sizes = [2, 1], strides = [1, 1]} : vector<2x8xi32> to vector<2x1xi32>
    %1058 = vector.broadcast %1057 : vector<2x1xi32> to vector<2x4xi32>
    %1059 = arith.cmpi eq, %1058, %2 : vector<2x4xi32>
    %1060 = arith.extui %1059 : vector<2x4xi1> to vector<2x4xi32>
    %1061 = arith.sitofp %1060 : vector<2x4xi32> to vector<2x4xf32>
    %c0_306 = arith.constant 0 : index
    %c0_307 = arith.constant 0 : index
    %1062 = vector.load %arg8[%c0_306, %c0_307] : memref<4x128xf32, #tpu.memory_space<vmem>>, vector<4x128xf32>
    %cst_308 = arith.constant dense<0.000000e+00> : vector<2x128xf32>
    %1063 = tpu.matmul %1061, %1062, %cst_308 {dimension_numbers = #tpu.dot_dimension_numbers<[1], [0], [0], [1], [0, 0, 1, 1], [], []>} : vector<2x4xf32>, vector<4x128xf32>, vector<2x128xf32> -> vector<2x128xf32>
    %1064 = arith.addf %620, %1063 : vector<2x128xf32>
    %c0_309 = arith.constant 0 : index
    %c0_310 = arith.constant 0 : index
    %1065 = vector.load %arg10[%c0_309, %c0_310] : memref<32x128xf32, #tpu.memory_space<vmem>>, vector<32x128xf32>
    %cst_311 = arith.constant dense<0.000000e+00> : vector<2x128xf32>
    %1066 = tpu.matmul %1023, %1065, %cst_311 {dimension_numbers = #tpu.dot_dimension_numbers<[1], [0], [0], [1], [0, 0, 1, 1], [], []>} : vector<2x32xf32>, vector<32x128xf32>, vector<2x128xf32> -> vector<2x128xf32>
    %1067 = arith.addf %1064, %1066 : vector<2x128xf32>
    %c0_312 = arith.constant 0 : index
    %c0_313 = arith.constant 0 : index
    %1068 = vector.load %arg12[%c0_312, %c0_313] : memref<2x128xf32, #tpu.memory_space<vmem>>, vector<1x128xf32>
    %1069 = vector.broadcast %1068 : vector<1x128xf32> to vector<2x128xf32>
    %1070 = arith.addf %1067, %1069 : vector<2x128xf32>
    %1071 = vector.extract_strided_slice %1070 {offsets = [0, 0], sizes = [2, 32], strides = [1, 1]} : vector<2x128xf32> to vector<2x32xf32>
    %1072 = arith.negf %1071 : vector<2x32xf32>
    %1073 = math.exp %1072 : vector<2x32xf32>
    %cst_314 = arith.constant 1.000000e+00 : f32
    %1074 = vector.broadcast %cst_314 : f32 to vector<2x32xf32>
    %1075 = arith.addf %1074, %1073 : vector<2x32xf32>
    %1076 = arith.divf %1074, %1075 : vector<2x32xf32>
    %1077 = vector.extract_strided_slice %1070 {offsets = [0, 32], sizes = [2, 32], strides = [1, 1]} : vector<2x128xf32> to vector<2x32xf32>
    %1078 = arith.negf %1077 : vector<2x32xf32>
    %1079 = math.exp %1078 : vector<2x32xf32>
    %cst_315 = arith.constant 1.000000e+00 : f32
    %1080 = vector.broadcast %cst_315 : f32 to vector<2x32xf32>
    %1081 = arith.addf %1080, %1079 : vector<2x32xf32>
    %1082 = arith.divf %1080, %1081 : vector<2x32xf32>
    %1083 = vector.extract_strided_slice %1070 {offsets = [0, 64], sizes = [2, 32], strides = [1, 1]} : vector<2x128xf32> to vector<2x32xf32>
    %1084 = math.tanh %1083 : vector<2x32xf32>
    %1085 = vector.extract_strided_slice %1070 {offsets = [0, 96], sizes = [2, 32], strides = [1, 1]} : vector<2x128xf32> to vector<2x32xf32>
    %1086 = arith.negf %1085 : vector<2x32xf32>
    %1087 = math.exp %1086 : vector<2x32xf32>
    %cst_316 = arith.constant 1.000000e+00 : f32
    %1088 = vector.broadcast %cst_316 : f32 to vector<2x32xf32>
    %1089 = arith.addf %1088, %1087 : vector<2x32xf32>
    %1090 = arith.divf %1088, %1089 : vector<2x32xf32>
    %1091 = arith.mulf %1082, %1021 : vector<2x32xf32>
    %1092 = arith.mulf %1076, %1084 : vector<2x32xf32>
    %1093 = arith.addf %1091, %1092 : vector<2x32xf32>
    %1094 = math.tanh %1093 : vector<2x32xf32>
    %1095 = arith.mulf %1090, %1094 : vector<2x32xf32>
    %1096 = tpu.concatenate %1095, %1055 in 1 : vector<2x32xf32>, vector<2x32xf32> -> vector<2x64xf32>
    %c1_317 = arith.constant 1 : index
    %c0_318 = arith.constant 0 : index
    %c0_319 = arith.constant 0 : index
    %1097 = vector.load %arg11[%c1_317, %c0_318, %c0_319] : memref<2x64x128xf32, #tpu.memory_space<vmem>>, vector<1x64x128xf32>
    %1098 = vector.shape_cast %1097 : vector<1x64x128xf32> to vector<64x128xf32>
    %cst_320 = arith.constant dense<0.000000e+00> : vector<2x128xf32>
    %1099 = tpu.matmul %1096, %1098, %cst_320 {dimension_numbers = #tpu.dot_dimension_numbers<[1], [0], [0], [1], [0, 0, 1, 1], [], []>} : vector<2x64xf32>, vector<64x128xf32>, vector<2x128xf32> -> vector<2x128xf32>
    %c1_321 = arith.constant 1 : index
    %c0_322 = arith.constant 0 : index
    %1100 = vector.load %arg12[%c1_321, %c0_322] : memref<2x128xf32, #tpu.memory_space<vmem>>, vector<1x128xf32>
    %1101 = vector.broadcast %1100 : vector<1x128xf32> to vector<2x128xf32>
    %1102 = arith.addf %1099, %1101 : vector<2x128xf32>
    %1103 = vector.extract_strided_slice %1102 {offsets = [0, 0], sizes = [2, 32], strides = [1, 1]} : vector<2x128xf32> to vector<2x32xf32>
    %1104 = arith.negf %1103 : vector<2x32xf32>
    %1105 = math.exp %1104 : vector<2x32xf32>
    %cst_323 = arith.constant 1.000000e+00 : f32
    %1106 = vector.broadcast %cst_323 : f32 to vector<2x32xf32>
    %1107 = arith.addf %1106, %1105 : vector<2x32xf32>
    %1108 = arith.divf %1106, %1107 : vector<2x32xf32>
    %1109 = vector.extract_strided_slice %1102 {offsets = [0, 32], sizes = [2, 32], strides = [1, 1]} : vector<2x128xf32> to vector<2x32xf32>
    %1110 = arith.negf %1109 : vector<2x32xf32>
    %1111 = math.exp %1110 : vector<2x32xf32>
    %cst_324 = arith.constant 1.000000e+00 : f32
    %1112 = vector.broadcast %cst_324 : f32 to vector<2x32xf32>
    %1113 = arith.addf %1112, %1111 : vector<2x32xf32>
    %1114 = arith.divf %1112, %1113 : vector<2x32xf32>
    %1115 = vector.extract_strided_slice %1102 {offsets = [0, 64], sizes = [2, 32], strides = [1, 1]} : vector<2x128xf32> to vector<2x32xf32>
    %1116 = math.tanh %1115 : vector<2x32xf32>
    %1117 = vector.extract_strided_slice %1102 {offsets = [0, 96], sizes = [2, 32], strides = [1, 1]} : vector<2x128xf32> to vector<2x32xf32>
    %1118 = arith.negf %1117 : vector<2x32xf32>
    %1119 = math.exp %1118 : vector<2x32xf32>
    %cst_325 = arith.constant 1.000000e+00 : f32
    %1120 = vector.broadcast %cst_325 : f32 to vector<2x32xf32>
    %1121 = arith.addf %1120, %1119 : vector<2x32xf32>
    %1122 = arith.divf %1120, %1121 : vector<2x32xf32>
    %1123 = arith.mulf %1114, %1053 : vector<2x32xf32>
    %1124 = arith.mulf %1108, %1116 : vector<2x32xf32>
    %1125 = arith.addf %1123, %1124 : vector<2x32xf32>
    %1126 = math.tanh %1125 : vector<2x32xf32>
    %1127 = arith.mulf %1122, %1126 : vector<2x32xf32>
    %c12 = arith.constant 12 : index
    %c0_326 = arith.constant 0 : index
    %1128 = vector.load %arg17[%c12, %c0_326] : memref<16x32xf32, #tpu.memory_space<vmem>>, vector<2x32xf32>
    tpu.vector_store %arg17[%c12, %c0_326], %1127 {strides = array<i32>} : memref<16x32xf32, #tpu.memory_space<vmem>>, vector<2x32xf32>,
    %1129 = vector.extract_strided_slice %0 {offsets = [0, 7], sizes = [2, 1], strides = [1, 1]} : vector<2x8xi32> to vector<2x1xi32>
    %1130 = vector.broadcast %1129 : vector<2x1xi32> to vector<2x4xi32>
    %1131 = arith.cmpi eq, %1130, %2 : vector<2x4xi32>
    %1132 = arith.extui %1131 : vector<2x4xi1> to vector<2x4xi32>
    %1133 = arith.sitofp %1132 : vector<2x4xi32> to vector<2x4xf32>
    %c0_327 = arith.constant 0 : index
    %c0_328 = arith.constant 0 : index
    %1134 = vector.load %arg8[%c0_327, %c0_328] : memref<4x128xf32, #tpu.memory_space<vmem>>, vector<4x128xf32>
    %cst_329 = arith.constant dense<0.000000e+00> : vector<2x128xf32>
    %1135 = tpu.matmul %1133, %1134, %cst_329 {dimension_numbers = #tpu.dot_dimension_numbers<[1], [0], [0], [1], [0, 0, 1, 1], [], []>} : vector<2x4xf32>, vector<4x128xf32>, vector<2x128xf32> -> vector<2x128xf32>
    %1136 = arith.addf %620, %1135 : vector<2x128xf32>
    %c0_330 = arith.constant 0 : index
    %c0_331 = arith.constant 0 : index
    %1137 = vector.load %arg10[%c0_330, %c0_331] : memref<32x128xf32, #tpu.memory_space<vmem>>, vector<32x128xf32>
    %cst_332 = arith.constant dense<0.000000e+00> : vector<2x128xf32>
    %1138 = tpu.matmul %1095, %1137, %cst_332 {dimension_numbers = #tpu.dot_dimension_numbers<[1], [0], [0], [1], [0, 0, 1, 1], [], []>} : vector<2x32xf32>, vector<32x128xf32>, vector<2x128xf32> -> vector<2x128xf32>
    %1139 = arith.addf %1136, %1138 : vector<2x128xf32>
    %c0_333 = arith.constant 0 : index
    %c0_334 = arith.constant 0 : index
    %1140 = vector.load %arg12[%c0_333, %c0_334] : memref<2x128xf32, #tpu.memory_space<vmem>>, vector<1x128xf32>
    %1141 = vector.broadcast %1140 : vector<1x128xf32> to vector<2x128xf32>
    %1142 = arith.addf %1139, %1141 : vector<2x128xf32>
    %1143 = vector.extract_strided_slice %1142 {offsets = [0, 0], sizes = [2, 32], strides = [1, 1]} : vector<2x128xf32> to vector<2x32xf32>
    %1144 = arith.negf %1143 : vector<2x32xf32>
    %1145 = math.exp %1144 : vector<2x32xf32>
    %cst_335 = arith.constant 1.000000e+00 : f32
    %1146 = vector.broadcast %cst_335 : f32 to vector<2x32xf32>
    %1147 = arith.addf %1146, %1145 : vector<2x32xf32>
    %1148 = arith.divf %1146, %1147 : vector<2x32xf32>
    %1149 = vector.extract_strided_slice %1142 {offsets = [0, 32], sizes = [2, 32], strides = [1, 1]} : vector<2x128xf32> to vector<2x32xf32>
    %1150 = arith.negf %1149 : vector<2x32xf32>
    %1151 = math.exp %1150 : vector<2x32xf32>
    %cst_336 = arith.constant 1.000000e+00 : f32
    %1152 = vector.broadcast %cst_336 : f32 to vector<2x32xf32>
    %1153 = arith.addf %1152, %1151 : vector<2x32xf32>
    %1154 = arith.divf %1152, %1153 : vector<2x32xf32>
    %1155 = vector.extract_strided_slice %1142 {offsets = [0, 64], sizes = [2, 32], strides = [1, 1]} : vector<2x128xf32> to vector<2x32xf32>
    %1156 = math.tanh %1155 : vector<2x32xf32>
    %1157 = vector.extract_strided_slice %1142 {offsets = [0, 96], sizes = [2, 32], strides = [1, 1]} : vector<2x128xf32> to vector<2x32xf32>
    %1158 = arith.negf %1157 : vector<2x32xf32>
    %1159 = math.exp %1158 : vector<2x32xf32>
    %cst_337 = arith.constant 1.000000e+00 : f32
    %1160 = vector.broadcast %cst_337 : f32 to vector<2x32xf32>
    %1161 = arith.addf %1160, %1159 : vector<2x32xf32>
    %1162 = arith.divf %1160, %1161 : vector<2x32xf32>
    %1163 = arith.mulf %1154, %1093 : vector<2x32xf32>
    %1164 = arith.mulf %1148, %1156 : vector<2x32xf32>
    %1165 = arith.addf %1163, %1164 : vector<2x32xf32>
    %1166 = math.tanh %1165 : vector<2x32xf32>
    %1167 = arith.mulf %1162, %1166 : vector<2x32xf32>
    %1168 = tpu.concatenate %1167, %1127 in 1 : vector<2x32xf32>, vector<2x32xf32> -> vector<2x64xf32>
    %c1_338 = arith.constant 1 : index
    %c0_339 = arith.constant 0 : index
    %c0_340 = arith.constant 0 : index
    %1169 = vector.load %arg11[%c1_338, %c0_339, %c0_340] : memref<2x64x128xf32, #tpu.memory_space<vmem>>, vector<1x64x128xf32>
    %1170 = vector.shape_cast %1169 : vector<1x64x128xf32> to vector<64x128xf32>
    %cst_341 = arith.constant dense<0.000000e+00> : vector<2x128xf32>
    %1171 = tpu.matmul %1168, %1170, %cst_341 {dimension_numbers = #tpu.dot_dimension_numbers<[1], [0], [0], [1], [0, 0, 1, 1], [], []>} : vector<2x64xf32>, vector<64x128xf32>, vector<2x128xf32> -> vector<2x128xf32>
    %c1_342 = arith.constant 1 : index
    %c0_343 = arith.constant 0 : index
    %1172 = vector.load %arg12[%c1_342, %c0_343] : memref<2x128xf32, #tpu.memory_space<vmem>>, vector<1x128xf32>
    %1173 = vector.broadcast %1172 : vector<1x128xf32> to vector<2x128xf32>
    %1174 = arith.addf %1171, %1173 : vector<2x128xf32>
    %1175 = vector.extract_strided_slice %1174 {offsets = [0, 0], sizes = [2, 32], strides = [1, 1]} : vector<2x128xf32> to vector<2x32xf32>
    %1176 = arith.negf %1175 : vector<2x32xf32>
    %1177 = math.exp %1176 : vector<2x32xf32>
    %cst_344 = arith.constant 1.000000e+00 : f32
    %1178 = vector.broadcast %cst_344 : f32 to vector<2x32xf32>
    %1179 = arith.addf %1178, %1177 : vector<2x32xf32>
    %1180 = arith.divf %1178, %1179 : vector<2x32xf32>
    %1181 = vector.extract_strided_slice %1174 {offsets = [0, 32], sizes = [2, 32], strides = [1, 1]} : vector<2x128xf32> to vector<2x32xf32>
    %1182 = arith.negf %1181 : vector<2x32xf32>
    %1183 = math.exp %1182 : vector<2x32xf32>
    %cst_345 = arith.constant 1.000000e+00 : f32
    %1184 = vector.broadcast %cst_345 : f32 to vector<2x32xf32>
    %1185 = arith.addf %1184, %1183 : vector<2x32xf32>
    %1186 = arith.divf %1184, %1185 : vector<2x32xf32>
    %1187 = vector.extract_strided_slice %1174 {offsets = [0, 64], sizes = [2, 32], strides = [1, 1]} : vector<2x128xf32> to vector<2x32xf32>
    %1188 = math.tanh %1187 : vector<2x32xf32>
    %1189 = vector.extract_strided_slice %1174 {offsets = [0, 96], sizes = [2, 32], strides = [1, 1]} : vector<2x128xf32> to vector<2x32xf32>
    %1190 = arith.negf %1189 : vector<2x32xf32>
    %1191 = math.exp %1190 : vector<2x32xf32>
    %cst_346 = arith.constant 1.000000e+00 : f32
    %1192 = vector.broadcast %cst_346 : f32 to vector<2x32xf32>
    %1193 = arith.addf %1192, %1191 : vector<2x32xf32>
    %1194 = arith.divf %1192, %1193 : vector<2x32xf32>
    %1195 = arith.mulf %1186, %1125 : vector<2x32xf32>
    %1196 = arith.mulf %1180, %1188 : vector<2x32xf32>
    %1197 = arith.addf %1195, %1196 : vector<2x32xf32>
    %1198 = math.tanh %1197 : vector<2x32xf32>
    %1199 = arith.mulf %1194, %1198 : vector<2x32xf32>
    %c14 = arith.constant 14 : index
    %c0_347 = arith.constant 0 : index
    %1200 = vector.load %arg17[%c14, %c0_347] : memref<16x32xf32, #tpu.memory_space<vmem>>, vector<2x32xf32>
    tpu.vector_store %arg17[%c14, %c0_347], %1199 {strides = array<i32>} : memref<16x32xf32, #tpu.memory_space<vmem>>, vector<2x32xf32>,
    %c0_348 = arith.constant 0 : index
    %c0_349 = arith.constant 0 : index
    %1201 = vector.load %arg17[%c0_348, %c0_349] : memref<16x32xf32, #tpu.memory_space<vmem>>, vector<16x32xf32>
    %c0_350 = arith.constant 0 : index
    %c0_351 = arith.constant 0 : index
    %1202 = vector.load %arg13[%c0_350, %c0_351] : memref<32x4xf32, #tpu.memory_space<vmem>>, vector<32x4xf32>
    %cst_352 = arith.constant dense<0.000000e+00> : vector<16x4xf32>
    %1203 = tpu.matmul %1201, %1202, %cst_352 {dimension_numbers = #tpu.dot_dimension_numbers<[1], [0], [0], [1], [0, 0, 1, 1], [], []>} : vector<16x32xf32>, vector<32x4xf32>, vector<16x4xf32> -> vector<16x4xf32>
    %c0_353 = arith.constant 0 : index
    %c0_354 = arith.constant 0 : index
    %1204 = vector.load %arg14[%c0_353, %c0_354] : memref<1x4xf32, #tpu.memory_space<vmem>>, vector<1x4xf32>
    %1205 = vector.broadcast %1204 : vector<1x4xf32> to vector<16x4xf32>
    %1206 = arith.addf %1203, %1205 : vector<16x4xf32>
    %c0_355 = arith.constant 0 : index
    %c0_356 = arith.constant 0 : index
    %1207 = vector.load %arg15[%c0_355, %c0_356] : memref<16x4xf32, #tpu.memory_space<vmem>>, vector<16x4xf32>
    tpu.vector_store %arg15[%c0_355, %c0_356], %1206 {strides = array<i32>} : memref<16x4xf32, #tpu.memory_space<vmem>>, vector<16x4xf32>,
    return
  }
  func.func @transform_0(%arg0: i32) -> (i32, i32) {
    %c0_i32 = arith.constant 0 : i32
    %c0_i32_0 = arith.constant 0 : i32
    %c0_i32_1 = arith.constant 0 : i32
    return %c0_i32, %c0_i32_0 : i32, i32
  }
  func.func @transform_1(%arg0: i32) -> (i32, i32) {
    %c0_i32 = arith.constant 0 : i32
    %c0_i32_0 = arith.constant 0 : i32
    %c0_i32_1 = arith.constant 0 : i32
    return %c0_i32, %c0_i32_0 : i32, i32
  }
  func.func @transform_2(%arg0: i32) -> (i32, i32) {
    %c0_i32 = arith.constant 0 : i32
    %c0_i32_0 = arith.constant 0 : i32
    %c0_i32_1 = arith.constant 0 : i32
    return %c0_i32, %c0_i32_0 : i32, i32
  }
  func.func @transform_3(%arg0: i32) -> (i32, i32) {
    %c0_i32 = arith.constant 0 : i32
    %c0_i32_0 = arith.constant 0 : i32
    %c0_i32_1 = arith.constant 0 : i32
    return %c0_i32, %c0_i32_0 : i32, i32
  }
  func.func @transform_4(%arg0: i32) -> (i32, i32) {
    %c0_i32 = arith.constant 0 : i32
    %c0_i32_0 = arith.constant 0 : i32
    %c0_i32_1 = arith.constant 0 : i32
    return %c0_i32, %c0_i32_0 : i32, i32
  }
  func.func @transform_5(%arg0: i32) -> (i32, i32, i32) {
    %c0_i32 = arith.constant 0 : i32
    %c0_i32_0 = arith.constant 0 : i32
    %c0_i32_1 = arith.constant 0 : i32
    %c0_i32_2 = arith.constant 0 : i32
    return %c0_i32, %c0_i32_0, %c0_i32_1 : i32, i32, i32
  }
  func.func @transform_6(%arg0: i32) -> (i32, i32) {
    %c0_i32 = arith.constant 0 : i32
    %c0_i32_0 = arith.constant 0 : i32
    %c0_i32_1 = arith.constant 0 : i32
    return %c0_i32, %c0_i32_0 : i32, i32
  }
  func.func @transform_7(%arg0: i32) -> (i32, i32) {
    %c0_i32 = arith.constant 0 : i32
    %c0_i32_0 = arith.constant 0 : i32
    %c0_i32_1 = arith.constant 0 : i32
    return %c0_i32, %c0_i32_0 : i32, i32
  }
  func.func @transform_8(%arg0: i32) -> (i32, i32) {
    %c0_i32 = arith.constant 0 : i32
    %c0_i32_0 = arith.constant 0 : i32
    %c0_i32_1 = arith.constant 0 : i32
    return %c0_i32, %c0_i32_0 : i32, i32
  }
  func.func @transform_9(%arg0: i32) -> (i32, i32) {
    %c0_i32 = arith.constant 0 : i32
    %c0_i32_0 = arith.constant 0 : i32
    %c0_i32_1 = arith.constant 0 : i32
    return %c0_i32, %c0_i32_0 : i32, i32
  }
  func.func @transform_10(%arg0: i32) -> (i32, i32, i32) {
    %c0_i32 = arith.constant 0 : i32
    %c0_i32_0 = arith.constant 0 : i32
    %c0_i32_1 = arith.constant 0 : i32
    %c0_i32_2 = arith.constant 0 : i32
    return %c0_i32, %c0_i32_0, %c0_i32_1 : i32, i32, i32
  }
  func.func @transform_11(%arg0: i32) -> (i32, i32) {
    %c0_i32 = arith.constant 0 : i32
    %c0_i32_0 = arith.constant 0 : i32
    %c0_i32_1 = arith.constant 0 : i32
    return %c0_i32, %c0_i32_0 : i32, i32
  }
  func.func @transform_12(%arg0: i32) -> (i32, i32) {
    %c0_i32 = arith.constant 0 : i32
    %c0_i32_0 = arith.constant 0 : i32
    %c0_i32_1 = arith.constant 0 : i32
    return %c0_i32, %c0_i32_0 : i32, i32
  }
  func.func @transform_13(%arg0: i32) -> (i32, i32) {
    %c0_i32 = arith.constant 0 : i32
    %c0_i32_0 = arith.constant 0 : i32
    %c0_i32_1 = arith.constant 0 : i32
    return %c0_i32, %c0_i32_0 : i32, i32
  }
  func.func @transform_14(%arg0: i32) -> (i32, i32) {
    %c0_i32 = arith.constant 0 : i32
    %c0_i32_0 = arith.constant 0 : i32
    %c0_i32_1 = arith.constant 0 : i32
    return %c0_i32, %c0_i32_0 : i32, i32
  }
  func.func @transform_15(%arg0: i32) -> (i32, i32) {
    %c0_i32 = arith.constant 0 : i32
    %c0_i32_0 = arith.constant 0 : i32
    %c0_i32_1 = arith.constant 0 : i32
    return %c0_i32, %c0_i32_0 : i32, i32
  }
}

</mosaic_0001>

<llo_original>
// kernel: ae_forward.1
$region0: #{ae_forward.1}
  #allocation0 [shape = 'u32[]', space=smem, size = 0x4, offset = 0x4, fixed_abs, tag = 'smem constant byte address 0x4 - core index']
  #allocation1 [shape = 'u32[72,128]{1,0:T(1,128)}', space=vmem, size = 0x9000, scoped, tag = 'internal scratch']
  #allocation2 [shape = 'f32[16,32]{1,0:T(8,128)}', space=vmem, size = 0x2000, scoped, tag = 'scratch operand']
  %s0 = inlined_call_operand.vmem [shape: s32[2,8], index: 0, kind: input, shape index: {}]
  %s1 = inlined_call_operand.vmem [shape: s32[2,1], index: 1, kind: input, shape index: {}]
  %s2 = inlined_call_operand.vmem [shape: f32[2,32], index: 2, kind: input, shape index: {}]
  %s3 = inlined_call_operand.vmem [shape: f32[4,128], index: 3, kind: input, shape index: {}]
  %s4 = inlined_call_operand.vmem [shape: f32[32,128], index: 4, kind: input, shape index: {}]
  %s5 = inlined_call_operand.hbm [shape: f32[2,64,128], index: 5, kind: input, shape index: {}]
  %s6 = inlined_call_operand.hbm [shape: f32[2,128], index: 6, kind: input, shape index: {}]
  %s7 = inlined_call_operand.hbm [shape: f32[4,128], index: 7, kind: input, shape index: {}]
  %s8 = inlined_call_operand.hbm [shape: f32[32,128], index: 8, kind: input, shape index: {}]
  %s9 = inlined_call_operand.hbm [shape: f32[32,128], index: 9, kind: input, shape index: {}]
  %s10 = inlined_call_operand.hbm [shape: f32[2,64,128], index: 10, kind: input, shape index: {}]
  %s11 = inlined_call_operand.hbm [shape: f32[2,128], index: 11, kind: input, shape index: {}]
  %s12 = inlined_call_operand.vmem [shape: f32[32,4], index: 12, kind: input, shape index: {}]
  %s13 = inlined_call_operand.vmem [shape: f32[1,4], index: 13, kind: input, shape index: {}]
  %s14 = inlined_call_operand.vmem [shape: f32[16,4], index: 14, kind: output, shape index: {0}]
  %s15 = inlined_call_operand.hbm [shape: f32[2,32], index: 15, kind: output, shape index: {1}]
  %16 = xla_tuple %s14, %s15
  %s17 = sld [smem:[#allocation0]]
  $region102: #{ae_forward.1} parent=0
    _
  %s19 = ssub.s32 1, %s17
  %s20 = scalar_select 0, %s19, %s17
  $region1: #{ae_forward.1} parent=0
    #allocation3 [shape = 'u8[65536]{0}', space=vmem, size = 0x10000, scoped, tag = 'input window, operand 5, single buffered']
    #allocation4 [shape = 's32[1]{0}', space=sflag, size = 0x4, scoped, tag = 'scoped memory for ae_forward.1']
    #allocation5 [shape = 's32[1]{0}', space=sflag, size = 0x4, scoped, tag = 'scoped memory for ae_forward.1']
    #allocation6 [shape = 'u8[1024]{0}', space=vmem, size = 0x400, scoped, tag = 'input window, operand 6, single buffered']
    #allocation7 [shape = 's32[1]{0}', space=sflag, size = 0x4, scoped, tag = 'scoped memory for ae_forward.1']
    #allocation8 [shape = 'u8[2048]{0}', space=vmem, size = 0x800, scoped, tag = 'input window, operand 7, single buffered']
    #allocation9 [shape = 'u8[16384]{0}', space=vmem, size = 0x4000, scoped, tag = 'input window, operand 8, single buffered']
    #allocation10 [shape = 's32[1]{0}', space=sflag, size = 0x4, scoped, tag = 'scoped memory for ae_forward.1']
    #allocation11 [shape = 'u8[16384]{0}', space=vmem, size = 0x4000, scoped, tag = 'input window, operand 9, single buffered']
    #allocation12 [shape = 'u8[65536]{0}', space=vmem, size = 0x10000, scoped, tag = 'input window, operand 10, single buffered']
    #allocation13 [shape = 's32[1]{0}', space=sflag, size = 0x4, scoped, tag = 'scoped memory for ae_forward.1']
    #allocation14 [shape = 'u8[1024]{0}', space=vmem, size = 0x400, scoped, tag = 'input window, operand 11, single buffered']
    #allocation15 [shape = 'u8[1024]{0}', space=vmem, size = 0x400, scoped, tag = 'output window, operand 1, single buffered']
    %21 = vsyncpa [#allocation4], 0
    %22 = vsyncpa [#allocation7], 0
    %23 = vsyncpa [#allocation10], 0
    %24 = vsyncpa [#allocation13], 0
    %25 = vsyncpa [#allocation5], 0
    // Predicated region
    $region2: #{ae_forward.1} parent=1 // pred_check
      _
    $region3: #{ae_forward.1} parent=1 // pred_check_branch
      %27 = sbr.rel (0) target = $region5
    $region4: #{ae_forward.1} parent=1 // pred_region
      _
    $region5: #{ae_forward.1} parent=1 // pred_fallthru
      _
    // Predicated region
    $region6: #{ae_forward.1} parent=1 // pred_check
      _
    $region7: #{ae_forward.1} parent=1 // pred_check_branch
      %29 = sbr.rel (0) target = $region9
    $region8: #{ae_forward.1} parent=1 // pred_region
      _
    $region9: #{ae_forward.1} parent=1 // pred_fallthru
      _
    // Predicated region
    $region10: #{ae_forward.1} parent=1 // pred_check
      _
    $region11: #{ae_forward.1} parent=1 // pred_check_branch
      %31 = sbr.rel (0) target = $region13
    $region12: #{ae_forward.1} parent=1 // pred_region
      _
    $region13: #{ae_forward.1} parent=1 // pred_fallthru
      _
    // Predicated region
    $region14: #{ae_forward.1} parent=1 // pred_check
      _
    $region15: #{ae_forward.1} parent=1 // pred_check_branch
      %33 = sbr.rel (0) target = $region17
    $region16: #{ae_forward.1} parent=1 // pred_region
      _
    $region17: #{ae_forward.1} parent=1 // pred_fallthru
      _
    // Predicated region
    $region18: #{ae_forward.1} parent=1 // pred_check
      _
    $region19: #{ae_forward.1} parent=1 // pred_check_branch
      %35 = sbr.rel (0) target = $region21
    $region20: #{ae_forward.1} parent=1 // pred_region
      _
    $region21: #{ae_forward.1} parent=1 // pred_fallthru
      _
    // Predicated region
    $region22: #{ae_forward.1} parent=1 // pred_check
      _
    $region23: #{ae_forward.1} parent=1 // pred_check_branch
      %37 = sbr.rel (0) target = $region25
    $region24: #{ae_forward.1} parent=1 // pred_region
      %39 = vsyncadd [#allocation4], 0
      %s40 = sshll.u32 %s5, 4
      %s41 = int_to_ptr.hbm [resolvable:$true] %s40
      %s42 = sshll.u32 [#allocation3], 4
      %s43 = int_to_ptr.vmem [resolvable:$true] %s42
      %48 = dma.hbm_to_vmem [thread:$0]  %s41, 2048, %s43, [#allocation4], 128, 128, 8
    $region25: #{ae_forward.1} parent=1 // pred_fallthru
      _
    // Predicated region
    $region26: #{ae_forward.1} parent=1 // pred_check
      _
    $region27: #{ae_forward.1} parent=1 // pred_check_branch
      %50 = sbr.rel (0) target = $region29
    $region28: #{ae_forward.1} parent=1 // pred_region
      %52 = vsyncadd [#allocation7], 0
      %s54 = sshll.u32 %s6, 4
      %s55 = int_to_ptr.hbm [resolvable:$true] %s54
      %s56 = sshll.u32 [#allocation6], 4
      %s57 = int_to_ptr.vmem [resolvable:$true] %s56
      %59 = dma.hbm_to_vmem [thread:$0]  %s55, 32, %s57, [#allocation7]
    $region29: #{ae_forward.1} parent=1 // pred_fallthru
      _
    // Predicated region
    $region30: #{ae_forward.1} parent=1 // pred_check
      _
    $region31: #{ae_forward.1} parent=1 // pred_check_branch
      %61 = sbr.rel (0) target = $region33
    $region32: #{ae_forward.1} parent=1 // pred_region
      %63 = vsyncadd [#allocation7], 0
      %s65 = sshll.u32 %s7, 4
      %s66 = int_to_ptr.hbm [resolvable:$true] %s65
      %s67 = sshll.u32 [#allocation8], 4
      %s68 = int_to_ptr.vmem [resolvable:$true] %s67
      %70 = dma.hbm_to_vmem [thread:$0]  %s66, 64, %s68, [#allocation7]
    $region33: #{ae_forward.1} parent=1 // pred_fallthru
      _
    // Predicated region
    $region34: #{ae_forward.1} parent=1 // pred_check
      _
    $region35: #{ae_forward.1} parent=1 // pred_check_branch
      %72 = sbr.rel (0) target = $region37
    $region36: #{ae_forward.1} parent=1 // pred_region
      %74 = vsyncadd [#allocation10], 0
      %s75 = sshll.u32 %s8, 4
      %s76 = int_to_ptr.hbm [resolvable:$true] %s75
      %s77 = sshll.u32 [#allocation9], 4
      %s78 = int_to_ptr.vmem [resolvable:$true] %s77
      %83 = dma.hbm_to_vmem [thread:$0]  %s76, 512, %s78, [#allocation10], 128, 128, 8
    $region37: #{ae_forward.1} parent=1 // pred_fallthru
      _
    // Predicated region
    $region38: #{ae_forward.1} parent=1 // pred_check
      _
    $region39: #{ae_forward.1} parent=1 // pred_check_branch
      %85 = sbr.rel (0) target = $region41
    $region40: #{ae_forward.1} parent=1 // pred_region
      %87 = vsyncadd [#allocation10], 0
      %s88 = sshll.u32 %s9, 4
      %s89 = int_to_ptr.hbm [resolvable:$true] %s88
      %s90 = sshll.u32 [#allocation11], 4
      %s91 = int_to_ptr.vmem [resolvable:$true] %s90
      %96 = dma.hbm_to_vmem [thread:$0]  %s89, 512, %s91, [#allocation10], 128, 128, 8
    $region41: #{ae_forward.1} parent=1 // pred_fallthru
      _
    // Predicated region
    $region42: #{ae_forward.1} parent=1 // pred_check
      _
    $region43: #{ae_forward.1} parent=1 // pred_check_branch
      %98 = sbr.rel (0) target = $region45
    $region44: #{ae_forward.1} parent=1 // pred_region
      %100 = vsyncadd [#allocation13], 0
      %s101 = sshll.u32 %s10, 4
      %s102 = int_to_ptr.hbm [resolvable:$true] %s101
      %s103 = sshll.u32 [#allocation12], 4
      %s104 = int_to_ptr.vmem [resolvable:$true] %s103
      %109 = dma.hbm_to_vmem [thread:$0]  %s102, 2048, %s104, [#allocation13], 128, 128, 8
    $region45: #{ae_forward.1} parent=1 // pred_fallthru
      _
    // Predicated region
    $region46: #{ae_forward.1} parent=1 // pred_check
      _
    $region47: #{ae_forward.1} parent=1 // pred_check_branch
      %111 = sbr.rel (0) target = $region49
    $region48: #{ae_forward.1} parent=1 // pred_region
      %113 = vsyncadd [#allocation13], 0
      %s115 = sshll.u32 %s11, 4
      %s116 = int_to_ptr.hbm [resolvable:$true] %s115
      %s117 = sshll.u32 [#allocation14], 4
      %s118 = int_to_ptr.vmem [resolvable:$true] %s117
      %120 = dma.hbm_to_vmem [thread:$0]  %s116, 32, %s118, [#allocation13]
    $region49: #{ae_forward.1} parent=1 // pred_fallthru
      _
    // Predicated region
    $region50: #{ae_forward.1} parent=1 // pred_check
      _
    $region51: #{ae_forward.1} parent=1 // pred_check_branch
      %122 = sbr.rel (0) target = $region53
    $region52: #{ae_forward.1} parent=1 // pred_region
      _
    $region53: #{ae_forward.1} parent=1 // pred_fallthru
      _
    // Predicated region
    $region54: #{ae_forward.1} parent=1 // pred_check
      _
    $region55: #{ae_forward.1} parent=1 // pred_check_branch
      %124 = sbr.rel (0) target = $region57
    $region56: #{ae_forward.1} parent=1 // pred_region
      _
    $region57: #{ae_forward.1} parent=1 // pred_fallthru
      _
    // Predicated region
    $region58: #{ae_forward.1} parent=1 // pred_check
      _
    $region59: #{ae_forward.1} parent=1 // pred_check_branch
      %126 = sbr.rel (0) target = $region61
    $region60: #{ae_forward.1} parent=1 // pred_region
      %128 = dma.done [#allocation4], 2048
    $region61: #{ae_forward.1} parent=1 // pred_fallthru
      _
    // Predicated region
    $region62: #{ae_forward.1} parent=1 // pred_check
      _
    $region63: #{ae_forward.1} parent=1 // pred_check_branch
      %130 = sbr.rel (0) target = $region65
    $region64: #{ae_forward.1} parent=1 // pred_region
      %132 = dma.done [#allocation7], 32
    $region65: #{ae_forward.1} parent=1 // pred_fallthru
      _
    // Predicated region
    $region66: #{ae_forward.1} parent=1 // pred_check
      _
    $region67: #{ae_forward.1} parent=1 // pred_check_branch
      %134 = sbr.rel (0) target = $region69
    $region68: #{ae_forward.1} parent=1 // pred_region
      %136 = dma.done [#allocation7], 64
    $region69: #{ae_forward.1} parent=1 // pred_fallthru
      _
    // Predicated region
    $region70: #{ae_forward.1} parent=1 // pred_check
      _
    $region71: #{ae_forward.1} parent=1 // pred_check_branch
      %138 = sbr.rel (0) target = $region73
    $region72: #{ae_forward.1} parent=1 // pred_region
      %140 = dma.done [#allocation10], 512
    $region73: #{ae_forward.1} parent=1 // pred_fallthru
      _
    // Predicated region
    $region74: #{ae_forward.1} parent=1 // pred_check
      _
    $region75: #{ae_forward.1} parent=1 // pred_check_branch
      %142 = sbr.rel (0) target = $region77
    $region76: #{ae_forward.1} parent=1 // pred_region
      %144 = dma.done [#allocation10], 512
    $region77: #{ae_forward.1} parent=1 // pred_fallthru
      _
    // Predicated region
    $region78: #{ae_forward.1} parent=1 // pred_check
      _
    $region79: #{ae_forward.1} parent=1 // pred_check_branch
      %146 = sbr.rel (0) target = $region81
    $region80: #{ae_forward.1} parent=1 // pred_region
      %148 = dma.done [#allocation13], 2048
    $region81: #{ae_forward.1} parent=1 // pred_fallthru
      _
    // Predicated region
    $region82: #{ae_forward.1} parent=1 // pred_check
      _
    $region83: #{ae_forward.1} parent=1 // pred_check_branch
      %150 = sbr.rel (0) target = $region85
    $region84: #{ae_forward.1} parent=1 // pred_region
      %152 = dma.done [#allocation13], 32
    $region85: #{ae_forward.1} parent=1 // pred_fallthru
      _
    %v153 = vld [vmem:[%s0] sm:$0x3]
    %v154 = vld [vmem:[%s1] sm:$0x3]
    %v155 = vlaneseq
    %v156 = vand.u32 %v155, 127
    %157 = vset.pattern.permute.xlu0 0
    %158 = vperm.xlu0 %157, %v153
    %v159 = vpop.permute.xlu0 %158
    %vm160 = vcmp.eq.s32.totalorder %v159, %v156
    %v161 = vsel %vm160, 1, 0
    %v162 = vcvt.s32.f32 %v161
    %v163 = vld [vmem:[%s3] sm:$0xf]
    %v164 = vld [vmem:[%s4] sm:$0xff]
    %v165 = vld [vmem:[%s4 + $0x8] sm:$0xff]
    %v166 = vld [vmem:[%s4 + $0x10] sm:$0xff]
    %v167 = vld [vmem:[%s4 + $0x18] sm:$0xff]
    %vm168 = vcmask 261120
    %v170 = vsel %vm168, 0.0, 0
    %172 = vmatpush.msra.mxu0 0.0
    %173 = vmatpush.msra.mxu0 0.0
    %174 = vmatpush.msra.mxu0 0.0
    %175 = vmatpush.msra.mxu0 0.0
    %176 = vmatpush.msra.mxu0 0.0
    %177 = vmatpush.msra.mxu0 0.0
    %178 = vmatpush.msra.mxu0 0.0
    %179 = vmatpush.msra.mxu0 0.0
    %180 = vmatpush.msra.mxu0 0.0
    %181 = vmatpush.msra.mxu0 0.0
    %182 = vmatpush.msra.mxu0 0.0
    %183 = vmatpush.msra.mxu0 0.0
    %184 = vmatpush.msra.mxu0 %v167
    %185 = vmatpush.msra.mxu0 %v166
    %186 = vmatpush.msra.mxu0 %v165
    %187 = vmatpush.msra.mxu0 %v164
    %188 = vmatmul.f32.gmra.mxu0 %v170
    %v189 = vpop.f32.mrf.mxu0
    %v190 = vadd.f32 0.0, %v189
    %191 = vdwg.mxu0
    %vm192 = vcmask 31744
    %v194 = vsel %vm192, %v162, 0
    %vm196 = vcmask 1043456
    %v198 = vsel %vm196, %v163, 0
    %200 = vmatpush.msra.mxu0 0.0
    %201 = vmatpush.msra.mxu0 0.0
    %202 = vmatpush.msra.mxu0 0.0
    %203 = vmatpush.msra.mxu0 0.0
    %204 = vmatpush.msra.mxu0 0.0
    %205 = vmatpush.msra.mxu0 0.0
    %206 = vmatpush.msra.mxu0 0.0
    %207 = vmatpush.msra.mxu0 0.0
    %208 = vmatpush.msra.mxu0 0.0
    %209 = vmatpush.msra.mxu0 0.0
    %210 = vmatpush.msra.mxu0 0.0
    %211 = vmatpush.msra.mxu0 0.0
    %212 = vmatpush.msra.mxu0 0.0
    %213 = vmatpush.msra.mxu0 0.0
    %214 = vmatpush.msra.mxu0 0.0
    %215 = vmatpush.msra.mxu0 %v198
    %216 = vmatmul.f32.gmra.mxu0 %v194
    %v217 = vpop.f32.mrf.mxu0
    %v218 = vadd.f32 %v190, %v217
    %219 = vdwg.mxu0
    %v220 = vld [vmem:[#allocation6] sm:$0x1]
    %v221 = vperm.slane %v220, 0
    %v222 = vadd.f32 %v218, %v221
    %v223 = vxor.u32 %v222, 2147483648
    %v224 = vmul.f32 %v223, 1.442695
    %v225 = vpow.pop %v224
    %v226 = vadd.f32 %v225, 1.0
    %v227 = vrcp.pop %v226
    %v228 = vmul.f32 %v226, %v227
    %v229 = vsub.f32 1.0, %v228
    %v230 = vmul.f32 %v227, %v229
    %v231 = vadd.f32 %v227, %v230
    %vm232 = vweird.f32 %v226
    %vm233 = vweird.f32 %v227
    %vm234 = vmor %vm232, %vm233
    %v235 = vsel %vm234, %v227, %v231
    %v236 = vand.u32 2147483647, %v226
    %vm237 = vcmp.eq.f32.partialorder %v236, 8.507059e+37
    %v238 = vand.u32 %v226, 2147483648
    %v239 = vor.u32 1.1754944e-38, %v238
    %v240 = vsel %vm237, %v239, %v235
    %v241 = vmul.f32 1.0, %v240
    %v242 = vtanh.pop %v222
    %v243 = vmul.f32 %v241, 0.0
    %245 = vrot.lane.b32.xlu0 %v242, 64
    %v246 = vpop.permute.xlu0 %245
    %v248 = vmul.f32 %v241, %v246
    %250 = vrot.lane.b32.xlu0 %v248, 32
    %v251 = vpop.permute.xlu0 %250
    %v253 = vadd.f32 %v243, %v251
    %v254 = vtanh.pop %v253
    %256 = vrot.lane.b32.xlu0 %v254, 64
    %v257 = vpop.permute.xlu0 %256
    %v259 = vmul.f32 %v241, %v257
    %261 = vrot.lane.b32.xlu0 %v259, 32
    %v262 = vpop.permute.xlu0 %261
    %v264 = vsel %vm168, %v262, 0.0
    %s265 = scalar_lea.vmem [#allocation3], 64
    %v266 = vld [vmem:[%s265] sm:$0xff]
    %v267 = vld [vmem:[%s265 + $0x8] sm:$0xff]
    %v268 = vld [vmem:[%s265 + $0x10] sm:$0xff]
    %v269 = vld [vmem:[%s265 + $0x18] sm:$0xff]
    %v270 = vld [vmem:[%s265 + $0x20] sm:$0xff]
    %v271 = vld [vmem:[%s265 + $0x28] sm:$0xff]
    %v272 = vld [vmem:[%s265 + $0x30] sm:$0xff]
    %v273 = vld [vmem:[%s265 + $0x38] sm:$0xff]
    %v274 = vld [vmem:[#allocation6 + $0x1] sm:$0x1]
    %v275 = vperm.slane %v274, 0
    %vm276 = vcmask 523264
    %v278 = vsel %vm276, %v264, 0
    %280 = vmatpush.msra.mxu0 0.0
    %281 = vmatpush.msra.mxu0 0.0
    %282 = vmatpush.msra.mxu0 0.0
    %283 = vmatpush.msra.mxu0 0.0
    %284 = vmatpush.msra.mxu0 0.0
    %285 = vmatpush.msra.mxu0 0.0
    %286 = vmatpush.msra.mxu0 0.0
    %287 = vmatpush.msra.mxu0 0.0
    %288 = vmatpush.msra.mxu0 %v273
    %289 = vmatpush.msra.mxu0 %v272
    %290 = vmatpush.msra.mxu0 %v271
    %291 = vmatpush.msra.mxu0 %v270
    %292 = vmatpush.msra.mxu0 %v269
    %293 = vmatpush.msra.mxu0 %v268
    %294 = vmatpush.msra.mxu0 %v267
    %295 = vmatpush.msra.mxu0 %v266
    %296 = vmatmul.f32.gmra.mxu0 %v278
    %v297 = vpop.f32.mrf.mxu0
    %v298 = vadd.f32 %v275, %v297
    %299 = vdwg.mxu0
    %v300 = vxor.u32 %v298, 2147483648
    %v301 = vmul.f32 %v300, 1.442695
    %v302 = vpow.pop %v301
    %v303 = vadd.f32 %v302, 1.0
    %v304 = vrcp.pop %v303
    %v305 = vmul.f32 %v303, %v304
    %v306 = vsub.f32 1.0, %v305
    %v307 = vmul.f32 %v304, %v306
    %v308 = vadd.f32 %v304, %v307
    %vm309 = vweird.f32 %v303
    %vm310 = vweird.f32 %v304
    %vm311 = vmor %vm309, %vm310
    %v312 = vsel %vm311, %v304, %v308
    %v313 = vand.u32 2147483647, %v303
    %vm314 = vcmp.eq.f32.partialorder %v313, 8.507059e+37
    %v315 = vand.u32 %v303, 2147483648
    %v316 = vor.u32 1.1754944e-38, %v315
    %v317 = vsel %vm314, %v316, %v312
    %v318 = vmul.f32 1.0, %v317
    %v319 = vtanh.pop %v298
    %v320 = vmul.f32 %v318, 0.0
    %322 = vrot.lane.b32.xlu0 %v319, 64
    %v323 = vpop.permute.xlu0 %322
    %v325 = vmul.f32 %v318, %v323
    %327 = vrot.lane.b32.xlu0 %v325, 32
    %v328 = vpop.permute.xlu0 %327
    %v330 = vadd.f32 %v320, %v328
    %v331 = vtanh.pop %v330
    %333 = vrot.lane.b32.xlu0 %v331, 64
    %v334 = vpop.permute.xlu0 %333
    %v336 = vmul.f32 %v318, %v334
    %vm337 = vcmp.eq.s32.totalorder %v154, 0
    %v338 = vsel %vm337, 1, 0
    %339 = vset.pattern.permute.xlu0 0
    %340 = vperm.xlu0 %339, %v338
    %v341 = vpop.permute.xlu0 %340
    %vm342 = vcmp.eq.s32.totalorder %v341, 1
    %v343 = vsel %vm342, %v336, 0.0
    %344 = vset.pattern.permute.xlu0 1
    %345 = vperm.xlu0 %344, %v153
    %v346 = vpop.permute.xlu0 %345
    %vm347 = vcmp.eq.s32.totalorder %v346, %v156
    %v348 = vsel %vm347, 1, 0
    %v349 = vcvt.s32.f32 %v348
    %v350 = vsel %vm168, %v262, 0
    %352 = vmatpush.msra.mxu0 0.0
    %353 = vmatpush.msra.mxu0 0.0
    %354 = vmatpush.msra.mxu0 0.0
    %355 = vmatpush.msra.mxu0 0.0
    %356 = vmatpush.msra.mxu0 0.0
    %357 = vmatpush.msra.mxu0 0.0
    %358 = vmatpush.msra.mxu0 0.0
    %359 = vmatpush.msra.mxu0 0.0
    %360 = vmatpush.msra.mxu0 0.0
    %361 = vmatpush.msra.mxu0 0.0
    %362 = vmatpush.msra.mxu0 0.0
    %363 = vmatpush.msra.mxu0 0.0
    %364 = vmatpush.msra.mxu0 %v167
    %365 = vmatpush.msra.mxu0 %v166
    %366 = vmatpush.msra.mxu0 %v165
    %367 = vmatpush.msra.mxu0 %v164
    %368 = vmatmul.f32.gmra.mxu0 %v350
    %v369 = vpop.f32.mrf.mxu0
    %v370 = vadd.f32 0.0, %v369
    %371 = vdwg.mxu0
    %v373 = vsel %vm192, %v349, 0
    %375 = vmatpush.msra.mxu0 0.0
    %376 = vmatpush.msra.mxu0 0.0
    %377 = vmatpush.msra.mxu0 0.0
    %378 = vmatpush.msra.mxu0 0.0
    %379 = vmatpush.msra.mxu0 0.0
    %380 = vmatpush.msra.mxu0 0.0
    %381 = vmatpush.msra.mxu0 0.0
    %382 = vmatpush.msra.mxu0 0.0
    %383 = vmatpush.msra.mxu0 0.0
    %384 = vmatpush.msra.mxu0 0.0
    %385 = vmatpush.msra.mxu0 0.0
    %386 = vmatpush.msra.mxu0 0.0
    %387 = vmatpush.msra.mxu0 0.0
    %388 = vmatpush.msra.mxu0 0.0
    %389 = vmatpush.msra.mxu0 0.0
    %390 = vmatpush.msra.mxu0 %v198
    %391 = vmatmul.f32.gmra.mxu0 %v373
    %v392 = vpop.f32.mrf.mxu0
    %v393 = vadd.f32 %v370, %v392
    %394 = vdwg.mxu0
    %v395 = vadd.f32 %v393, %v221
    %v396 = vxor.u32 %v395, 2147483648
    %v397 = vmul.f32 %v396, 1.442695
    %v398 = vpow.pop %v397
    %v399 = vadd.f32 %v398, 1.0
    %v400 = vrcp.pop %v399
    %v401 = vmul.f32 %v399, %v400
    %v402 = vsub.f32 1.0, %v401
    %v403 = vmul.f32 %v400, %v402
    %v404 = vadd.f32 %v400, %v403
    %vm405 = vweird.f32 %v399
    %vm406 = vweird.f32 %v400
    %vm407 = vmor %vm405, %vm406
    %v408 = vsel %vm407, %v400, %v404
    %v409 = vand.u32 2147483647, %v399
    %vm410 = vcmp.eq.f32.partialorder %v409, 8.507059e+37
    %v411 = vand.u32 %v399, 2147483648
    %v412 = vor.u32 1.1754944e-38, %v411
    %v413 = vsel %vm410, %v412, %v408
    %v414 = vmul.f32 1.0, %v413
    %v415 = vtanh.pop %v395
    %v416 = vmul.f32 %v414, %v253
    %418 = vrot.lane.b32.xlu0 %v415, 64
    %v419 = vpop.permute.xlu0 %418
    %v421 = vmul.f32 %v414, %v419
    %423 = vrot.lane.b32.xlu0 %v421, 32
    %v424 = vpop.permute.xlu0 %423
    %v426 = vadd.f32 %v416, %v424
    %v427 = vtanh.pop %v426
    %429 = vrot.lane.b32.xlu0 %v427, 64
    %v430 = vpop.permute.xlu0 %429
    %v432 = vmul.f32 %v414, %v430
    %434 = vrot.lane.b32.xlu0 %v432, 32
    %v435 = vpop.permute.xlu0 %434
    %438 = vrot.lane.b32.xlu0 %v336, 64
    %v439 = vpop.permute.xlu0 %438
    %v441 = vsel %vm168, %v435, %v439
    %v443 = vsel %vm276, %v441, 0
    %445 = vmatpush.msra.mxu0 0.0
    %446 = vmatpush.msra.mxu0 0.0
    %447 = vmatpush.msra.mxu0 0.0
    %448 = vmatpush.msra.mxu0 0.0
    %449 = vmatpush.msra.mxu0 0.0
    %450 = vmatpush.msra.mxu0 0.0
    %451 = vmatpush.msra.mxu0 0.0
    %452 = vmatpush.msra.mxu0 0.0
    %453 = vmatpush.msra.mxu0 %v273
    %454 = vmatpush.msra.mxu0 %v272
    %455 = vmatpush.msra.mxu0 %v271
    %456 = vmatpush.msra.mxu0 %v270
    %457 = vmatpush.msra.mxu0 %v269
    %458 = vmatpush.msra.mxu0 %v268
    %459 = vmatpush.msra.mxu0 %v267
    %460 = vmatpush.msra.mxu0 %v266
    %461 = vmatmul.f32.gmra.mxu0 %v443
    %v462 = vpop.f32.mrf.mxu0
    %v463 = vadd.f32 %v275, %v462
    %464 = vdwg.mxu0
    %v465 = vxor.u32 %v463, 2147483648
    %v466 = vmul.f32 %v465, 1.442695
    %v467 = vpow.pop %v466
    %v468 = vadd.f32 %v467, 1.0
    %v469 = vrcp.pop %v468
    %v470 = vmul.f32 %v468, %v469
    %v471 = vsub.f32 1.0, %v470
    %v472 = vmul.f32 %v469, %v471
    %v473 = vadd.f32 %v469, %v472
    %vm474 = vweird.f32 %v468
    %vm475 = vweird.f32 %v469
    %vm476 = vmor %vm474, %vm475
    %v477 = vsel %vm476, %v469, %v473
    %v478 = vand.u32 2147483647, %v468
    %vm479 = vcmp.eq.f32.partialorder %v478, 8.507059e+37
    %v480 = vand.u32 %v468, 2147483648
    %v481 = vor.u32 1.1754944e-38, %v480
    %v482 = vsel %vm479, %v481, %v477
    %v483 = vmul.f32 1.0, %v482
    %v484 = vtanh.pop %v463
    %v485 = vmul.f32 %v483, %v330
    %487 = vrot.lane.b32.xlu0 %v484, 64
    %v488 = vpop.permute.xlu0 %487
    %v490 = vmul.f32 %v483, %v488
    %492 = vrot.lane.b32.xlu0 %v490, 32
    %v493 = vpop.permute.xlu0 %492
    %v495 = vadd.f32 %v485, %v493
    %v496 = vtanh.pop %v495
    %498 = vrot.lane.b32.xlu0 %v496, 64
    %v499 = vpop.permute.xlu0 %498
    %v501 = vmul.f32 %v483, %v499
    %vm502 = vcmp.eq.s32.totalorder %v154, 1
    %v503 = vsel %vm502, 1, 0
    %504 = vset.pattern.permute.xlu0 0
    %505 = vperm.xlu0 %504, %v503
    %v506 = vpop.permute.xlu0 %505
    %vm507 = vcmp.eq.s32.totalorder %v506, 1
    %v508 = vsel %vm507, %v501, %v343
    %509 = vset.pattern.permute.xlu0 2
    %510 = vperm.xlu0 %509, %v153
    %v511 = vpop.permute.xlu0 %510
    %vm512 = vcmp.eq.s32.totalorder %v511, %v156
    %v513 = vsel %vm512, 1, 0
    %v514 = vcvt.s32.f32 %v513
    %v515 = vsel %vm168, %v435, 0
    %517 = vmatpush.msra.mxu0 0.0
    %518 = vmatpush.msra.mxu0 0.0
    %519 = vmatpush.msra.mxu0 0.0
    %520 = vmatpush.msra.mxu0 0.0
    %521 = vmatpush.msra.mxu0 0.0
    %522 = vmatpush.msra.mxu0 0.0
    %523 = vmatpush.msra.mxu0 0.0
    %524 = vmatpush.msra.mxu0 0.0
    %525 = vmatpush.msra.mxu0 0.0
    %526 = vmatpush.msra.mxu0 0.0
    %527 = vmatpush.msra.mxu0 0.0
    %528 = vmatpush.msra.mxu0 0.0
    %529 = vmatpush.msra.mxu0 %v167
    %530 = vmatpush.msra.mxu0 %v166
    %531 = vmatpush.msra.mxu0 %v165
    %532 = vmatpush.msra.mxu0 %v164
    %533 = vmatmul.f32.gmra.mxu0 %v515
    %v534 = vpop.f32.mrf.mxu0
    %v535 = vadd.f32 0.0, %v534
    %536 = vdwg.mxu0
    %v538 = vsel %vm192, %v514, 0
    %540 = vmatpush.msra.mxu0 0.0
    %541 = vmatpush.msra.mxu0 0.0
    %542 = vmatpush.msra.mxu0 0.0
    %543 = vmatpush.msra.mxu0 0.0
    %544 = vmatpush.msra.mxu0 0.0
    %545 = vmatpush.msra.mxu0 0.0
    %546 = vmatpush.msra.mxu0 0.0
    %547 = vmatpush.msra.mxu0 0.0
    %548 = vmatpush.msra.mxu0 0.0
    %549 = vmatpush.msra.mxu0 0.0
    %550 = vmatpush.msra.mxu0 0.0
    %551 = vmatpush.msra.mxu0 0.0
    %552 = vmatpush.msra.mxu0 0.0
    %553 = vmatpush.msra.mxu0 0.0
    %554 = vmatpush.msra.mxu0 0.0
    %555 = vmatpush.msra.mxu0 %v198
    %556 = vmatmul.f32.gmra.mxu0 %v538
    %v557 = vpop.f32.mrf.mxu0
    %v558 = vadd.f32 %v535, %v557
    %559 = vdwg.mxu0
    %v560 = vadd.f32 %v558, %v221
    %v561 = vxor.u32 %v560, 2147483648
    %v562 = vmul.f32 %v561, 1.442695
    %v563 = vpow.pop %v562
    %v564 = vadd.f32 %v563, 1.0
    %v565 = vrcp.pop %v564
    %v566 = vmul.f32 %v564, %v565
    %v567 = vsub.f32 1.0, %v566
    %v568 = vmul.f32 %v565, %v567
    %v569 = vadd.f32 %v565, %v568
    %vm570 = vweird.f32 %v564
    %vm571 = vweird.f32 %v565
    %vm572 = vmor %vm570, %vm571
    %v573 = vsel %vm572, %v565, %v569
    %v574 = vand.u32 2147483647, %v564
    %vm575 = vcmp.eq.f32.partialorder %v574, 8.507059e+37
    %v576 = vand.u32 %v564, 2147483648
    %v577 = vor.u32 1.1754944e-38, %v576
    %v578 = vsel %vm575, %v577, %v573
    %v579 = vmul.f32 1.0, %v578
    %v580 = vtanh.pop %v560
    %v581 = vmul.f32 %v579, %v426
    %583 = vrot.lane.b32.xlu0 %v580, 64
    %v584 = vpop.permute.xlu0 %583
    %v586 = vmul.f32 %v579, %v584
    %588 = vrot.lane.b32.xlu0 %v586, 32
    %v589 = vpop.permute.xlu0 %588
    %v591 = vadd.f32 %v581, %v589
    %v592 = vtanh.pop %v591
    %594 = vrot.lane.b32.xlu0 %v592, 64
    %v595 = vpop.permute.xlu0 %594
    %v597 = vmul.f32 %v579, %v595
    %599 = vrot.lane.b32.xlu0 %v597, 32
    %v600 = vpop.permute.xlu0 %599
    %603 = vrot.lane.b32.xlu0 %v501, 64
    %v604 = vpop.permute.xlu0 %603
    %v606 = vsel %vm168, %v600, %v604
    %v608 = vsel %vm276, %v606, 0
    %610 = vmatpush.msra.mxu0 0.0
    %611 = vmatpush.msra.mxu0 0.0
    %612 = vmatpush.msra.mxu0 0.0
    %613 = vmatpush.msra.mxu0 0.0
    %614 = vmatpush.msra.mxu0 0.0
    %615 = vmatpush.msra.mxu0 0.0
    %616 = vmatpush.msra.mxu0 0.0
    %617 = vmatpush.msra.mxu0 0.0
    %618 = vmatpush.msra.mxu0 %v273
    %619 = vmatpush.msra.mxu0 %v272
    %620 = vmatpush.msra.mxu0 %v271
    %621 = vmatpush.msra.mxu0 %v270
    %622 = vmatpush.msra.mxu0 %v269
    %623 = vmatpush.msra.mxu0 %v268
    %624 = vmatpush.msra.mxu0 %v267
    %625 = vmatpush.msra.mxu0 %v266
    %626 = vmatmul.f32.gmra.mxu0 %v608
    %v627 = vpop.f32.mrf.mxu0
    %v628 = vadd.f32 %v275, %v627
    %629 = vdwg.mxu0
    %v630 = vxor.u32 %v628, 2147483648
    %v631 = vmul.f32 %v630, 1.442695
    %v632 = vpow.pop %v631
    %v633 = vadd.f32 %v632, 1.0
    %v634 = vrcp.pop %v633
    %v635 = vmul.f32 %v633, %v634
    %v636 = vsub.f32 1.0, %v635
    %v637 = vmul.f32 %v634, %v636
    %v638 = vadd.f32 %v634, %v637
    %vm639 = vweird.f32 %v633
    %vm640 = vweird.f32 %v634
    %vm641 = vmor %vm639, %vm640
    %v642 = vsel %vm641, %v634, %v638
    %v643 = vand.u32 2147483647, %v633
    %vm644 = vcmp.eq.f32.partialorder %v643, 8.507059e+37
    %v645 = vand.u32 %v633, 2147483648
    %v646 = vor.u32 1.1754944e-38, %v645
    %v647 = vsel %vm644, %v646, %v642
    %v648 = vmul.f32 1.0, %v647
    %v649 = vtanh.pop %v628
    %v650 = vmul.f32 %v648, %v495
    %652 = vrot.lane.b32.xlu0 %v649, 64
    %v653 = vpop.permute.xlu0 %652
    %v655 = vmul.f32 %v648, %v653
    %657 = vrot.lane.b32.xlu0 %v655, 32
    %v658 = vpop.permute.xlu0 %657
    %v660 = vadd.f32 %v650, %v658
    %v661 = vtanh.pop %v660
    %663 = vrot.lane.b32.xlu0 %v661, 64
    %v664 = vpop.permute.xlu0 %663
    %v666 = vmul.f32 %v648, %v664
    %vm667 = vcmp.eq.s32.totalorder %v154, 2
    %v668 = vsel %vm667, 1, 0
    %669 = vset.pattern.permute.xlu0 0
    %670 = vperm.xlu0 %669, %v668
    %v671 = vpop.permute.xlu0 %670
    %vm672 = vcmp.eq.s32.totalorder %v671, 1
    %v673 = vsel %vm672, %v666, %v508
    %674 = vset.pattern.permute.xlu0 3
    %675 = vperm.xlu0 %674, %v153
    %v676 = vpop.permute.xlu0 %675
    %vm677 = vcmp.eq.s32.totalorder %v676, %v156
    %v678 = vsel %vm677, 1, 0
    %v679 = vcvt.s32.f32 %v678
    %v680 = vsel %vm168, %v600, 0
    %682 = vmatpush.msra.mxu0 0.0
    %683 = vmatpush.msra.mxu0 0.0
    %684 = vmatpush.msra.mxu0 0.0
    %685 = vmatpush.msra.mxu0 0.0
    %686 = vmatpush.msra.mxu0 0.0
    %687 = vmatpush.msra.mxu0 0.0
    %688 = vmatpush.msra.mxu0 0.0
    %689 = vmatpush.msra.mxu0 0.0
    %690 = vmatpush.msra.mxu0 0.0
    %691 = vmatpush.msra.mxu0 0.0
    %692 = vmatpush.msra.mxu0 0.0
    %693 = vmatpush.msra.mxu0 0.0
    %694 = vmatpush.msra.mxu0 %v167
    %695 = vmatpush.msra.mxu0 %v166
    %696 = vmatpush.msra.mxu0 %v165
    %697 = vmatpush.msra.mxu0 %v164
    %698 = vmatmul.f32.gmra.mxu0 %v680
    %v699 = vpop.f32.mrf.mxu0
    %v700 = vadd.f32 0.0, %v699
    %701 = vdwg.mxu0
    %v703 = vsel %vm192, %v679, 0
    %705 = vmatpush.msra.mxu0 0.0
    %706 = vmatpush.msra.mxu0 0.0
    %707 = vmatpush.msra.mxu0 0.0
    %708 = vmatpush.msra.mxu0 0.0
    %709 = vmatpush.msra.mxu0 0.0
    %710 = vmatpush.msra.mxu0 0.0
    %711 = vmatpush.msra.mxu0 0.0
    %712 = vmatpush.msra.mxu0 0.0
    %713 = vmatpush.msra.mxu0 0.0
    %714 = vmatpush.msra.mxu0 0.0
    %715 = vmatpush.msra.mxu0 0.0
    %716 = vmatpush.msra.mxu0 0.0
    %717 = vmatpush.msra.mxu0 0.0
    %718 = vmatpush.msra.mxu0 0.0
    %719 = vmatpush.msra.mxu0 0.0
    %720 = vmatpush.msra.mxu0 %v198
    %721 = vmatmul.f32.gmra.mxu0 %v703
    %v722 = vpop.f32.mrf.mxu0
    %v723 = vadd.f32 %v700, %v722
    %724 = vdwg.mxu0
    %v725 = vadd.f32 %v723, %v221
    %v726 = vxor.u32 %v725, 2147483648
    %v727 = vmul.f32 %v726, 1.442695
    %v728 = vpow.pop %v727
    %v729 = vadd.f32 %v728, 1.0
    %v730 = vrcp.pop %v729
    %v731 = vmul.f32 %v729, %v730
    %v732 = vsub.f32 1.0, %v731
    %v733 = vmul.f32 %v730, %v732
    %v734 = vadd.f32 %v730, %v733
    %vm735 = vweird.f32 %v729
    %vm736 = vweird.f32 %v730
    %vm737 = vmor %vm735, %vm736
    %v738 = vsel %vm737, %v730, %v734
    %v739 = vand.u32 2147483647, %v729
    %vm740 = vcmp.eq.f32.partialorder %v739, 8.507059e+37
    %v741 = vand.u32 %v729, 2147483648
    %v742 = vor.u32 1.1754944e-38, %v741
    %v743 = vsel %vm740, %v742, %v738
    %v744 = vmul.f32 1.0, %v743
    %v745 = vtanh.pop %v725
    %v746 = vmul.f32 %v744, %v591
    %748 = vrot.lane.b32.xlu0 %v745, 64
    %v749 = vpop.permute.xlu0 %748
    %v751 = vmul.f32 %v744, %v749
    %753 = vrot.lane.b32.xlu0 %v751, 32
    %v754 = vpop.permute.xlu0 %753
    %v756 = vadd.f32 %v746, %v754
    %v757 = vtanh.pop %v756
    %759 = vrot.lane.b32.xlu0 %v757, 64
    %v760 = vpop.permute.xlu0 %759
    %v762 = vmul.f32 %v744, %v760
    %764 = vrot.lane.b32.xlu0 %v762, 32
    %v765 = vpop.permute.xlu0 %764
    %768 = vrot.lane.b32.xlu0 %v666, 64
    %v769 = vpop.permute.xlu0 %768
    %v771 = vsel %vm168, %v765, %v769
    %v773 = vsel %vm276, %v771, 0
    %775 = vmatpush.msra.mxu0 0.0
    %776 = vmatpush.msra.mxu0 0.0
    %777 = vmatpush.msra.mxu0 0.0
    %778 = vmatpush.msra.mxu0 0.0
    %779 = vmatpush.msra.mxu0 0.0
    %780 = vmatpush.msra.mxu0 0.0
    %781 = vmatpush.msra.mxu0 0.0
    %782 = vmatpush.msra.mxu0 0.0
    %783 = vmatpush.msra.mxu0 %v273
    %784 = vmatpush.msra.mxu0 %v272
    %785 = vmatpush.msra.mxu0 %v271
    %786 = vmatpush.msra.mxu0 %v270
    %787 = vmatpush.msra.mxu0 %v269
    %788 = vmatpush.msra.mxu0 %v268
    %789 = vmatpush.msra.mxu0 %v267
    %790 = vmatpush.msra.mxu0 %v266
    %791 = vmatmul.f32.gmra.mxu0 %v773
    %v792 = vpop.f32.mrf.mxu0
    %v793 = vadd.f32 %v275, %v792
    %794 = vdwg.mxu0
    %v795 = vxor.u32 %v793, 2147483648
    %v796 = vmul.f32 %v795, 1.442695
    %v797 = vpow.pop %v796
    %v798 = vadd.f32 %v797, 1.0
    %v799 = vrcp.pop %v798
    %v800 = vmul.f32 %v798, %v799
    %v801 = vsub.f32 1.0, %v800
    %v802 = vmul.f32 %v799, %v801
    %v803 = vadd.f32 %v799, %v802
    %vm804 = vweird.f32 %v798
    %vm805 = vweird.f32 %v799
    %vm806 = vmor %vm804, %vm805
    %v807 = vsel %vm806, %v799, %v803
    %v808 = vand.u32 2147483647, %v798
    %vm809 = vcmp.eq.f32.partialorder %v808, 8.507059e+37
    %v810 = vand.u32 %v798, 2147483648
    %v811 = vor.u32 1.1754944e-38, %v810
    %v812 = vsel %vm809, %v811, %v807
    %v813 = vmul.f32 1.0, %v812
    %v814 = vtanh.pop %v793
    %v815 = vmul.f32 %v813, %v660
    %817 = vrot.lane.b32.xlu0 %v814, 64
    %v818 = vpop.permute.xlu0 %817
    %v820 = vmul.f32 %v813, %v818
    %822 = vrot.lane.b32.xlu0 %v820, 32
    %v823 = vpop.permute.xlu0 %822
    %v825 = vadd.f32 %v815, %v823
    %v826 = vtanh.pop %v825
    %828 = vrot.lane.b32.xlu0 %v826, 64
    %v829 = vpop.permute.xlu0 %828
    %v831 = vmul.f32 %v813, %v829
    %vm832 = vcmp.eq.s32.totalorder %v154, 3
    %v833 = vsel %vm832, 1, 0
    %834 = vset.pattern.permute.xlu0 0
    %835 = vperm.xlu0 %834, %v833
    %v836 = vpop.permute.xlu0 %835
    %vm837 = vcmp.eq.s32.totalorder %v836, 1
    %v838 = vsel %vm837, %v831, %v673
    %839 = vset.pattern.permute.xlu0 4
    %840 = vperm.xlu0 %839, %v153
    %v841 = vpop.permute.xlu0 %840
    %vm842 = vcmp.eq.s32.totalorder %v841, %v156
    %v843 = vsel %vm842, 1, 0
    %v844 = vcvt.s32.f32 %v843
    %v845 = vsel %vm168, %v765, 0
    %847 = vmatpush.msra.mxu0 0.0
    %848 = vmatpush.msra.mxu0 0.0
    %849 = vmatpush.msra.mxu0 0.0
    %850 = vmatpush.msra.mxu0 0.0
    %851 = vmatpush.msra.mxu0 0.0
    %852 = vmatpush.msra.mxu0 0.0
    %853 = vmatpush.msra.mxu0 0.0
    %854 = vmatpush.msra.mxu0 0.0
    %855 = vmatpush.msra.mxu0 0.0
    %856 = vmatpush.msra.mxu0 0.0
    %857 = vmatpush.msra.mxu0 0.0
    %858 = vmatpush.msra.mxu0 0.0
    %859 = vmatpush.msra.mxu0 %v167
    %860 = vmatpush.msra.mxu0 %v166
    %861 = vmatpush.msra.mxu0 %v165
    %862 = vmatpush.msra.mxu0 %v164
    %863 = vmatmul.f32.gmra.mxu0 %v845
    %v864 = vpop.f32.mrf.mxu0
    %v865 = vadd.f32 0.0, %v864
    %866 = vdwg.mxu0
    %v868 = vsel %vm192, %v844, 0
    %870 = vmatpush.msra.mxu0 0.0
    %871 = vmatpush.msra.mxu0 0.0
    %872 = vmatpush.msra.mxu0 0.0
    %873 = vmatpush.msra.mxu0 0.0
    %874 = vmatpush.msra.mxu0 0.0
    %875 = vmatpush.msra.mxu0 0.0
    %876 = vmatpush.msra.mxu0 0.0
    %877 = vmatpush.msra.mxu0 0.0
    %878 = vmatpush.msra.mxu0 0.0
    %879 = vmatpush.msra.mxu0 0.0
    %880 = vmatpush.msra.mxu0 0.0
    %881 = vmatpush.msra.mxu0 0.0
    %882 = vmatpush.msra.mxu0 0.0
    %883 = vmatpush.msra.mxu0 0.0
    %884 = vmatpush.msra.mxu0 0.0
    %885 = vmatpush.msra.mxu0 %v198
    %886 = vmatmul.f32.gmra.mxu0 %v868
    %v887 = vpop.f32.mrf.mxu0
    %v888 = vadd.f32 %v865, %v887
    %889 = vdwg.mxu0
    %v890 = vadd.f32 %v888, %v221
    %v891 = vxor.u32 %v890, 2147483648
    %v892 = vmul.f32 %v891, 1.442695
    %v893 = vpow.pop %v892
    %v894 = vadd.f32 %v893, 1.0
    %v895 = vrcp.pop %v894
    %v896 = vmul.f32 %v894, %v895
    %v897 = vsub.f32 1.0, %v896
    %v898 = vmul.f32 %v895, %v897
    %v899 = vadd.f32 %v895, %v898
    %vm900 = vweird.f32 %v894
    %vm901 = vweird.f32 %v895
    %vm902 = vmor %vm900, %vm901
    %v903 = vsel %vm902, %v895, %v899
    %v904 = vand.u32 2147483647, %v894
    %vm905 = vcmp.eq.f32.partialorder %v904, 8.507059e+37
    %v906 = vand.u32 %v894, 2147483648
    %v907 = vor.u32 1.1754944e-38, %v906
    %v908 = vsel %vm905, %v907, %v903
    %v909 = vmul.f32 1.0, %v908
    %v910 = vtanh.pop %v890
    %v911 = vmul.f32 %v909, %v756
    %913 = vrot.lane.b32.xlu0 %v910, 64
    %v914 = vpop.permute.xlu0 %913
    %v916 = vmul.f32 %v909, %v914
    %918 = vrot.lane.b32.xlu0 %v916, 32
    %v919 = vpop.permute.xlu0 %918
    %v921 = vadd.f32 %v911, %v919
    %v922 = vtanh.pop %v921
    %924 = vrot.lane.b32.xlu0 %v922, 64
    %v925 = vpop.permute.xlu0 %924
    %v927 = vmul.f32 %v909, %v925
    %929 = vrot.lane.b32.xlu0 %v927, 32
    %v930 = vpop.permute.xlu0 %929
    %933 = vrot.lane.b32.xlu0 %v831, 64
    %v934 = vpop.permute.xlu0 %933
    %v936 = vsel %vm168, %v930, %v934
    %v938 = vsel %vm276, %v936, 0
    %940 = vmatpush.msra.mxu0 0.0
    %941 = vmatpush.msra.mxu0 0.0
    %942 = vmatpush.msra.mxu0 0.0
    %943 = vmatpush.msra.mxu0 0.0
    %944 = vmatpush.msra.mxu0 0.0
    %945 = vmatpush.msra.mxu0 0.0
    %946 = vmatpush.msra.mxu0 0.0
    %947 = vmatpush.msra.mxu0 0.0
    %948 = vmatpush.msra.mxu0 %v273
    %949 = vmatpush.msra.mxu0 %v272
    %950 = vmatpush.msra.mxu0 %v271
    %951 = vmatpush.msra.mxu0 %v270
    %952 = vmatpush.msra.mxu0 %v269
    %953 = vmatpush.msra.mxu0 %v268
    %954 = vmatpush.msra.mxu0 %v267
    %955 = vmatpush.msra.mxu0 %v266
    %956 = vmatmul.f32.gmra.mxu0 %v938
    %v957 = vpop.f32.mrf.mxu0
    %v958 = vadd.f32 %v275, %v957
    %959 = vdwg.mxu0
    %v960 = vxor.u32 %v958, 2147483648
    %v961 = vmul.f32 %v960, 1.442695
    %v962 = vpow.pop %v961
    %v963 = vadd.f32 %v962, 1.0
    %v964 = vrcp.pop %v963
    %v965 = vmul.f32 %v963, %v964
    %v966 = vsub.f32 1.0, %v965
    %v967 = vmul.f32 %v964, %v966
    %v968 = vadd.f32 %v964, %v967
    %vm969 = vweird.f32 %v963
    %vm970 = vweird.f32 %v964
    %vm971 = vmor %vm969, %vm970
    %v972 = vsel %vm971, %v964, %v968
    %v973 = vand.u32 2147483647, %v963
    %vm974 = vcmp.eq.f32.partialorder %v973, 8.507059e+37
    %v975 = vand.u32 %v963, 2147483648
    %v976 = vor.u32 1.1754944e-38, %v975
    %v977 = vsel %vm974, %v976, %v972
    %v978 = vmul.f32 1.0, %v977
    %v979 = vtanh.pop %v958
    %v980 = vmul.f32 %v978, %v825
    %982 = vrot.lane.b32.xlu0 %v979, 64
    %v983 = vpop.permute.xlu0 %982
    %v985 = vmul.f32 %v978, %v983
    %987 = vrot.lane.b32.xlu0 %v985, 32
    %v988 = vpop.permute.xlu0 %987
    %v990 = vadd.f32 %v980, %v988
    %v991 = vtanh.pop %v990
    %993 = vrot.lane.b32.xlu0 %v991, 64
    %v994 = vpop.permute.xlu0 %993
    %v996 = vmul.f32 %v978, %v994
    %vm997 = vcmp.eq.s32.totalorder %v154, 4
    %v998 = vsel %vm997, 1, 0
    %999 = vset.pattern.permute.xlu0 0
    %1000 = vperm.xlu0 %999, %v998
    %v1001 = vpop.permute.xlu0 %1000
    %vm1002 = vcmp.eq.s32.totalorder %v1001, 1
    %v1003 = vsel %vm1002, %v996, %v838
    %1004 = vset.pattern.permute.xlu0 5
    %1005 = vperm.xlu0 %1004, %v153
    %v1006 = vpop.permute.xlu0 %1005
    %vm1007 = vcmp.eq.s32.totalorder %v1006, %v156
    %v1008 = vsel %vm1007, 1, 0
    %v1009 = vcvt.s32.f32 %v1008
    %v1010 = vsel %vm168, %v930, 0
    %1012 = vmatpush.msra.mxu0 0.0
    %1013 = vmatpush.msra.mxu0 0.0
    %1014 = vmatpush.msra.mxu0 0.0
    %1015 = vmatpush.msra.mxu0 0.0
    %1016 = vmatpush.msra.mxu0 0.0
    %1017 = vmatpush.msra.mxu0 0.0
    %1018 = vmatpush.msra.mxu0 0.0
    %1019 = vmatpush.msra.mxu0 0.0
    %1020 = vmatpush.msra.mxu0 0.0
    %1021 = vmatpush.msra.mxu0 0.0
    %1022 = vmatpush.msra.mxu0 0.0
    %1023 = vmatpush.msra.mxu0 0.0
    %1024 = vmatpush.msra.mxu0 %v167
    %1025 = vmatpush.msra.mxu0 %v166
    %1026 = vmatpush.msra.mxu0 %v165
    %1027 = vmatpush.msra.mxu0 %v164
    %1028 = vmatmul.f32.gmra.mxu0 %v1010
    %v1029 = vpop.f32.mrf.mxu0
    %v1030 = vadd.f32 0.0, %v1029
    %1031 = vdwg.mxu0
    %v1033 = vsel %vm192, %v1009, 0
    %1035 = vmatpush.msra.mxu0 0.0
    %1036 = vmatpush.msra.mxu0 0.0
    %1037 = vmatpush.msra.mxu0 0.0
    %1038 = vmatpush.msra.mxu0 0.0
    %1039 = vmatpush.msra.mxu0 0.0
    %1040 = vmatpush.msra.mxu0 0.0
    %1041 = vmatpush.msra.mxu0 0.0
    %1042 = vmatpush.msra.mxu0 0.0
    %1043 = vmatpush.msra.mxu0 0.0
    %1044 = vmatpush.msra.mxu0 0.0
    %1045 = vmatpush.msra.mxu0 0.0
    %1046 = vmatpush.msra.mxu0 0.0
    %1047 = vmatpush.msra.mxu0 0.0
    %1048 = vmatpush.msra.mxu0 0.0
    %1049 = vmatpush.msra.mxu0 0.0
    %1050 = vmatpush.msra.mxu0 %v198
    %1051 = vmatmul.f32.gmra.mxu0 %v1033
    %v1052 = vpop.f32.mrf.mxu0
    %v1053 = vadd.f32 %v1030, %v1052
    %1054 = vdwg.mxu0
    %v1055 = vadd.f32 %v1053, %v221
    %v1056 = vxor.u32 %v1055, 2147483648
    %v1057 = vmul.f32 %v1056, 1.442695
    %v1058 = vpow.pop %v1057
    %v1059 = vadd.f32 %v1058, 1.0
    %v1060 = vrcp.pop %v1059
    %v1061 = vmul.f32 %v1059, %v1060
    %v1062 = vsub.f32 1.0, %v1061
    %v1063 = vmul.f32 %v1060, %v1062
    %v1064 = vadd.f32 %v1060, %v1063
    %vm1065 = vweird.f32 %v1059
    %vm1066 = vweird.f32 %v1060
    %vm1067 = vmor %vm1065, %vm1066
    %v1068 = vsel %vm1067, %v1060, %v1064
    %v1069 = vand.u32 2147483647, %v1059
    %vm1070 = vcmp.eq.f32.partialorder %v1069, 8.507059e+37
    %v1071 = vand.u32 %v1059, 2147483648
    %v1072 = vor.u32 1.1754944e-38, %v1071
    %v1073 = vsel %vm1070, %v1072, %v1068
    %v1074 = vmul.f32 1.0, %v1073
    %v1075 = vtanh.pop %v1055
    %v1076 = vmul.f32 %v1074, %v921
    %1078 = vrot.lane.b32.xlu0 %v1075, 64
    %v1079 = vpop.permute.xlu0 %1078
    %v1081 = vmul.f32 %v1074, %v1079
    %1083 = vrot.lane.b32.xlu0 %v1081, 32
    %v1084 = vpop.permute.xlu0 %1083
    %v1086 = vadd.f32 %v1076, %v1084
    %v1087 = vtanh.pop %v1086
    %1089 = vrot.lane.b32.xlu0 %v1087, 64
    %v1090 = vpop.permute.xlu0 %1089
    %v1092 = vmul.f32 %v1074, %v1090
    %1094 = vrot.lane.b32.xlu0 %v1092, 32
    %v1095 = vpop.permute.xlu0 %1094
    %1098 = vrot.lane.b32.xlu0 %v996, 64
    %v1099 = vpop.permute.xlu0 %1098
    %v1101 = vsel %vm168, %v1095, %v1099
    %v1103 = vsel %vm276, %v1101, 0
    %1105 = vmatpush.msra.mxu0 0.0
    %1106 = vmatpush.msra.mxu0 0.0
    %1107 = vmatpush.msra.mxu0 0.0
    %1108 = vmatpush.msra.mxu0 0.0
    %1109 = vmatpush.msra.mxu0 0.0
    %1110 = vmatpush.msra.mxu0 0.0
    %1111 = vmatpush.msra.mxu0 0.0
    %1112 = vmatpush.msra.mxu0 0.0
    %1113 = vmatpush.msra.mxu0 %v273
    %1114 = vmatpush.msra.mxu0 %v272
    %1115 = vmatpush.msra.mxu0 %v271
    %1116 = vmatpush.msra.mxu0 %v270
    %1117 = vmatpush.msra.mxu0 %v269
    %1118 = vmatpush.msra.mxu0 %v268
    %1119 = vmatpush.msra.mxu0 %v267
    %1120 = vmatpush.msra.mxu0 %v266
    %1121 = vmatmul.f32.gmra.mxu0 %v1103
    %v1122 = vpop.f32.mrf.mxu0
    %v1123 = vadd.f32 %v275, %v1122
    %1124 = vdwg.mxu0
    %v1125 = vxor.u32 %v1123, 2147483648
    %v1126 = vmul.f32 %v1125, 1.442695
    %v1127 = vpow.pop %v1126
    %v1128 = vadd.f32 %v1127, 1.0
    %v1129 = vrcp.pop %v1128
    %v1130 = vmul.f32 %v1128, %v1129
    %v1131 = vsub.f32 1.0, %v1130
    %v1132 = vmul.f32 %v1129, %v1131
    %v1133 = vadd.f32 %v1129, %v1132
    %vm1134 = vweird.f32 %v1128
    %vm1135 = vweird.f32 %v1129
    %vm1136 = vmor %vm1134, %vm1135
    %v1137 = vsel %vm1136, %v1129, %v1133
    %v1138 = vand.u32 2147483647, %v1128
    %vm1139 = vcmp.eq.f32.partialorder %v1138, 8.507059e+37
    %v1140 = vand.u32 %v1128, 2147483648
    %v1141 = vor.u32 1.1754944e-38, %v1140
    %v1142 = vsel %vm1139, %v1141, %v1137
    %v1143 = vmul.f32 1.0, %v1142
    %v1144 = vtanh.pop %v1123
    %v1145 = vmul.f32 %v1143, %v990
    %1147 = vrot.lane.b32.xlu0 %v1144, 64
    %v1148 = vpop.permute.xlu0 %1147
    %v1150 = vmul.f32 %v1143, %v1148
    %1152 = vrot.lane.b32.xlu0 %v1150, 32
    %v1153 = vpop.permute.xlu0 %1152
    %v1155 = vadd.f32 %v1145, %v1153
    %v1156 = vtanh.pop %v1155
    %1158 = vrot.lane.b32.xlu0 %v1156, 64
    %v1159 = vpop.permute.xlu0 %1158
    %v1161 = vmul.f32 %v1143, %v1159
    %vm1162 = vcmp.eq.s32.totalorder %v154, 5
    %v1163 = vsel %vm1162, 1, 0
    %1164 = vset.pattern.permute.xlu0 0
    %1165 = vperm.xlu0 %1164, %v1163
    %v1166 = vpop.permute.xlu0 %1165
    %vm1167 = vcmp.eq.s32.totalorder %v1166, 1
    %v1168 = vsel %vm1167, %v1161, %v1003
    %1169 = vset.pattern.permute.xlu0 6
    %1170 = vperm.xlu0 %1169, %v153
    %v1171 = vpop.permute.xlu0 %1170
    %vm1172 = vcmp.eq.s32.totalorder %v1171, %v156
    %v1173 = vsel %vm1172, 1, 0
    %v1174 = vcvt.s32.f32 %v1173
    %v1175 = vsel %vm168, %v1095, 0
    %1177 = vmatpush.msra.mxu0 0.0
    %1178 = vmatpush.msra.mxu0 0.0
    %1179 = vmatpush.msra.mxu0 0.0
    %1180 = vmatpush.msra.mxu0 0.0
    %1181 = vmatpush.msra.mxu0 0.0
    %1182 = vmatpush.msra.mxu0 0.0
    %1183 = vmatpush.msra.mxu0 0.0
    %1184 = vmatpush.msra.mxu0 0.0
    %1185 = vmatpush.msra.mxu0 0.0
    %1186 = vmatpush.msra.mxu0 0.0
    %1187 = vmatpush.msra.mxu0 0.0
    %1188 = vmatpush.msra.mxu0 0.0
    %1189 = vmatpush.msra.mxu0 %v167
    %1190 = vmatpush.msra.mxu0 %v166
    %1191 = vmatpush.msra.mxu0 %v165
    %1192 = vmatpush.msra.mxu0 %v164
    %1193 = vmatmul.f32.gmra.mxu0 %v1175
    %v1194 = vpop.f32.mrf.mxu0
    %v1195 = vadd.f32 0.0, %v1194
    %1196 = vdwg.mxu0
    %v1198 = vsel %vm192, %v1174, 0
    %1200 = vmatpush.msra.mxu0 0.0
    %1201 = vmatpush.msra.mxu0 0.0
    %1202 = vmatpush.msra.mxu0 0.0
    %1203 = vmatpush.msra.mxu0 0.0
    %1204 = vmatpush.msra.mxu0 0.0
    %1205 = vmatpush.msra.mxu0 0.0
    %1206 = vmatpush.msra.mxu0 0.0
    %1207 = vmatpush.msra.mxu0 0.0
    %1208 = vmatpush.msra.mxu0 0.0
    %1209 = vmatpush.msra.mxu0 0.0
    %1210 = vmatpush.msra.mxu0 0.0
    %1211 = vmatpush.msra.mxu0 0.0
    %1212 = vmatpush.msra.mxu0 0.0
    %1213 = vmatpush.msra.mxu0 0.0
    %1214 = vmatpush.msra.mxu0 0.0
    %1215 = vmatpush.msra.mxu0 %v198
    %1216 = vmatmul.f32.gmra.mxu0 %v1198
    %v1217 = vpop.f32.mrf.mxu0
    %v1218 = vadd.f32 %v1195, %v1217
    %1219 = vdwg.mxu0
    %v1220 = vadd.f32 %v1218, %v221
    %v1221 = vxor.u32 %v1220, 2147483648
    %v1222 = vmul.f32 %v1221, 1.442695
    %v1223 = vpow.pop %v1222
    %v1224 = vadd.f32 %v1223, 1.0
    %v1225 = vrcp.pop %v1224
    %v1226 = vmul.f32 %v1224, %v1225
    %v1227 = vsub.f32 1.0, %v1226
    %v1228 = vmul.f32 %v1225, %v1227
    %v1229 = vadd.f32 %v1225, %v1228
    %vm1230 = vweird.f32 %v1224
    %vm1231 = vweird.f32 %v1225
    %vm1232 = vmor %vm1230, %vm1231
    %v1233 = vsel %vm1232, %v1225, %v1229
    %v1234 = vand.u32 2147483647, %v1224
    %vm1235 = vcmp.eq.f32.partialorder %v1234, 8.507059e+37
    %v1236 = vand.u32 %v1224, 2147483648
    %v1237 = vor.u32 1.1754944e-38, %v1236
    %v1238 = vsel %vm1235, %v1237, %v1233
    %v1239 = vmul.f32 1.0, %v1238
    %v1240 = vtanh.pop %v1220
    %v1241 = vmul.f32 %v1239, %v1086
    %1243 = vrot.lane.b32.xlu0 %v1240, 64
    %v1244 = vpop.permute.xlu0 %1243
    %v1246 = vmul.f32 %v1239, %v1244
    %1248 = vrot.lane.b32.xlu0 %v1246, 32
    %v1249 = vpop.permute.xlu0 %1248
    %v1251 = vadd.f32 %v1241, %v1249
    %v1252 = vtanh.pop %v1251
    %1254 = vrot.lane.b32.xlu0 %v1252, 64
    %v1255 = vpop.permute.xlu0 %1254
    %v1257 = vmul.f32 %v1239, %v1255
    %1259 = vrot.lane.b32.xlu0 %v1257, 32
    %v1260 = vpop.permute.xlu0 %1259
    %1263 = vrot.lane.b32.xlu0 %v1161, 64
    %v1264 = vpop.permute.xlu0 %1263
    %v1266 = vsel %vm168, %v1260, %v1264
    %v1268 = vsel %vm276, %v1266, 0
    %1270 = vmatpush.msra.mxu0 0.0
    %1271 = vmatpush.msra.mxu0 0.0
    %1272 = vmatpush.msra.mxu0 0.0
    %1273 = vmatpush.msra.mxu0 0.0
    %1274 = vmatpush.msra.mxu0 0.0
    %1275 = vmatpush.msra.mxu0 0.0
    %1276 = vmatpush.msra.mxu0 0.0
    %1277 = vmatpush.msra.mxu0 0.0
    %1278 = vmatpush.msra.mxu0 %v273
    %1279 = vmatpush.msra.mxu0 %v272
    %1280 = vmatpush.msra.mxu0 %v271
    %1281 = vmatpush.msra.mxu0 %v270
    %1282 = vmatpush.msra.mxu0 %v269
    %1283 = vmatpush.msra.mxu0 %v268
    %1284 = vmatpush.msra.mxu0 %v267
    %1285 = vmatpush.msra.mxu0 %v266
    %1286 = vmatmul.f32.gmra.mxu0 %v1268
    %v1287 = vpop.f32.mrf.mxu0
    %v1288 = vadd.f32 %v275, %v1287
    %1289 = vdwg.mxu0
    %v1290 = vxor.u32 %v1288, 2147483648
    %v1291 = vmul.f32 %v1290, 1.442695
    %v1292 = vpow.pop %v1291
    %v1293 = vadd.f32 %v1292, 1.0
    %v1294 = vrcp.pop %v1293
    %v1295 = vmul.f32 %v1293, %v1294
    %v1296 = vsub.f32 1.0, %v1295
    %v1297 = vmul.f32 %v1294, %v1296
    %v1298 = vadd.f32 %v1294, %v1297
    %vm1299 = vweird.f32 %v1293
    %vm1300 = vweird.f32 %v1294
    %vm1301 = vmor %vm1299, %vm1300
    %v1302 = vsel %vm1301, %v1294, %v1298
    %v1303 = vand.u32 2147483647, %v1293
    %vm1304 = vcmp.eq.f32.partialorder %v1303, 8.507059e+37
    %v1305 = vand.u32 %v1293, 2147483648
    %v1306 = vor.u32 1.1754944e-38, %v1305
    %v1307 = vsel %vm1304, %v1306, %v1302
    %v1308 = vmul.f32 1.0, %v1307
    %v1309 = vtanh.pop %v1288
    %v1310 = vmul.f32 %v1308, %v1155
    %1312 = vrot.lane.b32.xlu0 %v1309, 64
    %v1313 = vpop.permute.xlu0 %1312
    %v1315 = vmul.f32 %v1308, %v1313
    %1317 = vrot.lane.b32.xlu0 %v1315, 32
    %v1318 = vpop.permute.xlu0 %1317
    %v1320 = vadd.f32 %v1310, %v1318
    %v1321 = vtanh.pop %v1320
    %1323 = vrot.lane.b32.xlu0 %v1321, 64
    %v1324 = vpop.permute.xlu0 %1323
    %v1326 = vmul.f32 %v1308, %v1324
    %vm1327 = vcmp.eq.s32.totalorder %v154, 6
    %v1328 = vsel %vm1327, 1, 0
    %1329 = vset.pattern.permute.xlu0 0
    %1330 = vperm.xlu0 %1329, %v1328
    %v1331 = vpop.permute.xlu0 %1330
    %vm1332 = vcmp.eq.s32.totalorder %v1331, 1
    %v1333 = vsel %vm1332, %v1326, %v1168
    %1334 = vset.pattern.permute.xlu0 7
    %1335 = vperm.xlu0 %1334, %v153
    %v1336 = vpop.permute.xlu0 %1335
    %vm1337 = vcmp.eq.s32.totalorder %v1336, %v156
    %v1338 = vsel %vm1337, 1, 0
    %v1339 = vcvt.s32.f32 %v1338
    %v1340 = vsel %vm168, %v1260, 0
    %1342 = vmatpush.msra.mxu0 0.0
    %1343 = vmatpush.msra.mxu0 0.0
    %1344 = vmatpush.msra.mxu0 0.0
    %1345 = vmatpush.msra.mxu0 0.0
    %1346 = vmatpush.msra.mxu0 0.0
    %1347 = vmatpush.msra.mxu0 0.0
    %1348 = vmatpush.msra.mxu0 0.0
    %1349 = vmatpush.msra.mxu0 0.0
    %1350 = vmatpush.msra.mxu0 0.0
    %1351 = vmatpush.msra.mxu0 0.0
    %1352 = vmatpush.msra.mxu0 0.0
    %1353 = vmatpush.msra.mxu0 0.0
    %1354 = vmatpush.msra.mxu0 %v167
    %1355 = vmatpush.msra.mxu0 %v166
    %1356 = vmatpush.msra.mxu0 %v165
    %1357 = vmatpush.msra.mxu0 %v164
    %1358 = vmatmul.f32.gmra.mxu0 %v1340
    %v1359 = vpop.f32.mrf.mxu0
    %v1360 = vadd.f32 0.0, %v1359
    %1361 = vdwg.mxu0
    %v1363 = vsel %vm192, %v1339, 0
    %1365 = vmatpush.msra.mxu0 0.0
    %1366 = vmatpush.msra.mxu0 0.0
    %1367 = vmatpush.msra.mxu0 0.0
    %1368 = vmatpush.msra.mxu0 0.0
    %1369 = vmatpush.msra.mxu0 0.0
    %1370 = vmatpush.msra.mxu0 0.0
    %1371 = vmatpush.msra.mxu0 0.0
    %1372 = vmatpush.msra.mxu0 0.0
    %1373 = vmatpush.msra.mxu0 0.0
    %1374 = vmatpush.msra.mxu0 0.0
    %1375 = vmatpush.msra.mxu0 0.0
    %1376 = vmatpush.msra.mxu0 0.0
    %1377 = vmatpush.msra.mxu0 0.0
    %1378 = vmatpush.msra.mxu0 0.0
    %1379 = vmatpush.msra.mxu0 0.0
    %1380 = vmatpush.msra.mxu0 %v198
    %1381 = vmatmul.f32.gmra.mxu0 %v1363
    %v1382 = vpop.f32.mrf.mxu0
    %v1383 = vadd.f32 %v1360, %v1382
    %1384 = vdwg.mxu0
    %v1385 = vadd.f32 %v1383, %v221
    %v1386 = vxor.u32 %v1385, 2147483648
    %v1387 = vmul.f32 %v1386, 1.442695
    %v1388 = vpow.pop %v1387
    %v1389 = vadd.f32 %v1388, 1.0
    %v1390 = vrcp.pop %v1389
    %v1391 = vmul.f32 %v1389, %v1390
    %v1392 = vsub.f32 1.0, %v1391
    %v1393 = vmul.f32 %v1390, %v1392
    %v1394 = vadd.f32 %v1390, %v1393
    %vm1395 = vweird.f32 %v1389
    %vm1396 = vweird.f32 %v1390
    %vm1397 = vmor %vm1395, %vm1396
    %v1398 = vsel %vm1397, %v1390, %v1394
    %v1399 = vand.u32 2147483647, %v1389
    %vm1400 = vcmp.eq.f32.partialorder %v1399, 8.507059e+37
    %v1401 = vand.u32 %v1389, 2147483648
    %v1402 = vor.u32 1.1754944e-38, %v1401
    %v1403 = vsel %vm1400, %v1402, %v1398
    %v1404 = vmul.f32 1.0, %v1403
    %v1405 = vtanh.pop %v1385
    %v1406 = vmul.f32 %v1404, %v1251
    %1408 = vrot.lane.b32.xlu0 %v1405, 64
    %v1409 = vpop.permute.xlu0 %1408
    %v1411 = vmul.f32 %v1404, %v1409
    %1413 = vrot.lane.b32.xlu0 %v1411, 32
    %v1414 = vpop.permute.xlu0 %1413
    %v1416 = vadd.f32 %v1406, %v1414
    %v1417 = vtanh.pop %v1416
    %1419 = vrot.lane.b32.xlu0 %v1417, 64
    %v1420 = vpop.permute.xlu0 %1419
    %v1422 = vmul.f32 %v1404, %v1420
    %1424 = vrot.lane.b32.xlu0 %v1422, 32
    %v1425 = vpop.permute.xlu0 %1424
    %1428 = vrot.lane.b32.xlu0 %v1326, 64
    %v1429 = vpop.permute.xlu0 %1428
    %v1431 = vsel %vm168, %v1425, %v1429
    %v1433 = vsel %vm276, %v1431, 0
    %1435 = vmatpush.msra.mxu0 0.0
    %1436 = vmatpush.msra.mxu0 0.0
    %1437 = vmatpush.msra.mxu0 0.0
    %1438 = vmatpush.msra.mxu0 0.0
    %1439 = vmatpush.msra.mxu0 0.0
    %1440 = vmatpush.msra.mxu0 0.0
    %1441 = vmatpush.msra.mxu0 0.0
    %1442 = vmatpush.msra.mxu0 0.0
    %1443 = vmatpush.msra.mxu0 %v273
    %1444 = vmatpush.msra.mxu0 %v272
    %1445 = vmatpush.msra.mxu0 %v271
    %1446 = vmatpush.msra.mxu0 %v270
    %1447 = vmatpush.msra.mxu0 %v269
    %1448 = vmatpush.msra.mxu0 %v268
    %1449 = vmatpush.msra.mxu0 %v267
    %1450 = vmatpush.msra.mxu0 %v266
    %1451 = vmatmul.f32.gmra.mxu0 %v1433
    %v1452 = vpop.f32.mrf.mxu0
    %v1453 = vadd.f32 %v275, %v1452
    %1454 = vdwg.mxu0
    %v1455 = vxor.u32 %v1453, 2147483648
    %v1456 = vmul.f32 %v1455, 1.442695
    %v1457 = vpow.pop %v1456
    %v1458 = vadd.f32 %v1457, 1.0
    %v1459 = vrcp.pop %v1458
    %v1460 = vmul.f32 %v1458, %v1459
    %v1461 = vsub.f32 1.0, %v1460
    %v1462 = vmul.f32 %v1459, %v1461
    %v1463 = vadd.f32 %v1459, %v1462
    %vm1464 = vweird.f32 %v1458
    %vm1465 = vweird.f32 %v1459
    %vm1466 = vmor %vm1464, %vm1465
    %v1467 = vsel %vm1466, %v1459, %v1463
    %v1468 = vand.u32 2147483647, %v1458
    %vm1469 = vcmp.eq.f32.partialorder %v1468, 8.507059e+37
    %v1470 = vand.u32 %v1458, 2147483648
    %v1471 = vor.u32 1.1754944e-38, %v1470
    %v1472 = vsel %vm1469, %v1471, %v1467
    %v1473 = vmul.f32 1.0, %v1472
    %v1474 = vtanh.pop %v1453
    %v1475 = vmul.f32 %v1473, %v1320
    %1477 = vrot.lane.b32.xlu0 %v1474, 64
    %v1478 = vpop.permute.xlu0 %1477
    %v1480 = vmul.f32 %v1473, %v1478
    %1482 = vrot.lane.b32.xlu0 %v1480, 32
    %v1483 = vpop.permute.xlu0 %1482
    %v1485 = vadd.f32 %v1475, %v1483
    %v1486 = vtanh.pop %v1485
    %1488 = vrot.lane.b32.xlu0 %v1486, 64
    %v1489 = vpop.permute.xlu0 %1488
    %v1491 = vmul.f32 %v1473, %v1489
    %vm1492 = vcmp.eq.s32.totalorder %v154, 7
    %v1493 = vsel %vm1492, 1, 0
    %1494 = vset.pattern.permute.xlu0 0
    %1495 = vperm.xlu0 %1494, %v1493
    %v1496 = vpop.permute.xlu0 %1495
    %vm1497 = vcmp.eq.s32.totalorder %v1496, 1
    %v1498 = vsel %vm1497, %v1491, %v1333
    %v1499 = vmul.f32 %v1498, %v1498
    %1501 = vrot.lane.b32.xlu0 %v1499, 32
    %v1502 = vpop.permute.xlu0 %1501
    %vm1504 = vcmask 254976
    %v1505 = vsel %vm1504, %v1502, 0.0
    %1506 = vadd.xlane.f32.xlu0 %v1505
    %v1507 = vpop.xlane.xlu0 %1506
    %v1508 = vrsqrt.pop %v1507
    %v1509 = vmul.f32 %v1508, %v1507
    %v1510 = vmul.f32 %v1509, %v1508
    %v1511 = vmul.f32 0.5, %v1510
    %v1512 = vsub.f32 1.5, %v1511
    %v1513 = vmul.f32 %v1508, %v1512
    %v1514 = vmul.f32 %v1507, %v1513
    %vm1515 = vcmp.eq.f32.partialorder %v1507, inf
    %v1516 = vsel %vm1515, %v1507, %v1514
    %vm1517 = vcmp.eq.f32.partialorder %v1507, 0.0
    %v1518 = vand.u32 %v1507, 2147483648
    %v1519 = vsel %vm1517, %v1518, %v1516
    %v1520 = vmax.f32 %v1519, 1e-12
    %v1521 = vrcp.pop %v1520
    %v1522 = vmul.f32 %v1520, %v1521
    %v1523 = vsub.f32 1.0, %v1522
    %v1524 = vmul.f32 %v1521, %v1523
    %v1525 = vadd.f32 %v1521, %v1524
    %vm1526 = vweird.f32 %v1520
    %vm1527 = vweird.f32 %v1521
    %vm1528 = vmor %vm1526, %vm1527
    %v1529 = vsel %vm1528, %v1521, %v1525
    %v1530 = vand.u32 2147483647, %v1520
    %vm1531 = vcmp.eq.f32.partialorder %v1530, 8.507059e+37
    %v1532 = vand.u32 %v1520, 2147483648
    %v1533 = vor.u32 1.1754944e-38, %v1532
    %v1534 = vsel %vm1531, %v1533, %v1529
    %v1535 = vmul.f32 %v1498, %v1534
    %1537 = vrot.lane.b32.xlu0 %v1535, 32
    %v1538 = vpop.permute.xlu0 %1537
    %1540 = vst.msk [vmem:[#allocation15] sm:$0x3] %vm1504, %v1538
    %v1541 = vld [vmem:[%s2] sm:$0x3]
    %1543 = vrot.lane.b32.xlu0 %v1541, 96
    %v1544 = vpop.permute.xlu0 %1543
    %v1546 = vadd.f32 %v1535, %v1544
    %v1547 = vld [vmem:[#allocation9] sm:$0xff]
    %v1548 = vld [vmem:[#allocation9 + $0x8] sm:$0xff]
    %v1549 = vld [vmem:[#allocation9 + $0x10] sm:$0xff]
    %v1550 = vld [vmem:[#allocation9 + $0x18] sm:$0xff]
    %1552 = vrot.lane.b32.xlu0 %v1546, 32
    %v1553 = vpop.permute.xlu0 %1552
    %v1554 = vsel %vm168, %v1553, 0
    %1556 = vmatpush.msra.mxu0 0.0
    %1557 = vmatpush.msra.mxu0 0.0
    %1558 = vmatpush.msra.mxu0 0.0
    %1559 = vmatpush.msra.mxu0 0.0
    %1560 = vmatpush.msra.mxu0 0.0
    %1561 = vmatpush.msra.mxu0 0.0
    %1562 = vmatpush.msra.mxu0 0.0
    %1563 = vmatpush.msra.mxu0 0.0
    %1564 = vmatpush.msra.mxu0 0.0
    %1565 = vmatpush.msra.mxu0 0.0
    %1566 = vmatpush.msra.mxu0 0.0
    %1567 = vmatpush.msra.mxu0 0.0
    %1568 = vmatpush.msra.mxu0 %v1550
    %1569 = vmatpush.msra.mxu0 %v1549
    %1570 = vmatpush.msra.mxu0 %v1548
    %1571 = vmatpush.msra.mxu0 %v1547
    %1572 = vmatmul.f32.gmra.mxu0 %v1554
    %v1573 = vpop.f32.mrf.mxu0
    %v1574 = vadd.f32 0.0, %v1573
    %1575 = vdwg.mxu0
    %v1576 = vld [vmem:[#allocation8] sm:$0xf]
    %v1578 = vsel %vm196, %v1576, 0
    %1580 = vmatpush.msra.mxu0 0.0
    %1581 = vmatpush.msra.mxu0 0.0
    %1582 = vmatpush.msra.mxu0 0.0
    %1583 = vmatpush.msra.mxu0 0.0
    %1584 = vmatpush.msra.mxu0 0.0
    %1585 = vmatpush.msra.mxu0 0.0
    %1586 = vmatpush.msra.mxu0 0.0
    %1587 = vmatpush.msra.mxu0 0.0
    %1588 = vmatpush.msra.mxu0 0.0
    %1589 = vmatpush.msra.mxu0 0.0
    %1590 = vmatpush.msra.mxu0 0.0
    %1591 = vmatpush.msra.mxu0 0.0
    %1592 = vmatpush.msra.mxu0 0.0
    %1593 = vmatpush.msra.mxu0 0.0
    %1594 = vmatpush.msra.mxu0 0.0
    %1595 = vmatpush.msra.mxu0 %v1578
    %1596 = vmatmul.f32.gmra.mxu0 %v194
    %v1597 = vpop.f32.mrf.mxu0
    %v1598 = vadd.f32 0.0, %v1597
    %1599 = vdwg.mxu0
    %v1600 = vadd.f32 %v1574, %v1598
    %v1601 = vld [vmem:[#allocation11] sm:$0xff]
    %v1602 = vld [vmem:[#allocation11 + $0x8] sm:$0xff]
    %v1603 = vld [vmem:[#allocation11 + $0x10] sm:$0xff]
    %v1604 = vld [vmem:[#allocation11 + $0x18] sm:$0xff]
    %1605 = vmatpush.msra.mxu0 0.0
    %1606 = vmatpush.msra.mxu0 0.0
    %1607 = vmatpush.msra.mxu0 0.0
    %1608 = vmatpush.msra.mxu0 0.0
    %1609 = vmatpush.msra.mxu0 0.0
    %1610 = vmatpush.msra.mxu0 0.0
    %1611 = vmatpush.msra.mxu0 0.0
    %1612 = vmatpush.msra.mxu0 0.0
    %1613 = vmatpush.msra.mxu0 0.0
    %1614 = vmatpush.msra.mxu0 0.0
    %1615 = vmatpush.msra.mxu0 0.0
    %1616 = vmatpush.msra.mxu0 0.0
    %1617 = vmatpush.msra.mxu0 %v1604
    %1618 = vmatpush.msra.mxu0 %v1603
    %1619 = vmatpush.msra.mxu0 %v1602
    %1620 = vmatpush.msra.mxu0 %v1601
    %1621 = vmatmul.f32.gmra.mxu0 %v170
    %v1622 = vpop.f32.mrf.mxu0
    %v1623 = vadd.f32 0.0, %v1622
    %1624 = vdwg.mxu0
    %v1625 = vadd.f32 %v1600, %v1623
    %v1626 = vld [vmem:[#allocation14] sm:$0x1]
    %v1627 = vperm.slane %v1626, 0
    %v1628 = vadd.f32 %v1625, %v1627
    %v1629 = vxor.u32 %v1628, 2147483648
    %v1630 = vmul.f32 %v1629, 1.442695
    %v1631 = vpow.pop %v1630
    %v1632 = vadd.f32 %v1631, 1.0
    %v1633 = vrcp.pop %v1632
    %v1634 = vmul.f32 %v1632, %v1633
    %v1635 = vsub.f32 1.0, %v1634
    %v1636 = vmul.f32 %v1633, %v1635
    %v1637 = vadd.f32 %v1633, %v1636
    %vm1638 = vweird.f32 %v1632
    %vm1639 = vweird.f32 %v1633
    %vm1640 = vmor %vm1638, %vm1639
    %v1641 = vsel %vm1640, %v1633, %v1637
    %v1642 = vand.u32 2147483647, %v1632
    %vm1643 = vcmp.eq.f32.partialorder %v1642, 8.507059e+37
    %v1644 = vand.u32 %v1632, 2147483648
    %v1645 = vor.u32 1.1754944e-38, %v1644
    %v1646 = vsel %vm1643, %v1645, %v1641
    %v1647 = vmul.f32 1.0, %v1646
    %v1648 = vtanh.pop %v1628
    %v1649 = vmul.f32 %v1647, 0.0
    %1651 = vrot.lane.b32.xlu0 %v1648, 64
    %v1652 = vpop.permute.xlu0 %1651
    %v1654 = vmul.f32 %v1647, %v1652
    %1656 = vrot.lane.b32.xlu0 %v1654, 32
    %v1657 = vpop.permute.xlu0 %1656
    %v1659 = vadd.f32 %v1649, %v1657
    %v1660 = vtanh.pop %v1659
    %1662 = vrot.lane.b32.xlu0 %v1660, 64
    %v1663 = vpop.permute.xlu0 %1662
    %v1665 = vmul.f32 %v1647, %v1663
    %1667 = vrot.lane.b32.xlu0 %v1665, 32
    %v1668 = vpop.permute.xlu0 %1667
    %v1670 = vsel %vm168, %v1668, 0.0
    %s1671 = scalar_lea.vmem [#allocation12], 64
    %v1672 = vld [vmem:[%s1671] sm:$0xff]
    %v1673 = vld [vmem:[%s1671 + $0x8] sm:$0xff]
    %v1674 = vld [vmem:[%s1671 + $0x10] sm:$0xff]
    %v1675 = vld [vmem:[%s1671 + $0x18] sm:$0xff]
    %v1676 = vld [vmem:[%s1671 + $0x20] sm:$0xff]
    %v1677 = vld [vmem:[%s1671 + $0x28] sm:$0xff]
    %v1678 = vld [vmem:[%s1671 + $0x30] sm:$0xff]
    %v1679 = vld [vmem:[%s1671 + $0x38] sm:$0xff]
    %v1680 = vld [vmem:[#allocation14 + $0x1] sm:$0x1]
    %v1681 = vperm.slane %v1680, 0
    %v1683 = vsel %vm276, %v1670, 0
    %1685 = vmatpush.msra.mxu0 0.0
    %1686 = vmatpush.msra.mxu0 0.0
    %1687 = vmatpush.msra.mxu0 0.0
    %1688 = vmatpush.msra.mxu0 0.0
    %1689 = vmatpush.msra.mxu0 0.0
    %1690 = vmatpush.msra.mxu0 0.0
    %1691 = vmatpush.msra.mxu0 0.0
    %1692 = vmatpush.msra.mxu0 0.0
    %1693 = vmatpush.msra.mxu0 %v1679
    %1694 = vmatpush.msra.mxu0 %v1678
    %1695 = vmatpush.msra.mxu0 %v1677
    %1696 = vmatpush.msra.mxu0 %v1676
    %1697 = vmatpush.msra.mxu0 %v1675
    %1698 = vmatpush.msra.mxu0 %v1674
    %1699 = vmatpush.msra.mxu0 %v1673
    %1700 = vmatpush.msra.mxu0 %v1672
    %1701 = vmatmul.f32.gmra.mxu0 %v1683
    %v1702 = vpop.f32.mrf.mxu0
    %v1703 = vadd.f32 %v1681, %v1702
    %1704 = vdwg.mxu0
    %v1705 = vxor.u32 %v1703, 2147483648
    %v1706 = vmul.f32 %v1705, 1.442695
    %v1707 = vpow.pop %v1706
    %v1708 = vadd.f32 %v1707, 1.0
    %v1709 = vrcp.pop %v1708
    %v1710 = vmul.f32 %v1708, %v1709
    %v1711 = vsub.f32 1.0, %v1710
    %v1712 = vmul.f32 %v1709, %v1711
    %v1713 = vadd.f32 %v1709, %v1712
    %vm1714 = vweird.f32 %v1708
    %vm1715 = vweird.f32 %v1709
    %vm1716 = vmor %vm1714, %vm1715
    %v1717 = vsel %vm1716, %v1709, %v1713
    %v1718 = vand.u32 2147483647, %v1708
    %vm1719 = vcmp.eq.f32.partialorder %v1718, 8.507059e+37
    %v1720 = vand.u32 %v1708, 2147483648
    %v1721 = vor.u32 1.1754944e-38, %v1720
    %v1722 = vsel %vm1719, %v1721, %v1717
    %v1723 = vmul.f32 1.0, %v1722
    %v1724 = vtanh.pop %v1703
    %v1725 = vmul.f32 %v1723, 0.0
    %1727 = vrot.lane.b32.xlu0 %v1724, 64
    %v1728 = vpop.permute.xlu0 %1727
    %v1730 = vmul.f32 %v1723, %v1728
    %1732 = vrot.lane.b32.xlu0 %v1730, 32
    %v1733 = vpop.permute.xlu0 %1732
    %v1735 = vadd.f32 %v1725, %v1733
    %v1736 = vtanh.pop %v1735
    %1738 = vrot.lane.b32.xlu0 %v1736, 64
    %v1739 = vpop.permute.xlu0 %1738
    %v1741 = vmul.f32 %v1723, %v1739
    %1743 = vrot.lane.b32.xlu0 %v1741, 32
    %v1744 = vpop.permute.xlu0 %1743
    %1746 = vst.msk [vmem:[#allocation2] sm:$0x3] %vm1504, %v1744
    %v1747 = vld [vmem:[#allocation8] sm:$0xf]
    %v1749 = vsel %vm196, %v1747, 0
    %1751 = vmatpush.msra.mxu0 0.0
    %1752 = vmatpush.msra.mxu0 0.0
    %1753 = vmatpush.msra.mxu0 0.0
    %1754 = vmatpush.msra.mxu0 0.0
    %1755 = vmatpush.msra.mxu0 0.0
    %1756 = vmatpush.msra.mxu0 0.0
    %1757 = vmatpush.msra.mxu0 0.0
    %1758 = vmatpush.msra.mxu0 0.0
    %1759 = vmatpush.msra.mxu0 0.0
    %1760 = vmatpush.msra.mxu0 0.0
    %1761 = vmatpush.msra.mxu0 0.0
    %1762 = vmatpush.msra.mxu0 0.0
    %1763 = vmatpush.msra.mxu0 0.0
    %1764 = vmatpush.msra.mxu0 0.0
    %1765 = vmatpush.msra.mxu0 0.0
    %1766 = vmatpush.msra.mxu0 %v1749
    %1767 = vmatmul.f32.gmra.mxu0 %v373
    %v1768 = vpop.f32.mrf.mxu0
    %v1769 = vadd.f32 0.0, %v1768
    %1770 = vdwg.mxu0
    %v1771 = vadd.f32 %v1574, %v1769
    %v1772 = vld [vmem:[#allocation11] sm:$0xff]
    %v1773 = vld [vmem:[#allocation11 + $0x8] sm:$0xff]
    %v1774 = vld [vmem:[#allocation11 + $0x10] sm:$0xff]
    %v1775 = vld [vmem:[#allocation11 + $0x18] sm:$0xff]
    %v1776 = vsel %vm168, %v1668, 0
    %1778 = vmatpush.msra.mxu0 0.0
    %1779 = vmatpush.msra.mxu0 0.0
    %1780 = vmatpush.msra.mxu0 0.0
    %1781 = vmatpush.msra.mxu0 0.0
    %1782 = vmatpush.msra.mxu0 0.0
    %1783 = vmatpush.msra.mxu0 0.0
    %1784 = vmatpush.msra.mxu0 0.0
    %1785 = vmatpush.msra.mxu0 0.0
    %1786 = vmatpush.msra.mxu0 0.0
    %1787 = vmatpush.msra.mxu0 0.0
    %1788 = vmatpush.msra.mxu0 0.0
    %1789 = vmatpush.msra.mxu0 0.0
    %1790 = vmatpush.msra.mxu0 %v1775
    %1791 = vmatpush.msra.mxu0 %v1774
    %1792 = vmatpush.msra.mxu0 %v1773
    %1793 = vmatpush.msra.mxu0 %v1772
    %1794 = vmatmul.f32.gmra.mxu0 %v1776
    %v1795 = vpop.f32.mrf.mxu0
    %v1796 = vadd.f32 0.0, %v1795
    %1797 = vdwg.mxu0
    %v1798 = vadd.f32 %v1771, %v1796
    %v1799 = vld [vmem:[#allocation14] sm:$0x1]
    %v1800 = vperm.slane %v1799, 0
    %v1801 = vadd.f32 %v1798, %v1800
    %v1802 = vxor.u32 %v1801, 2147483648
    %v1803 = vmul.f32 %v1802, 1.442695
    %v1804 = vpow.pop %v1803
    %v1805 = vadd.f32 %v1804, 1.0
    %v1806 = vrcp.pop %v1805
    %v1807 = vmul.f32 %v1805, %v1806
    %v1808 = vsub.f32 1.0, %v1807
    %v1809 = vmul.f32 %v1806, %v1808
    %v1810 = vadd.f32 %v1806, %v1809
    %vm1811 = vweird.f32 %v1805
    %vm1812 = vweird.f32 %v1806
    %vm1813 = vmor %vm1811, %vm1812
    %v1814 = vsel %vm1813, %v1806, %v1810
    %v1815 = vand.u32 2147483647, %v1805
    %vm1816 = vcmp.eq.f32.partialorder %v1815, 8.507059e+37
    %v1817 = vand.u32 %v1805, 2147483648
    %v1818 = vor.u32 1.1754944e-38, %v1817
    %v1819 = vsel %vm1816, %v1818, %v1814
    %v1820 = vmul.f32 1.0, %v1819
    %v1821 = vtanh.pop %v1801
    %v1822 = vmul.f32 %v1820, %v1659
    %1824 = vrot.lane.b32.xlu0 %v1821, 64
    %v1825 = vpop.permute.xlu0 %1824
    %v1827 = vmul.f32 %v1820, %v1825
    %1829 = vrot.lane.b32.xlu0 %v1827, 32
    %v1830 = vpop.permute.xlu0 %1829
    %v1832 = vadd.f32 %v1822, %v1830
    %v1833 = vtanh.pop %v1832
    %1835 = vrot.lane.b32.xlu0 %v1833, 64
    %v1836 = vpop.permute.xlu0 %1835
    %v1838 = vmul.f32 %v1820, %v1836
    %1840 = vrot.lane.b32.xlu0 %v1838, 32
    %v1841 = vpop.permute.xlu0 %1840
    %1843 = vrot.lane.b32.xlu0 %v1741, 64
    %v1844 = vpop.permute.xlu0 %1843
    %v1846 = vsel %vm168, %v1841, %v1844
    %v1847 = vld [vmem:[%s1671] sm:$0xff]
    %v1848 = vld [vmem:[%s1671 + $0x8] sm:$0xff]
    %v1849 = vld [vmem:[%s1671 + $0x10] sm:$0xff]
    %v1850 = vld [vmem:[%s1671 + $0x18] sm:$0xff]
    %v1851 = vld [vmem:[%s1671 + $0x20] sm:$0xff]
    %v1852 = vld [vmem:[%s1671 + $0x28] sm:$0xff]
    %v1853 = vld [vmem:[%s1671 + $0x30] sm:$0xff]
    %v1854 = vld [vmem:[%s1671 + $0x38] sm:$0xff]
    %v1855 = vld [vmem:[#allocation14 + $0x1] sm:$0x1]
    %v1856 = vperm.slane %v1855, 0
    %v1858 = vsel %vm276, %v1846, 0
    %1860 = vmatpush.msra.mxu0 0.0
    %1861 = vmatpush.msra.mxu0 0.0
    %1862 = vmatpush.msra.mxu0 0.0
    %1863 = vmatpush.msra.mxu0 0.0
    %1864 = vmatpush.msra.mxu0 0.0
    %1865 = vmatpush.msra.mxu0 0.0
    %1866 = vmatpush.msra.mxu0 0.0
    %1867 = vmatpush.msra.mxu0 0.0
    %1868 = vmatpush.msra.mxu0 %v1854
    %1869 = vmatpush.msra.mxu0 %v1853
    %1870 = vmatpush.msra.mxu0 %v1852
    %1871 = vmatpush.msra.mxu0 %v1851
    %1872 = vmatpush.msra.mxu0 %v1850
    %1873 = vmatpush.msra.mxu0 %v1849
    %1874 = vmatpush.msra.mxu0 %v1848
    %1875 = vmatpush.msra.mxu0 %v1847
    %1876 = vmatmul.f32.gmra.mxu0 %v1858
    %v1877 = vpop.f32.mrf.mxu0
    %v1878 = vadd.f32 %v1856, %v1877
    %1879 = vdwg.mxu0
    %v1880 = vxor.u32 %v1878, 2147483648
    %v1881 = vmul.f32 %v1880, 1.442695
    %v1882 = vpow.pop %v1881
    %v1883 = vadd.f32 %v1882, 1.0
    %v1884 = vrcp.pop %v1883
    %v1885 = vmul.f32 %v1883, %v1884
    %v1886 = vsub.f32 1.0, %v1885
    %v1887 = vmul.f32 %v1884, %v1886
    %v1888 = vadd.f32 %v1884, %v1887
    %vm1889 = vweird.f32 %v1883
    %vm1890 = vweird.f32 %v1884
    %vm1891 = vmor %vm1889, %vm1890
    %v1892 = vsel %vm1891, %v1884, %v1888
    %v1893 = vand.u32 2147483647, %v1883
    %vm1894 = vcmp.eq.f32.partialorder %v1893, 8.507059e+37
    %v1895 = vand.u32 %v1883, 2147483648
    %v1896 = vor.u32 1.1754944e-38, %v1895
    %v1897 = vsel %vm1894, %v1896, %v1892
    %v1898 = vmul.f32 1.0, %v1897
    %v1899 = vtanh.pop %v1878
    %v1900 = vmul.f32 %v1898, %v1735
    %1902 = vrot.lane.b32.xlu0 %v1899, 64
    %v1903 = vpop.permute.xlu0 %1902
    %v1905 = vmul.f32 %v1898, %v1903
    %1907 = vrot.lane.b32.xlu0 %v1905, 32
    %v1908 = vpop.permute.xlu0 %1907
    %v1910 = vadd.f32 %v1900, %v1908
    %v1911 = vtanh.pop %v1910
    %1913 = vrot.lane.b32.xlu0 %v1911, 64
    %v1914 = vpop.permute.xlu0 %1913
    %v1916 = vmul.f32 %v1898, %v1914
    %1918 = vrot.lane.b32.xlu0 %v1916, 32
    %v1919 = vpop.permute.xlu0 %1918
    %1921 = vst.msk [vmem:[#allocation2 + $0x2] sm:$0x3] %vm1504, %v1919
    %v1922 = vld [vmem:[#allocation8] sm:$0xf]
    %v1924 = vsel %vm196, %v1922, 0
    %1926 = vmatpush.msra.mxu0 0.0
    %1927 = vmatpush.msra.mxu0 0.0
    %1928 = vmatpush.msra.mxu0 0.0
    %1929 = vmatpush.msra.mxu0 0.0
    %1930 = vmatpush.msra.mxu0 0.0
    %1931 = vmatpush.msra.mxu0 0.0
    %1932 = vmatpush.msra.mxu0 0.0
    %1933 = vmatpush.msra.mxu0 0.0
    %1934 = vmatpush.msra.mxu0 0.0
    %1935 = vmatpush.msra.mxu0 0.0
    %1936 = vmatpush.msra.mxu0 0.0
    %1937 = vmatpush.msra.mxu0 0.0
    %1938 = vmatpush.msra.mxu0 0.0
    %1939 = vmatpush.msra.mxu0 0.0
    %1940 = vmatpush.msra.mxu0 0.0
    %1941 = vmatpush.msra.mxu0 %v1924
    %1942 = vmatmul.f32.gmra.mxu0 %v538
    %v1943 = vpop.f32.mrf.mxu0
    %v1944 = vadd.f32 0.0, %v1943
    %1945 = vdwg.mxu0
    %v1946 = vadd.f32 %v1574, %v1944
    %v1947 = vld [vmem:[#allocation11] sm:$0xff]
    %v1948 = vld [vmem:[#allocation11 + $0x8] sm:$0xff]
    %v1949 = vld [vmem:[#allocation11 + $0x10] sm:$0xff]
    %v1950 = vld [vmem:[#allocation11 + $0x18] sm:$0xff]
    %v1951 = vsel %vm168, %v1841, 0
    %1953 = vmatpush.msra.mxu0 0.0
    %1954 = vmatpush.msra.mxu0 0.0
    %1955 = vmatpush.msra.mxu0 0.0
    %1956 = vmatpush.msra.mxu0 0.0
    %1957 = vmatpush.msra.mxu0 0.0
    %1958 = vmatpush.msra.mxu0 0.0
    %1959 = vmatpush.msra.mxu0 0.0
    %1960 = vmatpush.msra.mxu0 0.0
    %1961 = vmatpush.msra.mxu0 0.0
    %1962 = vmatpush.msra.mxu0 0.0
    %1963 = vmatpush.msra.mxu0 0.0
    %1964 = vmatpush.msra.mxu0 0.0
    %1965 = vmatpush.msra.mxu0 %v1950
    %1966 = vmatpush.msra.mxu0 %v1949
    %1967 = vmatpush.msra.mxu0 %v1948
    %1968 = vmatpush.msra.mxu0 %v1947
    %1969 = vmatmul.f32.gmra.mxu0 %v1951
    %v1970 = vpop.f32.mrf.mxu0
    %v1971 = vadd.f32 0.0, %v1970
    %1972 = vdwg.mxu0
    %v1973 = vadd.f32 %v1946, %v1971
    %v1974 = vld [vmem:[#allocation14] sm:$0x1]
    %v1975 = vperm.slane %v1974, 0
    %v1976 = vadd.f32 %v1973, %v1975
    %v1977 = vxor.u32 %v1976, 2147483648
    %v1978 = vmul.f32 %v1977, 1.442695
    %v1979 = vpow.pop %v1978
    %v1980 = vadd.f32 %v1979, 1.0
    %v1981 = vrcp.pop %v1980
    %v1982 = vmul.f32 %v1980, %v1981
    %v1983 = vsub.f32 1.0, %v1982
    %v1984 = vmul.f32 %v1981, %v1983
    %v1985 = vadd.f32 %v1981, %v1984
    %vm1986 = vweird.f32 %v1980
    %vm1987 = vweird.f32 %v1981
    %vm1988 = vmor %vm1986, %vm1987
    %v1989 = vsel %vm1988, %v1981, %v1985
    %v1990 = vand.u32 2147483647, %v1980
    %vm1991 = vcmp.eq.f32.partialorder %v1990, 8.507059e+37
    %v1992 = vand.u32 %v1980, 2147483648
    %v1993 = vor.u32 1.1754944e-38, %v1992
    %v1994 = vsel %vm1991, %v1993, %v1989
    %v1995 = vmul.f32 1.0, %v1994
    %v1996 = vtanh.pop %v1976
    %v1997 = vmul.f32 %v1995, %v1832
    %1999 = vrot.lane.b32.xlu0 %v1996, 64
    %v2000 = vpop.permute.xlu0 %1999
    %v2002 = vmul.f32 %v1995, %v2000
    %2004 = vrot.lane.b32.xlu0 %v2002, 32
    %v2005 = vpop.permute.xlu0 %2004
    %v2007 = vadd.f32 %v1997, %v2005
    %v2008 = vtanh.pop %v2007
    %2010 = vrot.lane.b32.xlu0 %v2008, 64
    %v2011 = vpop.permute.xlu0 %2010
    %v2013 = vmul.f32 %v1995, %v2011
    %2015 = vrot.lane.b32.xlu0 %v2013, 32
    %v2016 = vpop.permute.xlu0 %2015
    %2018 = vrot.lane.b32.xlu0 %v1916, 64
    %v2019 = vpop.permute.xlu0 %2018
    %v2021 = vsel %vm168, %v2016, %v2019
    %v2022 = vld [vmem:[%s1671] sm:$0xff]
    %v2023 = vld [vmem:[%s1671 + $0x8] sm:$0xff]
    %v2024 = vld [vmem:[%s1671 + $0x10] sm:$0xff]
    %v2025 = vld [vmem:[%s1671 + $0x18] sm:$0xff]
    %v2026 = vld [vmem:[%s1671 + $0x20] sm:$0xff]
    %v2027 = vld [vmem:[%s1671 + $0x28] sm:$0xff]
    %v2028 = vld [vmem:[%s1671 + $0x30] sm:$0xff]
    %v2029 = vld [vmem:[%s1671 + $0x38] sm:$0xff]
    %v2030 = vld [vmem:[#allocation14 + $0x1] sm:$0x1]
    %v2031 = vperm.slane %v2030, 0
    %v2033 = vsel %vm276, %v2021, 0
    %2035 = vmatpush.msra.mxu0 0.0
    %2036 = vmatpush.msra.mxu0 0.0
    %2037 = vmatpush.msra.mxu0 0.0
    %2038 = vmatpush.msra.mxu0 0.0
    %2039 = vmatpush.msra.mxu0 0.0
    %2040 = vmatpush.msra.mxu0 0.0
    %2041 = vmatpush.msra.mxu0 0.0
    %2042 = vmatpush.msra.mxu0 0.0
    %2043 = vmatpush.msra.mxu0 %v2029
    %2044 = vmatpush.msra.mxu0 %v2028
    %2045 = vmatpush.msra.mxu0 %v2027
    %2046 = vmatpush.msra.mxu0 %v2026
    %2047 = vmatpush.msra.mxu0 %v2025
    %2048 = vmatpush.msra.mxu0 %v2024
    %2049 = vmatpush.msra.mxu0 %v2023
    %2050 = vmatpush.msra.mxu0 %v2022
    %2051 = vmatmul.f32.gmra.mxu0 %v2033
    %v2052 = vpop.f32.mrf.mxu0
    %v2053 = vadd.f32 %v2031, %v2052
    %2054 = vdwg.mxu0
    %v2055 = vxor.u32 %v2053, 2147483648
    %v2056 = vmul.f32 %v2055, 1.442695
    %v2057 = vpow.pop %v2056
    %v2058 = vadd.f32 %v2057, 1.0
    %v2059 = vrcp.pop %v2058
    %v2060 = vmul.f32 %v2058, %v2059
    %v2061 = vsub.f32 1.0, %v2060
    %v2062 = vmul.f32 %v2059, %v2061
    %v2063 = vadd.f32 %v2059, %v2062
    %vm2064 = vweird.f32 %v2058
    %vm2065 = vweird.f32 %v2059
    %vm2066 = vmor %vm2064, %vm2065
    %v2067 = vsel %vm2066, %v2059, %v2063
    %v2068 = vand.u32 2147483647, %v2058
    %vm2069 = vcmp.eq.f32.partialorder %v2068, 8.507059e+37
    %v2070 = vand.u32 %v2058, 2147483648
    %v2071 = vor.u32 1.1754944e-38, %v2070
    %v2072 = vsel %vm2069, %v2071, %v2067
    %v2073 = vmul.f32 1.0, %v2072
    %v2074 = vtanh.pop %v2053
    %v2075 = vmul.f32 %v2073, %v1910
    %2077 = vrot.lane.b32.xlu0 %v2074, 64
    %v2078 = vpop.permute.xlu0 %2077
    %v2080 = vmul.f32 %v2073, %v2078
    %2082 = vrot.lane.b32.xlu0 %v2080, 32
    %v2083 = vpop.permute.xlu0 %2082
    %v2085 = vadd.f32 %v2075, %v2083
    %v2086 = vtanh.pop %v2085
    %2088 = vrot.lane.b32.xlu0 %v2086, 64
    %v2089 = vpop.permute.xlu0 %2088
    %v2091 = vmul.f32 %v2073, %v2089
    %2093 = vrot.lane.b32.xlu0 %v2091, 32
    %v2094 = vpop.permute.xlu0 %2093
    %2096 = vst.msk [vmem:[#allocation2 + $0x4] sm:$0x3] %vm1504, %v2094
    %v2097 = vld [vmem:[#allocation8] sm:$0xf]
    %v2099 = vsel %vm196, %v2097, 0
    %2101 = vmatpush.msra.mxu0 0.0
    %2102 = vmatpush.msra.mxu0 0.0
    %2103 = vmatpush.msra.mxu0 0.0
    %2104 = vmatpush.msra.mxu0 0.0
    %2105 = vmatpush.msra.mxu0 0.0
    %2106 = vmatpush.msra.mxu0 0.0
    %2107 = vmatpush.msra.mxu0 0.0
    %2108 = vmatpush.msra.mxu0 0.0
    %2109 = vmatpush.msra.mxu0 0.0
    %2110 = vmatpush.msra.mxu0 0.0
    %2111 = vmatpush.msra.mxu0 0.0
    %2112 = vmatpush.msra.mxu0 0.0
    %2113 = vmatpush.msra.mxu0 0.0
    %2114 = vmatpush.msra.mxu0 0.0
    %2115 = vmatpush.msra.mxu0 0.0
    %2116 = vmatpush.msra.mxu0 %v2099
    %2117 = vmatmul.f32.gmra.mxu0 %v703
    %v2118 = vpop.f32.mrf.mxu0
    %v2119 = vadd.f32 0.0, %v2118
    %2120 = vdwg.mxu0
    %v2121 = vadd.f32 %v1574, %v2119
    %v2122 = vld [vmem:[#allocation11] sm:$0xff]
    %v2123 = vld [vmem:[#allocation11 + $0x8] sm:$0xff]
    %v2124 = vld [vmem:[#allocation11 + $0x10] sm:$0xff]
    %v2125 = vld [vmem:[#allocation11 + $0x18] sm:$0xff]
    %v2126 = vsel %vm168, %v2016, 0
    %2128 = vmatpush.msra.mxu0 0.0
    %2129 = vmatpush.msra.mxu0 0.0
    %2130 = vmatpush.msra.mxu0 0.0
    %2131 = vmatpush.msra.mxu0 0.0
    %2132 = vmatpush.msra.mxu0 0.0
    %2133 = vmatpush.msra.mxu0 0.0
    %2134 = vmatpush.msra.mxu0 0.0
    %2135 = vmatpush.msra.mxu0 0.0
    %2136 = vmatpush.msra.mxu0 0.0
    %2137 = vmatpush.msra.mxu0 0.0
    %2138 = vmatpush.msra.mxu0 0.0
    %2139 = vmatpush.msra.mxu0 0.0
    %2140 = vmatpush.msra.mxu0 %v2125
    %2141 = vmatpush.msra.mxu0 %v2124
    %2142 = vmatpush.msra.mxu0 %v2123
    %2143 = vmatpush.msra.mxu0 %v2122
    %2144 = vmatmul.f32.gmra.mxu0 %v2126
    %v2145 = vpop.f32.mrf.mxu0
    %v2146 = vadd.f32 0.0, %v2145
    %2147 = vdwg.mxu0
    %v2148 = vadd.f32 %v2121, %v2146
    %v2149 = vld [vmem:[#allocation14] sm:$0x1]
    %v2150 = vperm.slane %v2149, 0
    %v2151 = vadd.f32 %v2148, %v2150
    %v2152 = vxor.u32 %v2151, 2147483648
    %v2153 = vmul.f32 %v2152, 1.442695
    %v2154 = vpow.pop %v2153
    %v2155 = vadd.f32 %v2154, 1.0
    %v2156 = vrcp.pop %v2155
    %v2157 = vmul.f32 %v2155, %v2156
    %v2158 = vsub.f32 1.0, %v2157
    %v2159 = vmul.f32 %v2156, %v2158
    %v2160 = vadd.f32 %v2156, %v2159
    %vm2161 = vweird.f32 %v2155
    %vm2162 = vweird.f32 %v2156
    %vm2163 = vmor %vm2161, %vm2162
    %v2164 = vsel %vm2163, %v2156, %v2160
    %v2165 = vand.u32 2147483647, %v2155
    %vm2166 = vcmp.eq.f32.partialorder %v2165, 8.507059e+37
    %v2167 = vand.u32 %v2155, 2147483648
    %v2168 = vor.u32 1.1754944e-38, %v2167
    %v2169 = vsel %vm2166, %v2168, %v2164
    %v2170 = vmul.f32 1.0, %v2169
    %v2171 = vtanh.pop %v2151
    %v2172 = vmul.f32 %v2170, %v2007
    %2174 = vrot.lane.b32.xlu0 %v2171, 64
    %v2175 = vpop.permute.xlu0 %2174
    %v2177 = vmul.f32 %v2170, %v2175
    %2179 = vrot.lane.b32.xlu0 %v2177, 32
    %v2180 = vpop.permute.xlu0 %2179
    %v2182 = vadd.f32 %v2172, %v2180
    %v2183 = vtanh.pop %v2182
    %2185 = vrot.lane.b32.xlu0 %v2183, 64
    %v2186 = vpop.permute.xlu0 %2185
    %v2188 = vmul.f32 %v2170, %v2186
    %2190 = vrot.lane.b32.xlu0 %v2188, 32
    %v2191 = vpop.permute.xlu0 %2190
    %2193 = vrot.lane.b32.xlu0 %v2091, 64
    %v2194 = vpop.permute.xlu0 %2193
    %v2196 = vsel %vm168, %v2191, %v2194
    %v2197 = vld [vmem:[%s1671] sm:$0xff]
    %v2198 = vld [vmem:[%s1671 + $0x8] sm:$0xff]
    %v2199 = vld [vmem:[%s1671 + $0x10] sm:$0xff]
    %v2200 = vld [vmem:[%s1671 + $0x18] sm:$0xff]
    %v2201 = vld [vmem:[%s1671 + $0x20] sm:$0xff]
    %v2202 = vld [vmem:[%s1671 + $0x28] sm:$0xff]
    %v2203 = vld [vmem:[%s1671 + $0x30] sm:$0xff]
    %v2204 = vld [vmem:[%s1671 + $0x38] sm:$0xff]
    %v2205 = vld [vmem:[#allocation14 + $0x1] sm:$0x1]
    %v2206 = vperm.slane %v2205, 0
    %v2208 = vsel %vm276, %v2196, 0
    %2210 = vmatpush.msra.mxu0 0.0
    %2211 = vmatpush.msra.mxu0 0.0
    %2212 = vmatpush.msra.mxu0 0.0
    %2213 = vmatpush.msra.mxu0 0.0
    %2214 = vmatpush.msra.mxu0 0.0
    %2215 = vmatpush.msra.mxu0 0.0
    %2216 = vmatpush.msra.mxu0 0.0
    %2217 = vmatpush.msra.mxu0 0.0
    %2218 = vmatpush.msra.mxu0 %v2204
    %2219 = vmatpush.msra.mxu0 %v2203
    %2220 = vmatpush.msra.mxu0 %v2202
    %2221 = vmatpush.msra.mxu0 %v2201
    %2222 = vmatpush.msra.mxu0 %v2200
    %2223 = vmatpush.msra.mxu0 %v2199
    %2224 = vmatpush.msra.mxu0 %v2198
    %2225 = vmatpush.msra.mxu0 %v2197
    %2226 = vmatmul.f32.gmra.mxu0 %v2208
    %v2227 = vpop.f32.mrf.mxu0
    %v2228 = vadd.f32 %v2206, %v2227
    %2229 = vdwg.mxu0
    %v2230 = vxor.u32 %v2228, 2147483648
    %v2231 = vmul.f32 %v2230, 1.442695
    %v2232 = vpow.pop %v2231
    %v2233 = vadd.f32 %v2232, 1.0
    %v2234 = vrcp.pop %v2233
    %v2235 = vmul.f32 %v2233, %v2234
    %v2236 = vsub.f32 1.0, %v2235
    %v2237 = vmul.f32 %v2234, %v2236
    %v2238 = vadd.f32 %v2234, %v2237
    %vm2239 = vweird.f32 %v2233
    %vm2240 = vweird.f32 %v2234
    %vm2241 = vmor %vm2239, %vm2240
    %v2242 = vsel %vm2241, %v2234, %v2238
    %v2243 = vand.u32 2147483647, %v2233
    %vm2244 = vcmp.eq.f32.partialorder %v2243, 8.507059e+37
    %v2245 = vand.u32 %v2233, 2147483648
    %v2246 = vor.u32 1.1754944e-38, %v2245
    %v2247 = vsel %vm2244, %v2246, %v2242
    %v2248 = vmul.f32 1.0, %v2247
    %v2249 = vtanh.pop %v2228
    %v2250 = vmul.f32 %v2248, %v2085
    %2252 = vrot.lane.b32.xlu0 %v2249, 64
    %v2253 = vpop.permute.xlu0 %2252
    %v2255 = vmul.f32 %v2248, %v2253
    %2257 = vrot.lane.b32.xlu0 %v2255, 32
    %v2258 = vpop.permute.xlu0 %2257
    %v2260 = vadd.f32 %v2250, %v2258
    %v2261 = vtanh.pop %v2260
    %2263 = vrot.lane.b32.xlu0 %v2261, 64
    %v2264 = vpop.permute.xlu0 %2263
    %v2266 = vmul.f32 %v2248, %v2264
    %2268 = vrot.lane.b32.xlu0 %v2266, 32
    %v2269 = vpop.permute.xlu0 %2268
    %2271 = vst.msk [vmem:[#allocation2 + $0x6] sm:$0x3] %vm1504, %v2269
    %v2272 = vld [vmem:[#allocation8] sm:$0xf]
    %v2274 = vsel %vm196, %v2272, 0
    %2276 = vmatpush.msra.mxu0 0.0
    %2277 = vmatpush.msra.mxu0 0.0
    %2278 = vmatpush.msra.mxu0 0.0
    %2279 = vmatpush.msra.mxu0 0.0
    %2280 = vmatpush.msra.mxu0 0.0
    %2281 = vmatpush.msra.mxu0 0.0
    %2282 = vmatpush.msra.mxu0 0.0
    %2283 = vmatpush.msra.mxu0 0.0
    %2284 = vmatpush.msra.mxu0 0.0
    %2285 = vmatpush.msra.mxu0 0.0
    %2286 = vmatpush.msra.mxu0 0.0
    %2287 = vmatpush.msra.mxu0 0.0
    %2288 = vmatpush.msra.mxu0 0.0
    %2289 = vmatpush.msra.mxu0 0.0
    %2290 = vmatpush.msra.mxu0 0.0
    %2291 = vmatpush.msra.mxu0 %v2274
    %2292 = vmatmul.f32.gmra.mxu0 %v868
    %v2293 = vpop.f32.mrf.mxu0
    %v2294 = vadd.f32 0.0, %v2293
    %2295 = vdwg.mxu0
    %v2296 = vadd.f32 %v1574, %v2294
    %v2297 = vld [vmem:[#allocation11] sm:$0xff]
    %v2298 = vld [vmem:[#allocation11 + $0x8] sm:$0xff]
    %v2299 = vld [vmem:[#allocation11 + $0x10] sm:$0xff]
    %v2300 = vld [vmem:[#allocation11 + $0x18] sm:$0xff]
    %v2301 = vsel %vm168, %v2191, 0
    %2303 = vmatpush.msra.mxu0 0.0
    %2304 = vmatpush.msra.mxu0 0.0
    %2305 = vmatpush.msra.mxu0 0.0
    %2306 = vmatpush.msra.mxu0 0.0
    %2307 = vmatpush.msra.mxu0 0.0
    %2308 = vmatpush.msra.mxu0 0.0
    %2309 = vmatpush.msra.mxu0 0.0
    %2310 = vmatpush.msra.mxu0 0.0
    %2311 = vmatpush.msra.mxu0 0.0
    %2312 = vmatpush.msra.mxu0 0.0
    %2313 = vmatpush.msra.mxu0 0.0
    %2314 = vmatpush.msra.mxu0 0.0
    %2315 = vmatpush.msra.mxu0 %v2300
    %2316 = vmatpush.msra.mxu0 %v2299
    %2317 = vmatpush.msra.mxu0 %v2298
    %2318 = vmatpush.msra.mxu0 %v2297
    %2319 = vmatmul.f32.gmra.mxu0 %v2301
    %v2320 = vpop.f32.mrf.mxu0
    %v2321 = vadd.f32 0.0, %v2320
    %2322 = vdwg.mxu0
    %v2323 = vadd.f32 %v2296, %v2321
    %v2324 = vld [vmem:[#allocation14] sm:$0x1]
    %v2325 = vperm.slane %v2324, 0
    %v2326 = vadd.f32 %v2323, %v2325
    %v2327 = vxor.u32 %v2326, 2147483648
    %v2328 = vmul.f32 %v2327, 1.442695
    %v2329 = vpow.pop %v2328
    %v2330 = vadd.f32 %v2329, 1.0
    %v2331 = vrcp.pop %v2330
    %v2332 = vmul.f32 %v2330, %v2331
    %v2333 = vsub.f32 1.0, %v2332
    %v2334 = vmul.f32 %v2331, %v2333
    %v2335 = vadd.f32 %v2331, %v2334
    %vm2336 = vweird.f32 %v2330
    %vm2337 = vweird.f32 %v2331
    %vm2338 = vmor %vm2336, %vm2337
    %v2339 = vsel %vm2338, %v2331, %v2335
    %v2340 = vand.u32 2147483647, %v2330
    %vm2341 = vcmp.eq.f32.partialorder %v2340, 8.507059e+37
    %v2342 = vand.u32 %v2330, 2147483648
    %v2343 = vor.u32 1.1754944e-38, %v2342
    %v2344 = vsel %vm2341, %v2343, %v2339
    %v2345 = vmul.f32 1.0, %v2344
    %v2346 = vtanh.pop %v2326
    %v2347 = vmul.f32 %v2345, %v2182
    %2349 = vrot.lane.b32.xlu0 %v2346, 64
    %v2350 = vpop.permute.xlu0 %2349
    %v2352 = vmul.f32 %v2345, %v2350
    %2354 = vrot.lane.b32.xlu0 %v2352, 32
    %v2355 = vpop.permute.xlu0 %2354
    %v2357 = vadd.f32 %v2347, %v2355
    %v2358 = vtanh.pop %v2357
    %2360 = vrot.lane.b32.xlu0 %v2358, 64
    %v2361 = vpop.permute.xlu0 %2360
    %v2363 = vmul.f32 %v2345, %v2361
    %2365 = vrot.lane.b32.xlu0 %v2363, 32
    %v2366 = vpop.permute.xlu0 %2365
    %2368 = vrot.lane.b32.xlu0 %v2266, 64
    %v2369 = vpop.permute.xlu0 %2368
    %v2371 = vsel %vm168, %v2366, %v2369
    %v2372 = vld [vmem:[%s1671] sm:$0xff]
    %v2373 = vld [vmem:[%s1671 + $0x8] sm:$0xff]
    %v2374 = vld [vmem:[%s1671 + $0x10] sm:$0xff]
    %v2375 = vld [vmem:[%s1671 + $0x18] sm:$0xff]
    %v2376 = vld [vmem:[%s1671 + $0x20] sm:$0xff]
    %v2377 = vld [vmem:[%s1671 + $0x28] sm:$0xff]
    %v2378 = vld [vmem:[%s1671 + $0x30] sm:$0xff]
    %v2379 = vld [vmem:[%s1671 + $0x38] sm:$0xff]
    %v2380 = vld [vmem:[#allocation14 + $0x1] sm:$0x1]
    %v2381 = vperm.slane %v2380, 0
    %v2383 = vsel %vm276, %v2371, 0
    %2385 = vmatpush.msra.mxu0 0.0
    %2386 = vmatpush.msra.mxu0 0.0
    %2387 = vmatpush.msra.mxu0 0.0
    %2388 = vmatpush.msra.mxu0 0.0
    %2389 = vmatpush.msra.mxu0 0.0
    %2390 = vmatpush.msra.mxu0 0.0
    %2391 = vmatpush.msra.mxu0 0.0
    %2392 = vmatpush.msra.mxu0 0.0
    %2393 = vmatpush.msra.mxu0 %v2379
    %2394 = vmatpush.msra.mxu0 %v2378
    %2395 = vmatpush.msra.mxu0 %v2377
    %2396 = vmatpush.msra.mxu0 %v2376
    %2397 = vmatpush.msra.mxu0 %v2375
    %2398 = vmatpush.msra.mxu0 %v2374
    %2399 = vmatpush.msra.mxu0 %v2373
    %2400 = vmatpush.msra.mxu0 %v2372
    %2401 = vmatmul.f32.gmra.mxu0 %v2383
    %v2402 = vpop.f32.mrf.mxu0
    %v2403 = vadd.f32 %v2381, %v2402
    %2404 = vdwg.mxu0
    %v2405 = vxor.u32 %v2403, 2147483648
    %v2406 = vmul.f32 %v2405, 1.442695
    %v2407 = vpow.pop %v2406
    %v2408 = vadd.f32 %v2407, 1.0
    %v2409 = vrcp.pop %v2408
    %v2410 = vmul.f32 %v2408, %v2409
    %v2411 = vsub.f32 1.0, %v2410
    %v2412 = vmul.f32 %v2409, %v2411
    %v2413 = vadd.f32 %v2409, %v2412
    %vm2414 = vweird.f32 %v2408
    %vm2415 = vweird.f32 %v2409
    %vm2416 = vmor %vm2414, %vm2415
    %v2417 = vsel %vm2416, %v2409, %v2413
    %v2418 = vand.u32 2147483647, %v2408
    %vm2419 = vcmp.eq.f32.partialorder %v2418, 8.507059e+37
    %v2420 = vand.u32 %v2408, 2147483648
    %v2421 = vor.u32 1.1754944e-38, %v2420
    %v2422 = vsel %vm2419, %v2421, %v2417
    %v2423 = vmul.f32 1.0, %v2422
    %v2424 = vtanh.pop %v2403
    %v2425 = vmul.f32 %v2423, %v2260
    %2427 = vrot.lane.b32.xlu0 %v2424, 64
    %v2428 = vpop.permute.xlu0 %2427
    %v2430 = vmul.f32 %v2423, %v2428
    %2432 = vrot.lane.b32.xlu0 %v2430, 32
    %v2433 = vpop.permute.xlu0 %2432
    %v2435 = vadd.f32 %v2425, %v2433
    %v2436 = vtanh.pop %v2435
    %2438 = vrot.lane.b32.xlu0 %v2436, 64
    %v2439 = vpop.permute.xlu0 %2438
    %v2441 = vmul.f32 %v2423, %v2439
    %2443 = vrot.lane.b32.xlu0 %v2441, 32
    %v2444 = vpop.permute.xlu0 %2443
    %2446 = vst.msk [vmem:[#allocation2 + $0x8] sm:$0x3] %vm1504, %v2444
    %v2447 = vld [vmem:[#allocation8] sm:$0xf]
    %v2449 = vsel %vm196, %v2447, 0
    %2451 = vmatpush.msra.mxu0 0.0
    %2452 = vmatpush.msra.mxu0 0.0
    %2453 = vmatpush.msra.mxu0 0.0
    %2454 = vmatpush.msra.mxu0 0.0
    %2455 = vmatpush.msra.mxu0 0.0
    %2456 = vmatpush.msra.mxu0 0.0
    %2457 = vmatpush.msra.mxu0 0.0
    %2458 = vmatpush.msra.mxu0 0.0
    %2459 = vmatpush.msra.mxu0 0.0
    %2460 = vmatpush.msra.mxu0 0.0
    %2461 = vmatpush.msra.mxu0 0.0
    %2462 = vmatpush.msra.mxu0 0.0
    %2463 = vmatpush.msra.mxu0 0.0
    %2464 = vmatpush.msra.mxu0 0.0
    %2465 = vmatpush.msra.mxu0 0.0
    %2466 = vmatpush.msra.mxu0 %v2449
    %2467 = vmatmul.f32.gmra.mxu0 %v1033
    %v2468 = vpop.f32.mrf.mxu0
    %v2469 = vadd.f32 0.0, %v2468
    %2470 = vdwg.mxu0
    %v2471 = vadd.f32 %v1574, %v2469
    %v2472 = vld [vmem:[#allocation11] sm:$0xff]
    %v2473 = vld [vmem:[#allocation11 + $0x8] sm:$0xff]
    %v2474 = vld [vmem:[#allocation11 + $0x10] sm:$0xff]
    %v2475 = vld [vmem:[#allocation11 + $0x18] sm:$0xff]
    %v2476 = vsel %vm168, %v2366, 0
    %2478 = vmatpush.msra.mxu0 0.0
    %2479 = vmatpush.msra.mxu0 0.0
    %2480 = vmatpush.msra.mxu0 0.0
    %2481 = vmatpush.msra.mxu0 0.0
    %2482 = vmatpush.msra.mxu0 0.0
    %2483 = vmatpush.msra.mxu0 0.0
    %2484 = vmatpush.msra.mxu0 0.0
    %2485 = vmatpush.msra.mxu0 0.0
    %2486 = vmatpush.msra.mxu0 0.0
    %2487 = vmatpush.msra.mxu0 0.0
    %2488 = vmatpush.msra.mxu0 0.0
    %2489 = vmatpush.msra.mxu0 0.0
    %2490 = vmatpush.msra.mxu0 %v2475
    %2491 = vmatpush.msra.mxu0 %v2474
    %2492 = vmatpush.msra.mxu0 %v2473
    %2493 = vmatpush.msra.mxu0 %v2472
    %2494 = vmatmul.f32.gmra.mxu0 %v2476
    %v2495 = vpop.f32.mrf.mxu0
    %v2496 = vadd.f32 0.0, %v2495
    %2497 = vdwg.mxu0
    %v2498 = vadd.f32 %v2471, %v2496
    %v2499 = vld [vmem:[#allocation14] sm:$0x1]
    %v2500 = vperm.slane %v2499, 0
    %v2501 = vadd.f32 %v2498, %v2500
    %v2502 = vxor.u32 %v2501, 2147483648
    %v2503 = vmul.f32 %v2502, 1.442695
    %v2504 = vpow.pop %v2503
    %v2505 = vadd.f32 %v2504, 1.0
    %v2506 = vrcp.pop %v2505
    %v2507 = vmul.f32 %v2505, %v2506
    %v2508 = vsub.f32 1.0, %v2507
    %v2509 = vmul.f32 %v2506, %v2508
    %v2510 = vadd.f32 %v2506, %v2509
    %vm2511 = vweird.f32 %v2505
    %vm2512 = vweird.f32 %v2506
    %vm2513 = vmor %vm2511, %vm2512
    %v2514 = vsel %vm2513, %v2506, %v2510
    %v2515 = vand.u32 2147483647, %v2505
    %vm2516 = vcmp.eq.f32.partialorder %v2515, 8.507059e+37
    %v2517 = vand.u32 %v2505, 2147483648
    %v2518 = vor.u32 1.1754944e-38, %v2517
    %v2519 = vsel %vm2516, %v2518, %v2514
    %v2520 = vmul.f32 1.0, %v2519
    %v2521 = vtanh.pop %v2501
    %v2522 = vmul.f32 %v2520, %v2357
    %2524 = vrot.lane.b32.xlu0 %v2521, 64
    %v2525 = vpop.permute.xlu0 %2524
    %v2527 = vmul.f32 %v2520, %v2525
    %2529 = vrot.lane.b32.xlu0 %v2527, 32
    %v2530 = vpop.permute.xlu0 %2529
    %v2532 = vadd.f32 %v2522, %v2530
    %v2533 = vtanh.pop %v2532
    %2535 = vrot.lane.b32.xlu0 %v2533, 64
    %v2536 = vpop.permute.xlu0 %2535
    %v2538 = vmul.f32 %v2520, %v2536
    %2540 = vrot.lane.b32.xlu0 %v2538, 32
    %v2541 = vpop.permute.xlu0 %2540
    %2543 = vrot.lane.b32.xlu0 %v2441, 64
    %v2544 = vpop.permute.xlu0 %2543
    %v2546 = vsel %vm168, %v2541, %v2544
    %v2547 = vld [vmem:[%s1671] sm:$0xff]
    %v2548 = vld [vmem:[%s1671 + $0x8] sm:$0xff]
    %v2549 = vld [vmem:[%s1671 + $0x10] sm:$0xff]
    %v2550 = vld [vmem:[%s1671 + $0x18] sm:$0xff]
    %v2551 = vld [vmem:[%s1671 + $0x20] sm:$0xff]
    %v2552 = vld [vmem:[%s1671 + $0x28] sm:$0xff]
    %v2553 = vld [vmem:[%s1671 + $0x30] sm:$0xff]
    %v2554 = vld [vmem:[%s1671 + $0x38] sm:$0xff]
    %v2555 = vld [vmem:[#allocation14 + $0x1] sm:$0x1]
    %v2556 = vperm.slane %v2555, 0
    %v2558 = vsel %vm276, %v2546, 0
    %2560 = vmatpush.msra.mxu0 0.0
    %2561 = vmatpush.msra.mxu0 0.0
    %2562 = vmatpush.msra.mxu0 0.0
    %2563 = vmatpush.msra.mxu0 0.0
    %2564 = vmatpush.msra.mxu0 0.0
    %2565 = vmatpush.msra.mxu0 0.0
    %2566 = vmatpush.msra.mxu0 0.0
    %2567 = vmatpush.msra.mxu0 0.0
    %2568 = vmatpush.msra.mxu0 %v2554
    %2569 = vmatpush.msra.mxu0 %v2553
    %2570 = vmatpush.msra.mxu0 %v2552
    %2571 = vmatpush.msra.mxu0 %v2551
    %2572 = vmatpush.msra.mxu0 %v2550
    %2573 = vmatpush.msra.mxu0 %v2549
    %2574 = vmatpush.msra.mxu0 %v2548
    %2575 = vmatpush.msra.mxu0 %v2547
    %2576 = vmatmul.f32.gmra.mxu0 %v2558
    %v2577 = vpop.f32.mrf.mxu0
    %v2578 = vadd.f32 %v2556, %v2577
    %2579 = vdwg.mxu0
    %v2580 = vxor.u32 %v2578, 2147483648
    %v2581 = vmul.f32 %v2580, 1.442695
    %v2582 = vpow.pop %v2581
    %v2583 = vadd.f32 %v2582, 1.0
    %v2584 = vrcp.pop %v2583
    %v2585 = vmul.f32 %v2583, %v2584
    %v2586 = vsub.f32 1.0, %v2585
    %v2587 = vmul.f32 %v2584, %v2586
    %v2588 = vadd.f32 %v2584, %v2587
    %vm2589 = vweird.f32 %v2583
    %vm2590 = vweird.f32 %v2584
    %vm2591 = vmor %vm2589, %vm2590
    %v2592 = vsel %vm2591, %v2584, %v2588
    %v2593 = vand.u32 2147483647, %v2583
    %vm2594 = vcmp.eq.f32.partialorder %v2593, 8.507059e+37
    %v2595 = vand.u32 %v2583, 2147483648
    %v2596 = vor.u32 1.1754944e-38, %v2595
    %v2597 = vsel %vm2594, %v2596, %v2592
    %v2598 = vmul.f32 1.0, %v2597
    %v2599 = vtanh.pop %v2578
    %v2600 = vmul.f32 %v2598, %v2435
    %2602 = vrot.lane.b32.xlu0 %v2599, 64
    %v2603 = vpop.permute.xlu0 %2602
    %v2605 = vmul.f32 %v2598, %v2603
    %2607 = vrot.lane.b32.xlu0 %v2605, 32
    %v2608 = vpop.permute.xlu0 %2607
    %v2610 = vadd.f32 %v2600, %v2608
    %v2611 = vtanh.pop %v2610
    %2613 = vrot.lane.b32.xlu0 %v2611, 64
    %v2614 = vpop.permute.xlu0 %2613
    %v2616 = vmul.f32 %v2598, %v2614
    %2618 = vrot.lane.b32.xlu0 %v2616, 32
    %v2619 = vpop.permute.xlu0 %2618
    %2621 = vst.msk [vmem:[#allocation2 + $0xa] sm:$0x3] %vm1504, %v2619
    %v2622 = vld [vmem:[#allocation8] sm:$0xf]
    %v2624 = vsel %vm196, %v2622, 0
    %2626 = vmatpush.msra.mxu0 0.0
    %2627 = vmatpush.msra.mxu0 0.0
    %2628 = vmatpush.msra.mxu0 0.0
    %2629 = vmatpush.msra.mxu0 0.0
    %2630 = vmatpush.msra.mxu0 0.0
    %2631 = vmatpush.msra.mxu0 0.0
    %2632 = vmatpush.msra.mxu0 0.0
    %2633 = vmatpush.msra.mxu0 0.0
    %2634 = vmatpush.msra.mxu0 0.0
    %2635 = vmatpush.msra.mxu0 0.0
    %2636 = vmatpush.msra.mxu0 0.0
    %2637 = vmatpush.msra.mxu0 0.0
    %2638 = vmatpush.msra.mxu0 0.0
    %2639 = vmatpush.msra.mxu0 0.0
    %2640 = vmatpush.msra.mxu0 0.0
    %2641 = vmatpush.msra.mxu0 %v2624
    %2642 = vmatmul.f32.gmra.mxu0 %v1198
    %v2643 = vpop.f32.mrf.mxu0
    %v2644 = vadd.f32 0.0, %v2643
    %2645 = vdwg.mxu0
    %v2646 = vadd.f32 %v1574, %v2644
    %v2647 = vld [vmem:[#allocation11] sm:$0xff]
    %v2648 = vld [vmem:[#allocation11 + $0x8] sm:$0xff]
    %v2649 = vld [vmem:[#allocation11 + $0x10] sm:$0xff]
    %v2650 = vld [vmem:[#allocation11 + $0x18] sm:$0xff]
    %v2651 = vsel %vm168, %v2541, 0
    %2653 = vmatpush.msra.mxu0 0.0
    %2654 = vmatpush.msra.mxu0 0.0
    %2655 = vmatpush.msra.mxu0 0.0
    %2656 = vmatpush.msra.mxu0 0.0
    %2657 = vmatpush.msra.mxu0 0.0
    %2658 = vmatpush.msra.mxu0 0.0
    %2659 = vmatpush.msra.mxu0 0.0
    %2660 = vmatpush.msra.mxu0 0.0
    %2661 = vmatpush.msra.mxu0 0.0
    %2662 = vmatpush.msra.mxu0 0.0
    %2663 = vmatpush.msra.mxu0 0.0
    %2664 = vmatpush.msra.mxu0 0.0
    %2665 = vmatpush.msra.mxu0 %v2650
    %2666 = vmatpush.msra.mxu0 %v2649
    %2667 = vmatpush.msra.mxu0 %v2648
    %2668 = vmatpush.msra.mxu0 %v2647
    %2669 = vmatmul.f32.gmra.mxu0 %v2651
    %v2670 = vpop.f32.mrf.mxu0
    %v2671 = vadd.f32 0.0, %v2670
    %2672 = vdwg.mxu0
    %v2673 = vadd.f32 %v2646, %v2671
    %v2674 = vld [vmem:[#allocation14] sm:$0x1]
    %v2675 = vperm.slane %v2674, 0
    %v2676 = vadd.f32 %v2673, %v2675
    %v2677 = vxor.u32 %v2676, 2147483648
    %v2678 = vmul.f32 %v2677, 1.442695
    %v2679 = vpow.pop %v2678
    %v2680 = vadd.f32 %v2679, 1.0
    %v2681 = vrcp.pop %v2680
    %v2682 = vmul.f32 %v2680, %v2681
    %v2683 = vsub.f32 1.0, %v2682
    %v2684 = vmul.f32 %v2681, %v2683
    %v2685 = vadd.f32 %v2681, %v2684
    %vm2686 = vweird.f32 %v2680
    %vm2687 = vweird.f32 %v2681
    %vm2688 = vmor %vm2686, %vm2687
    %v2689 = vsel %vm2688, %v2681, %v2685
    %v2690 = vand.u32 2147483647, %v2680
    %vm2691 = vcmp.eq.f32.partialorder %v2690, 8.507059e+37
    %v2692 = vand.u32 %v2680, 2147483648
    %v2693 = vor.u32 1.1754944e-38, %v2692
    %v2694 = vsel %vm2691, %v2693, %v2689
    %v2695 = vmul.f32 1.0, %v2694
    %v2696 = vtanh.pop %v2676
    %v2697 = vmul.f32 %v2695, %v2532
    %2699 = vrot.lane.b32.xlu0 %v2696, 64
    %v2700 = vpop.permute.xlu0 %2699
    %v2702 = vmul.f32 %v2695, %v2700
    %2704 = vrot.lane.b32.xlu0 %v2702, 32
    %v2705 = vpop.permute.xlu0 %2704
    %v2707 = vadd.f32 %v2697, %v2705
    %v2708 = vtanh.pop %v2707
    %2710 = vrot.lane.b32.xlu0 %v2708, 64
    %v2711 = vpop.permute.xlu0 %2710
    %v2713 = vmul.f32 %v2695, %v2711
    %2715 = vrot.lane.b32.xlu0 %v2713, 32
    %v2716 = vpop.permute.xlu0 %2715
    %2718 = vrot.lane.b32.xlu0 %v2616, 64
    %v2719 = vpop.permute.xlu0 %2718
    %v2721 = vsel %vm168, %v2716, %v2719
    %v2722 = vld [vmem:[%s1671] sm:$0xff]
    %v2723 = vld [vmem:[%s1671 + $0x8] sm:$0xff]
    %v2724 = vld [vmem:[%s1671 + $0x10] sm:$0xff]
    %v2725 = vld [vmem:[%s1671 + $0x18] sm:$0xff]
    %v2726 = vld [vmem:[%s1671 + $0x20] sm:$0xff]
    %v2727 = vld [vmem:[%s1671 + $0x28] sm:$0xff]
    %v2728 = vld [vmem:[%s1671 + $0x30] sm:$0xff]
    %v2729 = vld [vmem:[%s1671 + $0x38] sm:$0xff]
    %v2730 = vld [vmem:[#allocation14 + $0x1] sm:$0x1]
    %v2731 = vperm.slane %v2730, 0
    %v2733 = vsel %vm276, %v2721, 0
    %2735 = vmatpush.msra.mxu0 0.0
    %2736 = vmatpush.msra.mxu0 0.0
    %2737 = vmatpush.msra.mxu0 0.0
    %2738 = vmatpush.msra.mxu0 0.0
    %2739 = vmatpush.msra.mxu0 0.0
    %2740 = vmatpush.msra.mxu0 0.0
    %2741 = vmatpush.msra.mxu0 0.0
    %2742 = vmatpush.msra.mxu0 0.0
    %2743 = vmatpush.msra.mxu0 %v2729
    %2744 = vmatpush.msra.mxu0 %v2728
    %2745 = vmatpush.msra.mxu0 %v2727
    %2746 = vmatpush.msra.mxu0 %v2726
    %2747 = vmatpush.msra.mxu0 %v2725
    %2748 = vmatpush.msra.mxu0 %v2724
    %2749 = vmatpush.msra.mxu0 %v2723
    %2750 = vmatpush.msra.mxu0 %v2722
    %2751 = vmatmul.f32.gmra.mxu0 %v2733
    %v2752 = vpop.f32.mrf.mxu0
    %v2753 = vadd.f32 %v2731, %v2752
    %2754 = vdwg.mxu0
    %v2755 = vxor.u32 %v2753, 2147483648
    %v2756 = vmul.f32 %v2755, 1.442695
    %v2757 = vpow.pop %v2756
    %v2758 = vadd.f32 %v2757, 1.0
    %v2759 = vrcp.pop %v2758
    %v2760 = vmul.f32 %v2758, %v2759
    %v2761 = vsub.f32 1.0, %v2760
    %v2762 = vmul.f32 %v2759, %v2761
    %v2763 = vadd.f32 %v2759, %v2762
    %vm2764 = vweird.f32 %v2758
    %vm2765 = vweird.f32 %v2759
    %vm2766 = vmor %vm2764, %vm2765
    %v2767 = vsel %vm2766, %v2759, %v2763
    %v2768 = vand.u32 2147483647, %v2758
    %vm2769 = vcmp.eq.f32.partialorder %v2768, 8.507059e+37
    %v2770 = vand.u32 %v2758, 2147483648
    %v2771 = vor.u32 1.1754944e-38, %v2770
    %v2772 = vsel %vm2769, %v2771, %v2767
    %v2773 = vmul.f32 1.0, %v2772
    %v2774 = vtanh.pop %v2753
    %v2775 = vmul.f32 %v2773, %v2610
    %2777 = vrot.lane.b32.xlu0 %v2774, 64
    %v2778 = vpop.permute.xlu0 %2777
    %v2780 = vmul.f32 %v2773, %v2778
    %2782 = vrot.lane.b32.xlu0 %v2780, 32
    %v2783 = vpop.permute.xlu0 %2782
    %v2785 = vadd.f32 %v2775, %v2783
    %v2786 = vtanh.pop %v2785
    %2788 = vrot.lane.b32.xlu0 %v2786, 64
    %v2789 = vpop.permute.xlu0 %2788
    %v2791 = vmul.f32 %v2773, %v2789
    %2793 = vrot.lane.b32.xlu0 %v2791, 32
    %v2794 = vpop.permute.xlu0 %2793
    %2796 = vst.msk [vmem:[#allocation2 + $0xc] sm:$0x3] %vm1504, %v2794
    %v2797 = vld [vmem:[#allocation8] sm:$0xf]
    %v2799 = vsel %vm196, %v2797, 0
    %2801 = vmatpush.msra.mxu0 0.0
    %2802 = vmatpush.msra.mxu0 0.0
    %2803 = vmatpush.msra.mxu0 0.0
    %2804 = vmatpush.msra.mxu0 0.0
    %2805 = vmatpush.msra.mxu0 0.0
    %2806 = vmatpush.msra.mxu0 0.0
    %2807 = vmatpush.msra.mxu0 0.0
    %2808 = vmatpush.msra.mxu0 0.0
    %2809 = vmatpush.msra.mxu0 0.0
    %2810 = vmatpush.msra.mxu0 0.0
    %2811 = vmatpush.msra.mxu0 0.0
    %2812 = vmatpush.msra.mxu0 0.0
    %2813 = vmatpush.msra.mxu0 0.0
    %2814 = vmatpush.msra.mxu0 0.0
    %2815 = vmatpush.msra.mxu0 0.0
    %2816 = vmatpush.msra.mxu0 %v2799
    %2817 = vmatmul.f32.gmra.mxu0 %v1363
    %v2818 = vpop.f32.mrf.mxu0
    %v2819 = vadd.f32 0.0, %v2818
    %2820 = vdwg.mxu0
    %v2821 = vadd.f32 %v1574, %v2819
    %v2822 = vld [vmem:[#allocation11] sm:$0xff]
    %v2823 = vld [vmem:[#allocation11 + $0x8] sm:$0xff]
    %v2824 = vld [vmem:[#allocation11 + $0x10] sm:$0xff]
    %v2825 = vld [vmem:[#allocation11 + $0x18] sm:$0xff]
    %v2826 = vsel %vm168, %v2716, 0
    %2828 = vmatpush.msra.mxu0 0.0
    %2829 = vmatpush.msra.mxu0 0.0
    %2830 = vmatpush.msra.mxu0 0.0
    %2831 = vmatpush.msra.mxu0 0.0
    %2832 = vmatpush.msra.mxu0 0.0
    %2833 = vmatpush.msra.mxu0 0.0
    %2834 = vmatpush.msra.mxu0 0.0
    %2835 = vmatpush.msra.mxu0 0.0
    %2836 = vmatpush.msra.mxu0 0.0
    %2837 = vmatpush.msra.mxu0 0.0
    %2838 = vmatpush.msra.mxu0 0.0
    %2839 = vmatpush.msra.mxu0 0.0
    %2840 = vmatpush.msra.mxu0 %v2825
    %2841 = vmatpush.msra.mxu0 %v2824
    %2842 = vmatpush.msra.mxu0 %v2823
    %2843 = vmatpush.msra.mxu0 %v2822
    %2844 = vmatmul.f32.gmra.mxu0 %v2826
    %v2845 = vpop.f32.mrf.mxu0
    %v2846 = vadd.f32 0.0, %v2845
    %2847 = vdwg.mxu0
    %v2848 = vadd.f32 %v2821, %v2846
    %v2849 = vld [vmem:[#allocation14] sm:$0x1]
    %v2850 = vperm.slane %v2849, 0
    %v2851 = vadd.f32 %v2848, %v2850
    %v2852 = vxor.u32 %v2851, 2147483648
    %v2853 = vmul.f32 %v2852, 1.442695
    %v2854 = vpow.pop %v2853
    %v2855 = vadd.f32 %v2854, 1.0
    %v2856 = vrcp.pop %v2855
    %v2857 = vmul.f32 %v2855, %v2856
    %v2858 = vsub.f32 1.0, %v2857
    %v2859 = vmul.f32 %v2856, %v2858
    %v2860 = vadd.f32 %v2856, %v2859
    %vm2861 = vweird.f32 %v2855
    %vm2862 = vweird.f32 %v2856
    %vm2863 = vmor %vm2861, %vm2862
    %v2864 = vsel %vm2863, %v2856, %v2860
    %v2865 = vand.u32 2147483647, %v2855
    %vm2866 = vcmp.eq.f32.partialorder %v2865, 8.507059e+37
    %v2867 = vand.u32 %v2855, 2147483648
    %v2868 = vor.u32 1.1754944e-38, %v2867
    %v2869 = vsel %vm2866, %v2868, %v2864
    %v2870 = vmul.f32 1.0, %v2869
    %v2871 = vtanh.pop %v2851
    %v2872 = vmul.f32 %v2870, %v2707
    %2874 = vrot.lane.b32.xlu0 %v2871, 64
    %v2875 = vpop.permute.xlu0 %2874
    %v2877 = vmul.f32 %v2870, %v2875
    %2879 = vrot.lane.b32.xlu0 %v2877, 32
    %v2880 = vpop.permute.xlu0 %2879
    %v2882 = vadd.f32 %v2872, %v2880
    %v2883 = vtanh.pop %v2882
    %2885 = vrot.lane.b32.xlu0 %v2883, 64
    %v2886 = vpop.permute.xlu0 %2885
    %v2888 = vmul.f32 %v2870, %v2886
    %2890 = vrot.lane.b32.xlu0 %v2888, 32
    %v2891 = vpop.permute.xlu0 %2890
    %2893 = vrot.lane.b32.xlu0 %v2791, 64
    %v2894 = vpop.permute.xlu0 %2893
    %v2896 = vsel %vm168, %v2891, %v2894
    %v2897 = vld [vmem:[%s1671] sm:$0xff]
    %v2898 = vld [vmem:[%s1671 + $0x8] sm:$0xff]
    %v2899 = vld [vmem:[%s1671 + $0x10] sm:$0xff]
    %v2900 = vld [vmem:[%s1671 + $0x18] sm:$0xff]
    %v2901 = vld [vmem:[%s1671 + $0x20] sm:$0xff]
    %v2902 = vld [vmem:[%s1671 + $0x28] sm:$0xff]
    %v2903 = vld [vmem:[%s1671 + $0x30] sm:$0xff]
    %v2904 = vld [vmem:[%s1671 + $0x38] sm:$0xff]
    %v2905 = vld [vmem:[#allocation14 + $0x1] sm:$0x1]
    %v2906 = vperm.slane %v2905, 0
    %v2908 = vsel %vm276, %v2896, 0
    %2910 = vmatpush.msra.mxu0 0.0
    %2911 = vmatpush.msra.mxu0 0.0
    %2912 = vmatpush.msra.mxu0 0.0
    %2913 = vmatpush.msra.mxu0 0.0
    %2914 = vmatpush.msra.mxu0 0.0
    %2915 = vmatpush.msra.mxu0 0.0
    %2916 = vmatpush.msra.mxu0 0.0
    %2917 = vmatpush.msra.mxu0 0.0
    %2918 = vmatpush.msra.mxu0 %v2904
    %2919 = vmatpush.msra.mxu0 %v2903
    %2920 = vmatpush.msra.mxu0 %v2902
    %2921 = vmatpush.msra.mxu0 %v2901
    %2922 = vmatpush.msra.mxu0 %v2900
    %2923 = vmatpush.msra.mxu0 %v2899
    %2924 = vmatpush.msra.mxu0 %v2898
    %2925 = vmatpush.msra.mxu0 %v2897
    %2926 = vmatmul.f32.gmra.mxu0 %v2908
    %v2927 = vpop.f32.mrf.mxu0
    %v2928 = vadd.f32 %v2906, %v2927
    %2929 = vdwg.mxu0
    %v2930 = vxor.u32 %v2928, 2147483648
    %v2931 = vmul.f32 %v2930, 1.442695
    %v2932 = vpow.pop %v2931
    %v2933 = vadd.f32 %v2932, 1.0
    %v2934 = vrcp.pop %v2933
    %v2935 = vmul.f32 %v2933, %v2934
    %v2936 = vsub.f32 1.0, %v2935
    %v2937 = vmul.f32 %v2934, %v2936
    %v2938 = vadd.f32 %v2934, %v2937
    %vm2939 = vweird.f32 %v2933
    %vm2940 = vweird.f32 %v2934
    %vm2941 = vmor %vm2939, %vm2940
    %v2942 = vsel %vm2941, %v2934, %v2938
    %v2943 = vand.u32 2147483647, %v2933
    %vm2944 = vcmp.eq.f32.partialorder %v2943, 8.507059e+37
    %v2945 = vand.u32 %v2933, 2147483648
    %v2946 = vor.u32 1.1754944e-38, %v2945
    %v2947 = vsel %vm2944, %v2946, %v2942
    %v2948 = vmul.f32 1.0, %v2947
    %v2949 = vtanh.pop %v2928
    %v2950 = vmul.f32 %v2948, %v2785
    %2952 = vrot.lane.b32.xlu0 %v2949, 64
    %v2953 = vpop.permute.xlu0 %2952
    %v2955 = vmul.f32 %v2948, %v2953
    %2957 = vrot.lane.b32.xlu0 %v2955, 32
    %v2958 = vpop.permute.xlu0 %2957
    %v2960 = vadd.f32 %v2950, %v2958
    %v2961 = vtanh.pop %v2960
    %2963 = vrot.lane.b32.xlu0 %v2961, 64
    %v2964 = vpop.permute.xlu0 %2963
    %v2966 = vmul.f32 %v2948, %v2964
    %2968 = vrot.lane.b32.xlu0 %v2966, 32
    %v2969 = vpop.permute.xlu0 %2968
    %2971 = vst.msk [vmem:[#allocation2 + $0xe] sm:$0x3] %vm1504, %v2969
    %v2972 = vld [vmem:[#allocation2] sm:$0xff]
    %v2973 = vld [vmem:[#allocation2 + $0x8] sm:$0xff]
    %v2974 = vld [vmem:[%s12] sm:$0xff]
    %v2975 = vld [vmem:[%s12 + $0x8] sm:$0xff]
    %v2976 = vld [vmem:[%s12 + $0x10] sm:$0xff]
    %v2977 = vld [vmem:[%s12 + $0x18] sm:$0xff]
    %v2978 = vld [vmem:[%s13] sm:$0x1]
    %v2980 = vperm.slane %v2978, 0
    %v2983 = vsel %vm168, %v2972, 0
    %v2986 = vsel %vm168, %v2973, 0
    %2988 = vmatpush.msra.mxu0 0.0
    %2989 = vmatpush.msra.mxu0 0.0
    %2990 = vmatpush.msra.mxu0 0.0
    %2991 = vmatpush.msra.mxu0 0.0
    %2992 = vmatpush.msra.mxu0 0.0
    %2993 = vmatpush.msra.mxu0 0.0
    %2994 = vmatpush.msra.mxu0 0.0
    %2995 = vmatpush.msra.mxu0 0.0
    %2996 = vmatpush.msra.mxu0 0.0
    %2997 = vmatpush.msra.mxu0 0.0
    %2998 = vmatpush.msra.mxu0 0.0
    %2999 = vmatpush.msra.mxu0 0.0
    %3000 = vmatpush.msra.mxu0 %v2977
    %3001 = vmatpush.msra.mxu0 %v2976
    %3002 = vmatpush.msra.mxu0 %v2975
    %3003 = vmatpush.msra.mxu0 %v2974
    %3004 = vmatmul.f32.gmra.mxu0 %v2983
    %v3005 = vpop.f32.mrf.mxu0
    %v3006 = vadd.f32 %v2980, %v3005
    %3007 = vmatmul.f32.gmra.mxu0 %v2986
    %v3008 = vpop.f32.mrf.mxu0
    %v3009 = vadd.f32 %v2980, %v3008
    %3010 = vdwg.mxu0
    %3011 = vst.msk [vmem:[%s14] sm:$0xff] %vm192, %v3006
    %3012 = vst.msk [vmem:[%s14 + $0x8] sm:$0xff] %vm192, %v3009
    // Predicated region
    $region86: #{ae_forward.1} parent=1 // pred_check
      _
    $region87: #{ae_forward.1} parent=1 // pred_check_branch
      %3014 = sbr.rel (0) target = $region89
    $region88: #{ae_forward.1} parent=1 // pred_region
      _
    $region89: #{ae_forward.1} parent=1 // pred_fallthru
      _
    // Predicated region
    $region90: #{ae_forward.1} parent=1 // pred_check
      _
    $region91: #{ae_forward.1} parent=1 // pred_check_branch
      %3016 = sbr.rel (0) target = $region93
    $region92: #{ae_forward.1} parent=1 // pred_region
      %3018 = vsyncadd [#allocation5], 0
      %s3020 = sshll.u32 [#allocation15], 4
      %s3021 = int_to_ptr.vmem [resolvable:$true] %s3020
      %s3022 = sshll.u32 %s15, 4
      %s3023 = int_to_ptr.hbm [resolvable:$true] %s3022
      %3025 = dma.vmem_to_hbm [thread:$0]  %s3021, 32, %s3023, [#allocation5]
    $region93: #{ae_forward.1} parent=1 // pred_fallthru
      _
    // Predicated region
    $region94: #{ae_forward.1} parent=1 // pred_check
      _
    $region95: #{ae_forward.1} parent=1 // pred_check_branch
      %3027 = sbr.rel (0) target = $region97
    $region96: #{ae_forward.1} parent=1 // pred_region
      _
    $region97: #{ae_forward.1} parent=1 // pred_fallthru
      _
    // Predicated region
    $region98: #{ae_forward.1} parent=1 // pred_check
      _
    $region99: #{ae_forward.1} parent=1 // pred_check_branch
      %3029 = sbr.rel (0) target = $region101
    $region100: #{ae_forward.1} parent=1 // pred_region
      %3031 = dma.done [#allocation5], 32
    $region101: #{ae_forward.1} parent=1 // pred_fallthru
      _
    %3032 = vsyncpa [#allocation4], 1
    %3033 = vsyncpa [#allocation7], 1
    %3034 = vsyncpa [#allocation10], 1
    %3035 = vsyncpa [#allocation13], 1
    %3036 = vsyncpa [#allocation5], 1

</llo_original>
